<compile_context>
chip_gen: v7x
topology: tpu7x:2x2x1
jax: 0.10.0
libtpu: 0.0.40
codegen_flags: <defaults>
</compile_context>

<pallas_src>
import functools

import jax
import jax.numpy as jnp
from jax import lax
from jax.experimental import pallas as pl
from jax.experimental.pallas import tpu as pltpu


# ------------------------------ fused kernel --------------------------------
def _downsample_kernel(x_ref, w1_ref, b1_ref, w2_ref, b2_ref, o_ref,
                       p1_ref, p2_ref, *, ho, wo, cin, kpad1, cpad):
    """One batch element: pool 2x2 -> conv3x3+BN+ReLU -> conv3x3+BN+ReLU.

    x_ref : (1, 2*ho, wo, 2*cin)   input, column pairs packed on lanes
    w1_ref: (9, kpad1, cpad) bf16  conv1 per-tap weights (BN scale folded in)
    w2_ref: (9, cpad,  cpad) bf16  conv2 per-tap weights (BN scale folded in)
    b1_ref, b2_ref: (1, cpad) f32  folded BN biases
    o_ref : (1, ho*wo, cpad)       lane-dense output
    p1_ref: (ho+2, wo+2, kpad1) f32 scratch, zero-padded pooled map
    p2_ref: (ho+2, wo+2, cpad)  f32 scratch, zero-padded conv1 output
    """
    hw = ho * wo

    # ---- 2x2 max pool (columns paired on lanes, rows on an outer dim) ----
    x = x_ref[0]                                            # (2*ho, wo, 2*cin)
    colmax = jnp.maximum(x[:, :, :cin], x[:, :, cin:])      # (2*ho, wo, cin)
    rows = colmax.reshape(ho, 2, wo, cin)                   # outer-dim split
    pooled = jnp.maximum(rows[:, 0], rows[:, 1])            # (ho, wo, cin)

    # ---- conv1 3x3 (pad=1) + folded BN + ReLU ----------------------------
    p1_ref[...] = jnp.zeros(p1_ref.shape, p1_ref.dtype)
    p1_ref[1:ho + 1, 1:wo + 1, 0:cin] = pooled

    acc = jnp.zeros((hw, cpad), jnp.float32)
    for t in range(9):
        dy, dx = divmod(t, 3)
        tap = p1_ref[dy:dy + ho, dx:dx + wo, :]             # (ho, wo, kpad1)
        tap = tap.reshape(hw, kpad1).astype(jnp.bfloat16)
        acc = acc + jnp.dot(tap, w1_ref[t], preferred_element_type=jnp.float32)
    y1 = jnp.maximum(acc + b1_ref[...], 0.0)                # (hw, cpad) f32

    # ---- conv2 3x3 (pad=1) + folded BN + ReLU ----------------------------
    p2_ref[...] = jnp.zeros(p2_ref.shape, p2_ref.dtype)
    p2_ref[1:ho + 1, 1:wo + 1, :] = y1.reshape(ho, wo, cpad)

    acc2 = jnp.zeros((hw, cpad), jnp.float32)
    for t in range(9):
        dy, dx = divmod(t, 3)
        tap = p2_ref[dy:dy + ho, dx:dx + wo, :]             # (ho, wo, cpad)
        tap = tap.reshape(hw, cpad).astype(jnp.bfloat16)
        acc2 = acc2 + jnp.dot(tap, w2_ref[t], preferred_element_type=jnp.float32)
    y2 = jnp.maximum(acc2 + b2_ref[...], 0.0)               # (hw, cpad)

    o_ref[0] = y2.astype(o_ref.dtype)


# --------------------------- weight preparation ------------------------------
def _round_up(x, m):
    return ((x + m - 1) // m) * m


def _fold_and_pack(w, gamma, beta, mean, var, kpad, cpad, eps=1e-5):
    """Fold eval-mode BN into conv weights; pad channels; flatten 3x3 taps.

    w: (3,3,ci,co) HWIO -> (9, kpad, cpad) bf16 ; bias -> (1, cpad) f32.
    """
    kh, kw, ci, co = w.shape
    scale = gamma / jnp.sqrt(var + eps)
    bias = beta - mean * scale
    wf = (w.astype(jnp.float32) * scale.reshape(1, 1, 1, co)).reshape(kh * kw, ci, co)
    wp = jnp.zeros((kh * kw, kpad, cpad), jnp.float32).at[:, :ci, :co].set(wf)
    bp = jnp.zeros((1, cpad), jnp.float32).at[0, :co].set(bias)
    return wp.astype(jnp.bfloat16), bp


# ------------------------------- forward ------------------------------------
def downsample_forward(x_nchw, params, eps=1e-5):
    """Pallas implementation of DownSample.forward (eval-mode BN). NCHW in/out."""
    x = jnp.transpose(x_nchw, (0, 2, 3, 1)).astype(jnp.float32)   # NCHW -> NHWC
    n, h, w, cin = x.shape
    ho, wo = h // 2, w // 2
    x = x[:, :2 * ho, :2 * wo, :]                 # MaxPool2d(2,2) floor semantics
    # Free (contiguous) reshape: adjacent column pair packed onto the lane axis.
    x2 = x.reshape(n, 2 * ho, wo, 2 * cin)

    cout = params["w1"].shape[-1]
    cpad = _round_up(cout, 128)                   # lane-dense N dim / output
    kpad1 = _round_up(cin, 128)                   # lane-dense K dim for conv1

    w1f, b1f = _fold_and_pack(params["w1"], params["g1"], params["be1"],
                              params["m1"], params["v1"], kpad1, cpad, eps)
    w2f, b2f = _fold_and_pack(params["w2"], params["g2"], params["be2"],
                              params["m2"], params["v2"], cpad, cpad, eps)

    kernel = functools.partial(_downsample_kernel,
                               ho=ho, wo=wo, cin=cin, kpad1=kpad1, cpad=cpad)

    out = pl.pallas_call(
        kernel,
        out_shape=jax.ShapeDtypeStruct((n, ho * wo, cpad), jnp.float32),
        grid=(n,),
        in_specs=[
            pl.BlockSpec((1, 2 * ho, wo, 2 * cin), lambda i: (i, 0, 0, 0)),
            pl.BlockSpec((9, kpad1, cpad), lambda i: (0, 0, 0)),
            pl.BlockSpec((1, cpad), lambda i: (0, 0)),
            pl.BlockSpec((9, cpad, cpad), lambda i: (0, 0, 0)),
            pl.BlockSpec((1, cpad), lambda i: (0, 0)),
        ],
        out_specs=pl.BlockSpec((1, ho * wo, cpad), lambda i: (i, 0, 0)),
        scratch_shapes=[
            pltpu.VMEM((ho + 2, wo + 2, kpad1), jnp.float32),
            pltpu.VMEM((ho + 2, wo + 2, cpad), jnp.float32),
        ],
        compiler_params=pltpu.CompilerParams(dimension_semantics=("parallel",)),
    )(x2, w1f, b1f, w2f, b2f)

    out = out.reshape(n, ho, wo, cpad)[:, :, :, :cout]   # drop lane padding
    return jnp.transpose(out, (0, 3, 1, 2))              # NHWC -> NCHW


# -------------------------- plain-JAX reference ------------------------------
def _ref_conv_bn_relu(x, w, gamma, beta, mean, var, eps=1e-5):
    scale = gamma / jnp.sqrt(var + eps)
    bias = beta - mean * scale
    wf = (w * scale.reshape(1, 1, 1, -1)).astype(jnp.bfloat16)
    y = lax.conv_general_dilated(
        x.astype(jnp.bfloat16), wf, window_strides=(1, 1), padding="SAME",
        dimension_numbers=("NHWC", "HWIO", "NHWC"),
        preferred_element_type=jnp.float32)
    return jnp.maximum(y + bias, 0.0)


def downsample_ref(x_nchw, params, eps=1e-5):
    x = jnp.transpose(x_nchw, (0, 2, 3, 1))
    x = lax.reduce_window(x, -jnp.inf, lax.max,
                          (1, 2, 2, 1), (1, 2, 2, 1), "VALID")
    x = _ref_conv_bn_relu(x, params["w1"], params["g1"], params["be1"],
                          params["m1"], params["v1"], eps)
    x = _ref_conv_bn_relu(x, params["w2"], params["g2"], params["be2"],
                          params["m2"], params["v2"], eps)
    return jnp.transpose(x, (0, 3, 1, 2))


if __name__ == "__main__":
    N, Cin, Cout, H, W = 2, 4, 8, 16, 16
    key = jax.random.PRNGKey(0)
    ks = jax.random.split(key, 11)

    x = jax.random.normal(ks[0], (N, Cin, H, W), dtype=jnp.float32)
    w1 = jax.random.normal(ks[1], (3, 3, Cin, Cout), jnp.float32) * (2.0 / (9 * Cin)) ** 0.5
    w2 = jax.random.normal(ks[2], (3, 3, Cout, Cout), jnp.float32) * (2.0 / (9 * Cout)) ** 0.5

    params = {
        "w1": w1,
        "g1": 1.0 + 0.2 * jax.random.normal(ks[3], (Cout,), jnp.float32),
        "be1": 0.1 * jax.random.normal(ks[4], (Cout,), jnp.float32),
        "m1": 0.1 * jax.random.normal(ks[5], (Cout,), jnp.float32),
        "v1": 1.0 + 0.1 * jax.random.uniform(ks[6], (Cout,), jnp.float32),
        "w2": w2,
        "g2": 1.0 + 0.2 * jax.random.normal(ks[7], (Cout,), jnp.float32),
        "be2": 0.1 * jax.random.normal(ks[8], (Cout,), jnp.float32),
        "m2": 0.1 * jax.random.normal(ks[9], (Cout,), jnp.float32),
        "v2": 1.0 + 0.1 * jax.random.uniform(ks[10], (Cout,), jnp.float32),
    }

    fwd = jax.jit(downsample_forward)
    out = jax.block_until_ready(fwd(x, params))
    ref = jax.block_until_ready(downsample_ref(x, params))

    assert out.shape == (N, Cout, H // 2, W // 2), out.shape
    max_err = float(jnp.max(jnp.abs(out - ref)))
    assert jnp.allclose(out, ref, atol=1e-2, rtol=1e-2), f"mismatch vs reference: {max_err}"

    print("KERNEL_OK")
</pallas_src>

<mosaic_0001>
module attributes {stable_mosaic.version = 11 : i64} {
  func.func @_downsample_kernel(%arg0: i32, %arg1: memref<1x16x8x8xf32, #tpu.memory_space<vmem>>, %arg2: memref<9x128x128xbf16, #tpu.memory_space<vmem>>, %arg3: memref<1x128xf32, #tpu.memory_space<vmem>>, %arg4: memref<9x128x128xbf16, #tpu.memory_space<vmem>>, %arg5: memref<1x128xf32, #tpu.memory_space<vmem>>, %arg6: memref<1x64x128xf32, #tpu.memory_space<vmem>>, %arg7: memref<10x10x128xf32, #tpu.memory_space<vmem>>, %arg8: memref<10x10x128xf32, #tpu.memory_space<vmem>>) attributes {dimension_semantics = [#tpu.dimension_semantics<parallel>], iteration_bounds = array<i64: 2>, scalar_prefetch = 0 : i64, scratch_operands = 2 : i64, tpu.core_type = #tpu.core_type<tc>, window_params = [{transform_indices = @transform_0, window_bounds = array<i64: 1, 16, 8, 8>}, {pipeline_mode = #tpu.pipeline_mode<synchronous>, transform_indices = @transform_1, window_bounds = array<i64: 9, 128, 128>}, {pipeline_mode = #tpu.pipeline_mode<synchronous>, transform_indices = @transform_2, window_bounds = array<i64: 1, 128>}, {pipeline_mode = #tpu.pipeline_mode<synchronous>, transform_indices = @transform_3, window_bounds = array<i64: 9, 128, 128>}, {pipeline_mode = #tpu.pipeline_mode<synchronous>, transform_indices = @transform_4, window_bounds = array<i64: 1, 128>}, {transform_indices = @transform_5, window_bounds = array<i64: 1, 64, 128>}]} {
    %c0 = arith.constant 0 : index
    %c0_0 = arith.constant 0 : index
    %c0_1 = arith.constant 0 : index
    %c0_2 = arith.constant 0 : index
    %0 = vector.load %arg1[%c0, %c0_0, %c0_1, %c0_2] : memref<1x16x8x8xf32, #tpu.memory_space<vmem>>, vector<1x16x8x8xf32>
    %1 = vector.shape_cast %0 : vector<1x16x8x8xf32> to vector<16x8x8xf32>
    %2 = vector.extract_strided_slice %1 {offsets = [0, 0, 0], sizes = [16, 8, 4], strides = [1, 1, 1]} : vector<16x8x8xf32> to vector<16x8x4xf32>
    %3 = vector.extract_strided_slice %1 {offsets = [0, 0, 4], sizes = [16, 8, 4], strides = [1, 1, 1]} : vector<16x8x8xf32> to vector<16x8x4xf32>
    %4 = arith.maximumf %2, %3 : vector<16x8x4xf32>
    %5 = vector.shape_cast %4 : vector<16x8x4xf32> to vector<8x2x8x4xf32>
    %6 = vector.extract_strided_slice %5 {offsets = [0, 0, 0, 0], sizes = [8, 1, 8, 4], strides = [1, 1, 1, 1]} : vector<8x2x8x4xf32> to vector<8x1x8x4xf32>
    %7 = vector.shape_cast %6 : vector<8x1x8x4xf32> to vector<8x8x4xf32>
    %8 = vector.extract_strided_slice %5 {offsets = [0, 1, 0, 0], sizes = [8, 1, 8, 4], strides = [1, 1, 1, 1]} : vector<8x2x8x4xf32> to vector<8x1x8x4xf32>
    %9 = vector.shape_cast %8 : vector<8x1x8x4xf32> to vector<8x8x4xf32>
    %10 = arith.maximumf %7, %9 : vector<8x8x4xf32>
    %cst = arith.constant 0.000000e+00 : f32
    %11 = vector.broadcast %cst : f32 to vector<10x10x128xf32>
    %c0_3 = arith.constant 0 : index
    %c0_4 = arith.constant 0 : index
    %c0_5 = arith.constant 0 : index
    %12 = vector.load %arg7[%c0_3, %c0_4, %c0_5] : memref<10x10x128xf32, #tpu.memory_space<vmem>>, vector<10x10x128xf32>
    tpu.vector_store %arg7[%c0_3, %c0_4, %c0_5], %11 {strides = array<i32>} : memref<10x10x128xf32, #tpu.memory_space<vmem>>, vector<10x10x128xf32>,
    %c1 = arith.constant 1 : index
    %c1_6 = arith.constant 1 : index
    %c0_7 = arith.constant 0 : index
    %13 = vector.load %arg7[%c1, %c1_6, %c0_7] : memref<10x10x128xf32, #tpu.memory_space<vmem>>, vector<8x8x4xf32>
    tpu.vector_store %arg7[%c1, %c1_6, %c0_7], %10 {strides = array<i32>} : memref<10x10x128xf32, #tpu.memory_space<vmem>>, vector<8x8x4xf32>,
    %cst_8 = arith.constant 0.000000e+00 : f32
    %14 = vector.broadcast %cst_8 : f32 to vector<64x128xf32>
    %c0_9 = arith.constant 0 : index
    %c0_10 = arith.constant 0 : index
    %c0_11 = arith.constant 0 : index
    %15 = vector.load %arg7[%c0_9, %c0_10, %c0_11] : memref<10x10x128xf32, #tpu.memory_space<vmem>>, vector<8x8x128xf32>
    %16 = vector.shape_cast %15 : vector<8x8x128xf32> to vector<64x128xf32>
    %17 = arith.truncf %16 : vector<64x128xf32> to vector<64x128xbf16>
    %c0_12 = arith.constant 0 : index
    %c0_13 = arith.constant 0 : index
    %c0_14 = arith.constant 0 : index
    %18 = vector.load %arg2[%c0_12, %c0_13, %c0_14] : memref<9x128x128xbf16, #tpu.memory_space<vmem>>, vector<1x128x128xbf16>
    %19 = vector.shape_cast %18 : vector<1x128x128xbf16> to vector<128x128xbf16>
    %cst_15 = arith.constant dense<0.000000e+00> : vector<64x128xf32>
    %20 = tpu.matmul %17, %19, %cst_15 {dimension_numbers = #tpu.dot_dimension_numbers<[1], [0], [0], [1], [0, 0, 1, 1], [], []>} : vector<64x128xbf16>, vector<128x128xbf16>, vector<64x128xf32> -> vector<64x128xf32>
    %21 = arith.addf %14, %20 : vector<64x128xf32>
    %c0_16 = arith.constant 0 : index
    %c1_17 = arith.constant 1 : index
    %c0_18 = arith.constant 0 : index
    %22 = vector.load %arg7[%c0_16, %c1_17, %c0_18] : memref<10x10x128xf32, #tpu.memory_space<vmem>>, vector<8x8x128xf32>
    %23 = vector.shape_cast %22 : vector<8x8x128xf32> to vector<64x128xf32>
    %24 = arith.truncf %23 : vector<64x128xf32> to vector<64x128xbf16>
    %c1_19 = arith.constant 1 : index
    %c0_20 = arith.constant 0 : index
    %c0_21 = arith.constant 0 : index
    %25 = vector.load %arg2[%c1_19, %c0_20, %c0_21] : memref<9x128x128xbf16, #tpu.memory_space<vmem>>, vector<1x128x128xbf16>
    %26 = vector.shape_cast %25 : vector<1x128x128xbf16> to vector<128x128xbf16>
    %cst_22 = arith.constant dense<0.000000e+00> : vector<64x128xf32>
    %27 = tpu.matmul %24, %26, %cst_22 {dimension_numbers = #tpu.dot_dimension_numbers<[1], [0], [0], [1], [0, 0, 1, 1], [], []>} : vector<64x128xbf16>, vector<128x128xbf16>, vector<64x128xf32> -> vector<64x128xf32>
    %28 = arith.addf %21, %27 : vector<64x128xf32>
    %c0_23 = arith.constant 0 : index
    %c2 = arith.constant 2 : index
    %c0_24 = arith.constant 0 : index
    %29 = vector.load %arg7[%c0_23, %c2, %c0_24] : memref<10x10x128xf32, #tpu.memory_space<vmem>>, vector<8x8x128xf32>
    %30 = vector.shape_cast %29 : vector<8x8x128xf32> to vector<64x128xf32>
    %31 = arith.truncf %30 : vector<64x128xf32> to vector<64x128xbf16>
    %c2_25 = arith.constant 2 : index
    %c0_26 = arith.constant 0 : index
    %c0_27 = arith.constant 0 : index
    %32 = vector.load %arg2[%c2_25, %c0_26, %c0_27] : memref<9x128x128xbf16, #tpu.memory_space<vmem>>, vector<1x128x128xbf16>
    %33 = vector.shape_cast %32 : vector<1x128x128xbf16> to vector<128x128xbf16>
    %cst_28 = arith.constant dense<0.000000e+00> : vector<64x128xf32>
    %34 = tpu.matmul %31, %33, %cst_28 {dimension_numbers = #tpu.dot_dimension_numbers<[1], [0], [0], [1], [0, 0, 1, 1], [], []>} : vector<64x128xbf16>, vector<128x128xbf16>, vector<64x128xf32> -> vector<64x128xf32>
    %35 = arith.addf %28, %34 : vector<64x128xf32>
    %c1_29 = arith.constant 1 : index
    %c0_30 = arith.constant 0 : index
    %c0_31 = arith.constant 0 : index
    %36 = vector.load %arg7[%c1_29, %c0_30, %c0_31] : memref<10x10x128xf32, #tpu.memory_space<vmem>>, vector<8x8x128xf32>
    %37 = vector.shape_cast %36 : vector<8x8x128xf32> to vector<64x128xf32>
    %38 = arith.truncf %37 : vector<64x128xf32> to vector<64x128xbf16>
    %c3 = arith.constant 3 : index
    %c0_32 = arith.constant 0 : index
    %c0_33 = arith.constant 0 : index
    %39 = vector.load %arg2[%c3, %c0_32, %c0_33] : memref<9x128x128xbf16, #tpu.memory_space<vmem>>, vector<1x128x128xbf16>
    %40 = vector.shape_cast %39 : vector<1x128x128xbf16> to vector<128x128xbf16>
    %cst_34 = arith.constant dense<0.000000e+00> : vector<64x128xf32>
    %41 = tpu.matmul %38, %40, %cst_34 {dimension_numbers = #tpu.dot_dimension_numbers<[1], [0], [0], [1], [0, 0, 1, 1], [], []>} : vector<64x128xbf16>, vector<128x128xbf16>, vector<64x128xf32> -> vector<64x128xf32>
    %42 = arith.addf %35, %41 : vector<64x128xf32>
    %c1_35 = arith.constant 1 : index
    %c1_36 = arith.constant 1 : index
    %c0_37 = arith.constant 0 : index
    %43 = vector.load %arg7[%c1_35, %c1_36, %c0_37] : memref<10x10x128xf32, #tpu.memory_space<vmem>>, vector<8x8x128xf32>
    %44 = vector.shape_cast %43 : vector<8x8x128xf32> to vector<64x128xf32>
    %45 = arith.truncf %44 : vector<64x128xf32> to vector<64x128xbf16>
    %c4 = arith.constant 4 : index
    %c0_38 = arith.constant 0 : index
    %c0_39 = arith.constant 0 : index
    %46 = vector.load %arg2[%c4, %c0_38, %c0_39] : memref<9x128x128xbf16, #tpu.memory_space<vmem>>, vector<1x128x128xbf16>
    %47 = vector.shape_cast %46 : vector<1x128x128xbf16> to vector<128x128xbf16>
    %cst_40 = arith.constant dense<0.000000e+00> : vector<64x128xf32>
    %48 = tpu.matmul %45, %47, %cst_40 {dimension_numbers = #tpu.dot_dimension_numbers<[1], [0], [0], [1], [0, 0, 1, 1], [], []>} : vector<64x128xbf16>, vector<128x128xbf16>, vector<64x128xf32> -> vector<64x128xf32>
    %49 = arith.addf %42, %48 : vector<64x128xf32>
    %c1_41 = arith.constant 1 : index
    %c2_42 = arith.constant 2 : index
    %c0_43 = arith.constant 0 : index
    %50 = vector.load %arg7[%c1_41, %c2_42, %c0_43] : memref<10x10x128xf32, #tpu.memory_space<vmem>>, vector<8x8x128xf32>
    %51 = vector.shape_cast %50 : vector<8x8x128xf32> to vector<64x128xf32>
    %52 = arith.truncf %51 : vector<64x128xf32> to vector<64x128xbf16>
    %c5 = arith.constant 5 : index
    %c0_44 = arith.constant 0 : index
    %c0_45 = arith.constant 0 : index
    %53 = vector.load %arg2[%c5, %c0_44, %c0_45] : memref<9x128x128xbf16, #tpu.memory_space<vmem>>, vector<1x128x128xbf16>
    %54 = vector.shape_cast %53 : vector<1x128x128xbf16> to vector<128x128xbf16>
    %cst_46 = arith.constant dense<0.000000e+00> : vector<64x128xf32>
    %55 = tpu.matmul %52, %54, %cst_46 {dimension_numbers = #tpu.dot_dimension_numbers<[1], [0], [0], [1], [0, 0, 1, 1], [], []>} : vector<64x128xbf16>, vector<128x128xbf16>, vector<64x128xf32> -> vector<64x128xf32>
    %56 = arith.addf %49, %55 : vector<64x128xf32>
    %c2_47 = arith.constant 2 : index
    %c0_48 = arith.constant 0 : index
    %c0_49 = arith.constant 0 : index
    %57 = vector.load %arg7[%c2_47, %c0_48, %c0_49] : memref<10x10x128xf32, #tpu.memory_space<vmem>>, vector<8x8x128xf32>
    %58 = vector.shape_cast %57 : vector<8x8x128xf32> to vector<64x128xf32>
    %59 = arith.truncf %58 : vector<64x128xf32> to vector<64x128xbf16>
    %c6 = arith.constant 6 : index
    %c0_50 = arith.constant 0 : index
    %c0_51 = arith.constant 0 : index
    %60 = vector.load %arg2[%c6, %c0_50, %c0_51] : memref<9x128x128xbf16, #tpu.memory_space<vmem>>, vector<1x128x128xbf16>
    %61 = vector.shape_cast %60 : vector<1x128x128xbf16> to vector<128x128xbf16>
    %cst_52 = arith.constant dense<0.000000e+00> : vector<64x128xf32>
    %62 = tpu.matmul %59, %61, %cst_52 {dimension_numbers = #tpu.dot_dimension_numbers<[1], [0], [0], [1], [0, 0, 1, 1], [], []>} : vector<64x128xbf16>, vector<128x128xbf16>, vector<64x128xf32> -> vector<64x128xf32>
    %63 = arith.addf %56, %62 : vector<64x128xf32>
    %c2_53 = arith.constant 2 : index
    %c1_54 = arith.constant 1 : index
    %c0_55 = arith.constant 0 : index
    %64 = vector.load %arg7[%c2_53, %c1_54, %c0_55] : memref<10x10x128xf32, #tpu.memory_space<vmem>>, vector<8x8x128xf32>
    %65 = vector.shape_cast %64 : vector<8x8x128xf32> to vector<64x128xf32>
    %66 = arith.truncf %65 : vector<64x128xf32> to vector<64x128xbf16>
    %c7 = arith.constant 7 : index
    %c0_56 = arith.constant 0 : index
    %c0_57 = arith.constant 0 : index
    %67 = vector.load %arg2[%c7, %c0_56, %c0_57] : memref<9x128x128xbf16, #tpu.memory_space<vmem>>, vector<1x128x128xbf16>
    %68 = vector.shape_cast %67 : vector<1x128x128xbf16> to vector<128x128xbf16>
    %cst_58 = arith.constant dense<0.000000e+00> : vector<64x128xf32>
    %69 = tpu.matmul %66, %68, %cst_58 {dimension_numbers = #tpu.dot_dimension_numbers<[1], [0], [0], [1], [0, 0, 1, 1], [], []>} : vector<64x128xbf16>, vector<128x128xbf16>, vector<64x128xf32> -> vector<64x128xf32>
    %70 = arith.addf %63, %69 : vector<64x128xf32>
    %c2_59 = arith.constant 2 : index
    %c2_60 = arith.constant 2 : index
    %c0_61 = arith.constant 0 : index
    %71 = vector.load %arg7[%c2_59, %c2_60, %c0_61] : memref<10x10x128xf32, #tpu.memory_space<vmem>>, vector<8x8x128xf32>
    %72 = vector.shape_cast %71 : vector<8x8x128xf32> to vector<64x128xf32>
    %73 = arith.truncf %72 : vector<64x128xf32> to vector<64x128xbf16>
    %c8 = arith.constant 8 : index
    %c0_62 = arith.constant 0 : index
    %c0_63 = arith.constant 0 : index
    %74 = vector.load %arg2[%c8, %c0_62, %c0_63] : memref<9x128x128xbf16, #tpu.memory_space<vmem>>, vector<1x128x128xbf16>
    %75 = vector.shape_cast %74 : vector<1x128x128xbf16> to vector<128x128xbf16>
    %cst_64 = arith.constant dense<0.000000e+00> : vector<64x128xf32>
    %76 = tpu.matmul %73, %75, %cst_64 {dimension_numbers = #tpu.dot_dimension_numbers<[1], [0], [0], [1], [0, 0, 1, 1], [], []>} : vector<64x128xbf16>, vector<128x128xbf16>, vector<64x128xf32> -> vector<64x128xf32>
    %77 = arith.addf %70, %76 : vector<64x128xf32>
    %c0_65 = arith.constant 0 : index
    %c0_66 = arith.constant 0 : index
    %78 = vector.load %arg3[%c0_65, %c0_66] : memref<1x128xf32, #tpu.memory_space<vmem>>, vector<1x128xf32>
    %79 = vector.broadcast %78 : vector<1x128xf32> to vector<64x128xf32>
    %80 = arith.addf %77, %79 : vector<64x128xf32>
    %cst_67 = arith.constant 0.000000e+00 : f32
    %81 = vector.broadcast %cst_67 : f32 to vector<64x128xf32>
    %82 = arith.maximumf %80, %81 : vector<64x128xf32>
    %cst_68 = arith.constant 0.000000e+00 : f32
    %83 = vector.broadcast %cst_68 : f32 to vector<10x10x128xf32>
    %c0_69 = arith.constant 0 : index
    %c0_70 = arith.constant 0 : index
    %c0_71 = arith.constant 0 : index
    %84 = vector.load %arg8[%c0_69, %c0_70, %c0_71] : memref<10x10x128xf32, #tpu.memory_space<vmem>>, vector<10x10x128xf32>
    tpu.vector_store %arg8[%c0_69, %c0_70, %c0_71], %83 {strides = array<i32>} : memref<10x10x128xf32, #tpu.memory_space<vmem>>, vector<10x10x128xf32>,
    %85 = vector.shape_cast %82 : vector<64x128xf32> to vector<8x8x128xf32>
    %c1_72 = arith.constant 1 : index
    %c1_73 = arith.constant 1 : index
    %c0_74 = arith.constant 0 : index
    %86 = vector.load %arg8[%c1_72, %c1_73, %c0_74] : memref<10x10x128xf32, #tpu.memory_space<vmem>>, vector<8x8x128xf32>
    tpu.vector_store %arg8[%c1_72, %c1_73, %c0_74], %85 {strides = array<i32>} : memref<10x10x128xf32, #tpu.memory_space<vmem>>, vector<8x8x128xf32>,
    %cst_75 = arith.constant 0.000000e+00 : f32
    %87 = vector.broadcast %cst_75 : f32 to vector<64x128xf32>
    %c0_76 = arith.constant 0 : index
    %c0_77 = arith.constant 0 : index
    %c0_78 = arith.constant 0 : index
    %88 = vector.load %arg8[%c0_76, %c0_77, %c0_78] : memref<10x10x128xf32, #tpu.memory_space<vmem>>, vector<8x8x128xf32>
    %89 = vector.shape_cast %88 : vector<8x8x128xf32> to vector<64x128xf32>
    %90 = arith.truncf %89 : vector<64x128xf32> to vector<64x128xbf16>
    %c0_79 = arith.constant 0 : index
    %c0_80 = arith.constant 0 : index
    %c0_81 = arith.constant 0 : index
    %91 = vector.load %arg4[%c0_79, %c0_80, %c0_81] : memref<9x128x128xbf16, #tpu.memory_space<vmem>>, vector<1x128x128xbf16>
    %92 = vector.shape_cast %91 : vector<1x128x128xbf16> to vector<128x128xbf16>
    %cst_82 = arith.constant dense<0.000000e+00> : vector<64x128xf32>
    %93 = tpu.matmul %90, %92, %cst_82 {dimension_numbers = #tpu.dot_dimension_numbers<[1], [0], [0], [1], [0, 0, 1, 1], [], []>} : vector<64x128xbf16>, vector<128x128xbf16>, vector<64x128xf32> -> vector<64x128xf32>
    %94 = arith.addf %87, %93 : vector<64x128xf32>
    %c0_83 = arith.constant 0 : index
    %c1_84 = arith.constant 1 : index
    %c0_85 = arith.constant 0 : index
    %95 = vector.load %arg8[%c0_83, %c1_84, %c0_85] : memref<10x10x128xf32, #tpu.memory_space<vmem>>, vector<8x8x128xf32>
    %96 = vector.shape_cast %95 : vector<8x8x128xf32> to vector<64x128xf32>
    %97 = arith.truncf %96 : vector<64x128xf32> to vector<64x128xbf16>
    %c1_86 = arith.constant 1 : index
    %c0_87 = arith.constant 0 : index
    %c0_88 = arith.constant 0 : index
    %98 = vector.load %arg4[%c1_86, %c0_87, %c0_88] : memref<9x128x128xbf16, #tpu.memory_space<vmem>>, vector<1x128x128xbf16>
    %99 = vector.shape_cast %98 : vector<1x128x128xbf16> to vector<128x128xbf16>
    %cst_89 = arith.constant dense<0.000000e+00> : vector<64x128xf32>
    %100 = tpu.matmul %97, %99, %cst_89 {dimension_numbers = #tpu.dot_dimension_numbers<[1], [0], [0], [1], [0, 0, 1, 1], [], []>} : vector<64x128xbf16>, vector<128x128xbf16>, vector<64x128xf32> -> vector<64x128xf32>
    %101 = arith.addf %94, %100 : vector<64x128xf32>
    %c0_90 = arith.constant 0 : index
    %c2_91 = arith.constant 2 : index
    %c0_92 = arith.constant 0 : index
    %102 = vector.load %arg8[%c0_90, %c2_91, %c0_92] : memref<10x10x128xf32, #tpu.memory_space<vmem>>, vector<8x8x128xf32>
    %103 = vector.shape_cast %102 : vector<8x8x128xf32> to vector<64x128xf32>
    %104 = arith.truncf %103 : vector<64x128xf32> to vector<64x128xbf16>
    %c2_93 = arith.constant 2 : index
    %c0_94 = arith.constant 0 : index
    %c0_95 = arith.constant 0 : index
    %105 = vector.load %arg4[%c2_93, %c0_94, %c0_95] : memref<9x128x128xbf16, #tpu.memory_space<vmem>>, vector<1x128x128xbf16>
    %106 = vector.shape_cast %105 : vector<1x128x128xbf16> to vector<128x128xbf16>
    %cst_96 = arith.constant dense<0.000000e+00> : vector<64x128xf32>
    %107 = tpu.matmul %104, %106, %cst_96 {dimension_numbers = #tpu.dot_dimension_numbers<[1], [0], [0], [1], [0, 0, 1, 1], [], []>} : vector<64x128xbf16>, vector<128x128xbf16>, vector<64x128xf32> -> vector<64x128xf32>
    %108 = arith.addf %101, %107 : vector<64x128xf32>
    %c1_97 = arith.constant 1 : index
    %c0_98 = arith.constant 0 : index
    %c0_99 = arith.constant 0 : index
    %109 = vector.load %arg8[%c1_97, %c0_98, %c0_99] : memref<10x10x128xf32, #tpu.memory_space<vmem>>, vector<8x8x128xf32>
    %110 = vector.shape_cast %109 : vector<8x8x128xf32> to vector<64x128xf32>
    %111 = arith.truncf %110 : vector<64x128xf32> to vector<64x128xbf16>
    %c3_100 = arith.constant 3 : index
    %c0_101 = arith.constant 0 : index
    %c0_102 = arith.constant 0 : index
    %112 = vector.load %arg4[%c3_100, %c0_101, %c0_102] : memref<9x128x128xbf16, #tpu.memory_space<vmem>>, vector<1x128x128xbf16>
    %113 = vector.shape_cast %112 : vector<1x128x128xbf16> to vector<128x128xbf16>
    %cst_103 = arith.constant dense<0.000000e+00> : vector<64x128xf32>
    %114 = tpu.matmul %111, %113, %cst_103 {dimension_numbers = #tpu.dot_dimension_numbers<[1], [0], [0], [1], [0, 0, 1, 1], [], []>} : vector<64x128xbf16>, vector<128x128xbf16>, vector<64x128xf32> -> vector<64x128xf32>
    %115 = arith.addf %108, %114 : vector<64x128xf32>
    %c1_104 = arith.constant 1 : index
    %c1_105 = arith.constant 1 : index
    %c0_106 = arith.constant 0 : index
    %116 = vector.load %arg8[%c1_104, %c1_105, %c0_106] : memref<10x10x128xf32, #tpu.memory_space<vmem>>, vector<8x8x128xf32>
    %117 = vector.shape_cast %116 : vector<8x8x128xf32> to vector<64x128xf32>
    %118 = arith.truncf %117 : vector<64x128xf32> to vector<64x128xbf16>
    %c4_107 = arith.constant 4 : index
    %c0_108 = arith.constant 0 : index
    %c0_109 = arith.constant 0 : index
    %119 = vector.load %arg4[%c4_107, %c0_108, %c0_109] : memref<9x128x128xbf16, #tpu.memory_space<vmem>>, vector<1x128x128xbf16>
    %120 = vector.shape_cast %119 : vector<1x128x128xbf16> to vector<128x128xbf16>
    %cst_110 = arith.constant dense<0.000000e+00> : vector<64x128xf32>
    %121 = tpu.matmul %118, %120, %cst_110 {dimension_numbers = #tpu.dot_dimension_numbers<[1], [0], [0], [1], [0, 0, 1, 1], [], []>} : vector<64x128xbf16>, vector<128x128xbf16>, vector<64x128xf32> -> vector<64x128xf32>
    %122 = arith.addf %115, %121 : vector<64x128xf32>
    %c1_111 = arith.constant 1 : index
    %c2_112 = arith.constant 2 : index
    %c0_113 = arith.constant 0 : index
    %123 = vector.load %arg8[%c1_111, %c2_112, %c0_113] : memref<10x10x128xf32, #tpu.memory_space<vmem>>, vector<8x8x128xf32>
    %124 = vector.shape_cast %123 : vector<8x8x128xf32> to vector<64x128xf32>
    %125 = arith.truncf %124 : vector<64x128xf32> to vector<64x128xbf16>
    %c5_114 = arith.constant 5 : index
    %c0_115 = arith.constant 0 : index
    %c0_116 = arith.constant 0 : index
    %126 = vector.load %arg4[%c5_114, %c0_115, %c0_116] : memref<9x128x128xbf16, #tpu.memory_space<vmem>>, vector<1x128x128xbf16>
    %127 = vector.shape_cast %126 : vector<1x128x128xbf16> to vector<128x128xbf16>
    %cst_117 = arith.constant dense<0.000000e+00> : vector<64x128xf32>
    %128 = tpu.matmul %125, %127, %cst_117 {dimension_numbers = #tpu.dot_dimension_numbers<[1], [0], [0], [1], [0, 0, 1, 1], [], []>} : vector<64x128xbf16>, vector<128x128xbf16>, vector<64x128xf32> -> vector<64x128xf32>
    %129 = arith.addf %122, %128 : vector<64x128xf32>
    %c2_118 = arith.constant 2 : index
    %c0_119 = arith.constant 0 : index
    %c0_120 = arith.constant 0 : index
    %130 = vector.load %arg8[%c2_118, %c0_119, %c0_120] : memref<10x10x128xf32, #tpu.memory_space<vmem>>, vector<8x8x128xf32>
    %131 = vector.shape_cast %130 : vector<8x8x128xf32> to vector<64x128xf32>
    %132 = arith.truncf %131 : vector<64x128xf32> to vector<64x128xbf16>
    %c6_121 = arith.constant 6 : index
    %c0_122 = arith.constant 0 : index
    %c0_123 = arith.constant 0 : index
    %133 = vector.load %arg4[%c6_121, %c0_122, %c0_123] : memref<9x128x128xbf16, #tpu.memory_space<vmem>>, vector<1x128x128xbf16>
    %134 = vector.shape_cast %133 : vector<1x128x128xbf16> to vector<128x128xbf16>
    %cst_124 = arith.constant dense<0.000000e+00> : vector<64x128xf32>
    %135 = tpu.matmul %132, %134, %cst_124 {dimension_numbers = #tpu.dot_dimension_numbers<[1], [0], [0], [1], [0, 0, 1, 1], [], []>} : vector<64x128xbf16>, vector<128x128xbf16>, vector<64x128xf32> -> vector<64x128xf32>
    %136 = arith.addf %129, %135 : vector<64x128xf32>
    %c2_125 = arith.constant 2 : index
    %c1_126 = arith.constant 1 : index
    %c0_127 = arith.constant 0 : index
    %137 = vector.load %arg8[%c2_125, %c1_126, %c0_127] : memref<10x10x128xf32, #tpu.memory_space<vmem>>, vector<8x8x128xf32>
    %138 = vector.shape_cast %137 : vector<8x8x128xf32> to vector<64x128xf32>
    %139 = arith.truncf %138 : vector<64x128xf32> to vector<64x128xbf16>
    %c7_128 = arith.constant 7 : index
    %c0_129 = arith.constant 0 : index
    %c0_130 = arith.constant 0 : index
    %140 = vector.load %arg4[%c7_128, %c0_129, %c0_130] : memref<9x128x128xbf16, #tpu.memory_space<vmem>>, vector<1x128x128xbf16>
    %141 = vector.shape_cast %140 : vector<1x128x128xbf16> to vector<128x128xbf16>
    %cst_131 = arith.constant dense<0.000000e+00> : vector<64x128xf32>
    %142 = tpu.matmul %139, %141, %cst_131 {dimension_numbers = #tpu.dot_dimension_numbers<[1], [0], [0], [1], [0, 0, 1, 1], [], []>} : vector<64x128xbf16>, vector<128x128xbf16>, vector<64x128xf32> -> vector<64x128xf32>
    %143 = arith.addf %136, %142 : vector<64x128xf32>
    %c2_132 = arith.constant 2 : index
    %c2_133 = arith.constant 2 : index
    %c0_134 = arith.constant 0 : index
    %144 = vector.load %arg8[%c2_132, %c2_133, %c0_134] : memref<10x10x128xf32, #tpu.memory_space<vmem>>, vector<8x8x128xf32>
    %145 = vector.shape_cast %144 : vector<8x8x128xf32> to vector<64x128xf32>
    %146 = arith.truncf %145 : vector<64x128xf32> to vector<64x128xbf16>
    %c8_135 = arith.constant 8 : index
    %c0_136 = arith.constant 0 : index
    %c0_137 = arith.constant 0 : index
    %147 = vector.load %arg4[%c8_135, %c0_136, %c0_137] : memref<9x128x128xbf16, #tpu.memory_space<vmem>>, vector<1x128x128xbf16>
    %148 = vector.shape_cast %147 : vector<1x128x128xbf16> to vector<128x128xbf16>
    %cst_138 = arith.constant dense<0.000000e+00> : vector<64x128xf32>
    %149 = tpu.matmul %146, %148, %cst_138 {dimension_numbers = #tpu.dot_dimension_numbers<[1], [0], [0], [1], [0, 0, 1, 1], [], []>} : vector<64x128xbf16>, vector<128x128xbf16>, vector<64x128xf32> -> vector<64x128xf32>
    %150 = arith.addf %143, %149 : vector<64x128xf32>
    %c0_139 = arith.constant 0 : index
    %c0_140 = arith.constant 0 : index
    %151 = vector.load %arg5[%c0_139, %c0_140] : memref<1x128xf32, #tpu.memory_space<vmem>>, vector<1x128xf32>
    %152 = vector.broadcast %151 : vector<1x128xf32> to vector<64x128xf32>
    %153 = arith.addf %150, %152 : vector<64x128xf32>
    %cst_141 = arith.constant 0.000000e+00 : f32
    %154 = vector.broadcast %cst_141 : f32 to vector<64x128xf32>
    %155 = arith.maximumf %153, %154 : vector<64x128xf32>
    %c0_142 = arith.constant 0 : index
    %c0_143 = arith.constant 0 : index
    %c0_144 = arith.constant 0 : index
    %156 = vector.load %arg6[%c0_142, %c0_143, %c0_144] : memref<1x64x128xf32, #tpu.memory_space<vmem>>, vector<1x64x128xf32>
    %157 = vector.shape_cast %156 : vector<1x64x128xf32> to vector<64x128xf32>
    %158 = vector.shape_cast %155 : vector<64x128xf32> to vector<1x64x128xf32>
    tpu.vector_store %arg6[%c0_142, %c0_143, %c0_144], %158 {strides = array<i32>} : memref<1x64x128xf32, #tpu.memory_space<vmem>>, vector<1x64x128xf32>,
    return
  }
  func.func @transform_0(%arg0: i32) -> (i32, i32, i32, i32) {
    %c0_i32 = arith.constant 0 : i32
    %c0_i32_0 = arith.constant 0 : i32
    %c0_i32_1 = arith.constant 0 : i32
    %c0_i32_2 = arith.constant 0 : i32
    return %arg0, %c0_i32, %c0_i32_0, %c0_i32_1 : i32, i32, i32, i32
  }
  func.func @transform_1(%arg0: i32) -> (i32, i32, i32) {
    %c0_i32 = arith.constant 0 : i32
    %c0_i32_0 = arith.constant 0 : i32
    %c0_i32_1 = arith.constant 0 : i32
    %c0_i32_2 = arith.constant 0 : i32
    return %c0_i32, %c0_i32_0, %c0_i32_1 : i32, i32, i32
  }
  func.func @transform_2(%arg0: i32) -> (i32, i32) {
    %c0_i32 = arith.constant 0 : i32
    %c0_i32_0 = arith.constant 0 : i32
    %c0_i32_1 = arith.constant 0 : i32
    return %c0_i32, %c0_i32_0 : i32, i32
  }
  func.func @transform_3(%arg0: i32) -> (i32, i32, i32) {
    %c0_i32 = arith.constant 0 : i32
    %c0_i32_0 = arith.constant 0 : i32
    %c0_i32_1 = arith.constant 0 : i32
    %c0_i32_2 = arith.constant 0 : i32
    return %c0_i32, %c0_i32_0, %c0_i32_1 : i32, i32, i32
  }
  func.func @transform_4(%arg0: i32) -> (i32, i32) {
    %c0_i32 = arith.constant 0 : i32
    %c0_i32_0 = arith.constant 0 : i32
    %c0_i32_1 = arith.constant 0 : i32
    return %c0_i32, %c0_i32_0 : i32, i32
  }
  func.func @transform_5(%arg0: i32) -> (i32, i32, i32) {
    %c0_i32 = arith.constant 0 : i32
    %c0_i32_0 = arith.constant 0 : i32
    %c0_i32_1 = arith.constant 0 : i32
    return %arg0, %c0_i32, %c0_i32_0 : i32, i32, i32
  }
}

</mosaic_0001>

<llo_original>
// kernel: downsample_forward.1
$region0: #{downsample_forward.1}
  #allocation0 [shape = 'u32[]', space=smem, size = 0x4, offset = 0x4, fixed_abs, tag = 'smem constant byte address 0x4 - core index']
  #allocation1 [shape = 'u32[144,128]{1,0:T(1,128)}', space=vmem, size = 0x12000, scoped, tag = 'internal scratch']
  #allocation2 [shape = 'f32[10,10,128]{2,1,0:T(8,128)}', space=vmem, size = 0x14000, scoped, tag = 'scratch operand']
  #allocation3 [shape = 'f32[10,10,128]{2,1,0:T(8,128)}', space=vmem, size = 0x14000, scoped, tag = 'scratch operand']
  %s0 = inlined_call_operand.vmem [shape: f32[2,16,8,8], index: 0, kind: input, shape index: {}]
  %s1 = inlined_call_operand.vmem [shape: bf16[9,128,128], index: 1, kind: input, shape index: {}]
  %s2 = inlined_call_operand.vmem [shape: f32[1,128], index: 2, kind: input, shape index: {}]
  %s3 = inlined_call_operand.vmem [shape: bf16[9,128,128], index: 3, kind: input, shape index: {}]
  %s4 = inlined_call_operand.vmem [shape: f32[1,128], index: 4, kind: input, shape index: {}]
  %s5 = inlined_call_operand.vmem [shape: f32[2,64,128], index: 5, kind: output, shape index: {}]
  %s6 = sld [smem:[#allocation0]]
  $region53: #{downsample_forward.1} parent=0
    _
  %s8 = ssub.s32 1, %s6
  %s9 = scalar_select 0, %s8, %s6
  loop: start=0, step=1, limit=4
  $region2: #{downsample_forward.1} parent=0 // loop_pre_header
    _
  $region3: #{downsample_forward.1} parent=0 // loop_header
    %s11 = sphi 0, %s15
    %p12 = scmp.ge.s32.totalorder %s11, 4
    %s21 = sphi 0, %s23
    %s24 = sphi 0, %s21
    %s25 = sphi 0, %s24
    %s41 = sphi 0, %s25
    %s45 = sphi 0, %s45
    %s47 = sphi 0, %s45
    %s48 = sphi 0, %s47
    %s62 = sphi 0, %s48
    %s66 = sphi 0, %s66
    %s68 = sphi 0, %s66
    %s69 = sphi 0, %s68
    %s83 = sphi 0, %s69
    %s87 = sphi 0, %s87
    %s89 = sphi 0, %s87
    %s90 = sphi 0, %s89
    %s104 = sphi 0, %s90
    %s108 = sphi 0, %s108
    %s110 = sphi 0, %s108
    %s111 = sphi 0, %s110
    %s125 = sphi 0, %s111
    %s131 = sphi 0, %s133
    %s134 = sphi 0, %s131
    %s135 = sphi 0, %s134
    %s151 = sphi 0, %s135
  $region4: #{downsample_forward.1} parent=0 // loop_header_branch
    %14 = sbr.rel (%p12) target = $region8
  $region5: #{downsample_forward.1} parent=0 // loop_body
    %s16 = ssub.s32 %s11, 1
    %s17 = ssub.s32 %s11, 2
    %s18 = sadd.s32 %s11, 1
    %s19 = ssub.s32 %s11, %s18
    %p20 = scmp.eq.s32.totalorder %s19, 0
    %s22 = sadd.s32 %s21, 1
    %s23 = scalar_select %p20, %s21, %s22
    %p26 = pneg %p20
    %p27 = scmp.eq.s32.totalorder %s11, 1
    %p28 = por %p26, %p27
    %p29 = scmp.ne.s32.totalorder %s21, %s24
    %p30 = scmp.eq.s32.totalorder %s11, 0
    %p31 = por %p29, %p30
    %p32 = scmp.ne.s32.totalorder %s21, %s24
    %p33 = scmp.eq.s32.totalorder %s16, 1
    %p34 = por %p32, %p33
    %p35 = scmp.ne.s32.totalorder %s24, %s25
    %p36 = scmp.eq.s32.totalorder %s16, 0
    %p37 = por %p35, %p36
    %p38 = scmp.ne.s32.totalorder %s24, %s25
    %p39 = scmp.eq.s32.totalorder %s17, 1
    %p40 = por %p38, %p39
    %p42 = scmp.ne.s32.totalorder %s25, %s41
    %p43 = scmp.eq.s32.totalorder %s17, 0
    %p44 = por %p42, %p43
    %s46 = sadd.s32 %s45, 1
    %p49 = scmp.eq.s32.totalorder %s11, 1
    %p50 = scmp.ne.s32.totalorder %s45, %s47
    %p51 = scmp.eq.s32.totalorder %s11, 0
    %p52 = por %p50, %p51
    %p53 = scmp.ne.s32.totalorder %s45, %s47
    %p54 = scmp.eq.s32.totalorder %s16, 1
    %p55 = por %p53, %p54
    %p56 = scmp.ne.s32.totalorder %s47, %s48
    %p57 = scmp.eq.s32.totalorder %s16, 0
    %p58 = por %p56, %p57
    %p59 = scmp.ne.s32.totalorder %s47, %s48
    %p60 = scmp.eq.s32.totalorder %s17, 1
    %p61 = por %p59, %p60
    %p63 = scmp.ne.s32.totalorder %s48, %s62
    %p64 = scmp.eq.s32.totalorder %s17, 0
    %p65 = por %p63, %p64
    %s67 = sadd.s32 %s66, 1
    %p70 = scmp.eq.s32.totalorder %s11, 1
    %p71 = scmp.ne.s32.totalorder %s66, %s68
    %p72 = scmp.eq.s32.totalorder %s11, 0
    %p73 = por %p71, %p72
    %p74 = scmp.ne.s32.totalorder %s66, %s68
    %p75 = scmp.eq.s32.totalorder %s16, 1
    %p76 = por %p74, %p75
    %p77 = scmp.ne.s32.totalorder %s68, %s69
    %p78 = scmp.eq.s32.totalorder %s16, 0
    %p79 = por %p77, %p78
    %p80 = scmp.ne.s32.totalorder %s68, %s69
    %p81 = scmp.eq.s32.totalorder %s17, 1
    %p82 = por %p80, %p81
    %p84 = scmp.ne.s32.totalorder %s69, %s83
    %p85 = scmp.eq.s32.totalorder %s17, 0
    %p86 = por %p84, %p85
    %s88 = sadd.s32 %s87, 1
    %p91 = scmp.eq.s32.totalorder %s11, 1
    %p92 = scmp.ne.s32.totalorder %s87, %s89
    %p93 = scmp.eq.s32.totalorder %s11, 0
    %p94 = por %p92, %p93
    %p95 = scmp.ne.s32.totalorder %s87, %s89
    %p96 = scmp.eq.s32.totalorder %s16, 1
    %p97 = por %p95, %p96
    %p98 = scmp.ne.s32.totalorder %s89, %s90
    %p99 = scmp.eq.s32.totalorder %s16, 0
    %p100 = por %p98, %p99
    %p101 = scmp.ne.s32.totalorder %s89, %s90
    %p102 = scmp.eq.s32.totalorder %s17, 1
    %p103 = por %p101, %p102
    %p105 = scmp.ne.s32.totalorder %s90, %s104
    %p106 = scmp.eq.s32.totalorder %s17, 0
    %p107 = por %p105, %p106
    %s109 = sadd.s32 %s108, 1
    %p112 = scmp.eq.s32.totalorder %s11, 1
    %p113 = scmp.ne.s32.totalorder %s108, %s110
    %p114 = scmp.eq.s32.totalorder %s11, 0
    %p115 = por %p113, %p114
    %p116 = scmp.ne.s32.totalorder %s108, %s110
    %p117 = scmp.eq.s32.totalorder %s16, 1
    %p118 = por %p116, %p117
    %p119 = scmp.ne.s32.totalorder %s110, %s111
    %p120 = scmp.eq.s32.totalorder %s16, 0
    %p121 = por %p119, %p120
    %p122 = scmp.ne.s32.totalorder %s110, %s111
    %p123 = scmp.eq.s32.totalorder %s17, 1
    %p124 = por %p122, %p123
    %p126 = scmp.ne.s32.totalorder %s111, %s125
    %p127 = scmp.eq.s32.totalorder %s17, 0
    %p128 = por %p126, %p127
    %s129 = ssub.s32 %s11, %s18
    %p130 = scmp.eq.s32.totalorder %s129, 0
    %s132 = sadd.s32 %s131, 1
    %s133 = scalar_select %p130, %s131, %s132
    %p136 = pneg %p130
    %p137 = scmp.eq.s32.totalorder %s11, 1
    %p138 = por %p136, %p137
    %p139 = scmp.ne.s32.totalorder %s131, %s134
    %p140 = scmp.eq.s32.totalorder %s11, 0
    %p141 = por %p139, %p140
    %p142 = scmp.ne.s32.totalorder %s131, %s134
    %p143 = scmp.eq.s32.totalorder %s16, 1
    %p144 = por %p142, %p143
    %p145 = scmp.ne.s32.totalorder %s134, %s135
    %p146 = scmp.eq.s32.totalorder %s16, 0
    %p147 = por %p145, %p146
    %p148 = scmp.ne.s32.totalorder %s134, %s135
    %p149 = scmp.eq.s32.totalorder %s17, 1
    %p150 = por %p148, %p149
    %p152 = scmp.ne.s32.totalorder %s135, %s151
    %p153 = scmp.eq.s32.totalorder %s17, 0
    %p154 = por %p152, %p153
    %p155 = scmp.le.s32.totalorder 1, %s11
    %p156 = scmp.lt.s32.totalorder %s11, 3
    %p157 = pnand %p155, %p156
    %p158 = pneg %p157
    // Predicated region
    $region9: #{downsample_forward.1} parent=5 // pred_check
      _
    $region10: #{downsample_forward.1} parent=5 // pred_check_branch
      %160 = sbr.rel (%p157) target = $region12
    $region11: #{downsample_forward.1} parent=5 // pred_region
      %s161 = ssub.s32 %s11, 1
      // Predicated region
      $region13: #{downsample_forward.1} parent=11 // pred_check
        %p162 = pneg %p58
      $region14: #{downsample_forward.1} parent=11 // pred_check_branch
        %164 = sbr.rel (%p162) target = $region16
      $region15: #{downsample_forward.1} parent=11 // pred_region
        _
      $region16: #{downsample_forward.1} parent=11 // pred_fallthru
        _
      // Predicated region
      $region17: #{downsample_forward.1} parent=11 // pred_check
        %p165 = pneg %p79
      $region18: #{downsample_forward.1} parent=11 // pred_check_branch
        %167 = sbr.rel (%p165) target = $region20
      $region19: #{downsample_forward.1} parent=11 // pred_region
        _
      $region20: #{downsample_forward.1} parent=11 // pred_fallthru
        _
      // Predicated region
      $region21: #{downsample_forward.1} parent=11 // pred_check
        %p168 = pneg %p100
      $region22: #{downsample_forward.1} parent=11 // pred_check_branch
        %170 = sbr.rel (%p168) target = $region24
      $region23: #{downsample_forward.1} parent=11 // pred_region
        _
      $region24: #{downsample_forward.1} parent=11 // pred_fallthru
        _
      // Predicated region
      $region25: #{downsample_forward.1} parent=11 // pred_check
        %p171 = pneg %p121
      $region26: #{downsample_forward.1} parent=11 // pred_check_branch
        %173 = sbr.rel (%p171) target = $region28
      $region27: #{downsample_forward.1} parent=11 // pred_region
        _
      $region28: #{downsample_forward.1} parent=11 // pred_fallthru
        _
    $region12: #{downsample_forward.1} parent=5 // pred_fallthru
      _
    %p174 = scmp.lt.s32.totalorder %s11, 2
    // Predicated region
    $region29: #{downsample_forward.1} parent=5 // pred_check
      %p175 = pneg %p174
    $region30: #{downsample_forward.1} parent=5 // pred_check_branch
      %177 = sbr.rel (%p175) target = $region32
    $region31: #{downsample_forward.1} parent=5 // pred_region
      // Predicated region
      $region33: #{downsample_forward.1} parent=31 // pred_check
        %p178 = pneg %p31
      $region34: #{downsample_forward.1} parent=31 // pred_check_branch
        %180 = sbr.rel (%p178) target = $region36
      $region35: #{downsample_forward.1} parent=31 // pred_region
        %p181 = scmp.lt.s32.totalorder %s11, 1
        %s182 = scalar_select %p181, %s11, 1
        %s183 = smul.addr %s182, 16
        %s184 = smul.addr %s183, 8
        %s185 = scalar_lea.vmem %s0, %s184
      $region36: #{downsample_forward.1} parent=31 // pred_fallthru
        _
    $region32: #{downsample_forward.1} parent=5 // pred_fallthru
      _
    %p186 = scmp.le.s32.totalorder 1, %s11
    %p187 = scmp.lt.s32.totalorder %s11, 3
    %p188 = pnand %p186, %p187
    %p189 = pneg %p188
    // Predicated region
    $region37: #{downsample_forward.1} parent=5 // pred_check
      _
    $region38: #{downsample_forward.1} parent=5 // pred_check_branch
      %191 = sbr.rel (%p188) target = $region40
    $region39: #{downsample_forward.1} parent=5 // pred_region
      %s192 = ssub.s32 %s11, 1
      %p193 = scmp.lt.s32.totalorder %s16, 1
      %s194 = scalar_select %p193, %s16, 1
      %s195 = smul.addr %s194, 16
      %s196 = smul.addr %s195, 8
      %s197 = scalar_lea.vmem %s0, %s196
      %p198 = pneg %p37
      %p199 = pneg %p34
      %p200 = pneg %p58
      %p201 = pneg %p55
      %p202 = pneg %p79
      %p203 = pneg %p76
      %p204 = pneg %p100
      %p205 = pneg %p97
      %p206 = pneg %p121
      %p207 = pneg %p118
      %p208 = pneg %p147
      %p209 = pneg %p144
      %p210 = scmp.lt.s32.totalorder %s16, 1
      %s211 = scalar_select %p210, %s16, 1
      %s212 = smul.addr %s211, 8
      %s213 = smul.addr %s212, 8
      %s214 = scalar_lea.vmem %s5, %s213
      %p215 = scmp.lt.s32.totalorder %s16, 1
      %s216 = scalar_select %p215, %s16, 1
      %s217 = smul.addr %s216, 16
      %s218 = smul.addr %s217, 8
      %s219 = scalar_lea.vmem %s0, %s218
      %p220 = scmp.lt.s32.totalorder %s16, 1
      %s221 = scalar_select %p220, %s16, 1
      %s222 = smul.addr %s221, 8
      %s223 = smul.addr %s222, 8
      %s224 = scalar_lea.vmem %s5, %s223
      %v226 = vld [vmem:[%s219] sm:$0xff]
      %v227 = vld [vmem:[%s219 + $0x8] sm:$0xff]
      %v228 = vld [vmem:[%s219 + $0x10] sm:$0xff]
      %v229 = vld [vmem:[%s219 + $0x18] sm:$0xff]
      %v230 = vld [vmem:[%s219 + $0x20] sm:$0xff]
      %v231 = vld [vmem:[%s219 + $0x28] sm:$0xff]
      %v232 = vld [vmem:[%s219 + $0x30] sm:$0xff]
      %v233 = vld [vmem:[%s219 + $0x38] sm:$0xff]
      %v234 = vld [vmem:[%s219 + $0x40] sm:$0xff]
      %v235 = vld [vmem:[%s219 + $0x48] sm:$0xff]
      %v236 = vld [vmem:[%s219 + $0x50] sm:$0xff]
      %v237 = vld [vmem:[%s219 + $0x58] sm:$0xff]
      %v238 = vld [vmem:[%s219 + $0x60] sm:$0xff]
      %v239 = vld [vmem:[%s219 + $0x68] sm:$0xff]
      %v240 = vld [vmem:[%s219 + $0x70] sm:$0xff]
      %v241 = vld [vmem:[%s219 + $0x78] sm:$0xff]
      %258 = vrot.lane.b32.xlu0 %v226, 124
      %v259 = vpop.permute.xlu0 %258
      %260 = vrot.lane.b32.xlu0 %v227, 124
      %v261 = vpop.permute.xlu0 %260
      %262 = vrot.lane.b32.xlu0 %v228, 124
      %v263 = vpop.permute.xlu0 %262
      %264 = vrot.lane.b32.xlu0 %v229, 124
      %v265 = vpop.permute.xlu0 %264
      %266 = vrot.lane.b32.xlu0 %v230, 124
      %v267 = vpop.permute.xlu0 %266
      %268 = vrot.lane.b32.xlu0 %v231, 124
      %v269 = vpop.permute.xlu0 %268
      %270 = vrot.lane.b32.xlu0 %v232, 124
      %v271 = vpop.permute.xlu0 %270
      %272 = vrot.lane.b32.xlu0 %v233, 124
      %v273 = vpop.permute.xlu0 %272
      %274 = vrot.lane.b32.xlu0 %v234, 124
      %v275 = vpop.permute.xlu0 %274
      %276 = vrot.lane.b32.xlu0 %v235, 124
      %v277 = vpop.permute.xlu0 %276
      %278 = vrot.lane.b32.xlu0 %v236, 124
      %v279 = vpop.permute.xlu0 %278
      %280 = vrot.lane.b32.xlu0 %v237, 124
      %v281 = vpop.permute.xlu0 %280
      %282 = vrot.lane.b32.xlu0 %v238, 124
      %v283 = vpop.permute.xlu0 %282
      %284 = vrot.lane.b32.xlu0 %v239, 124
      %v285 = vpop.permute.xlu0 %284
      %286 = vrot.lane.b32.xlu0 %v240, 124
      %v287 = vpop.permute.xlu0 %286
      %288 = vrot.lane.b32.xlu0 %v241, 124
      %v289 = vpop.permute.xlu0 %288
      %v306 = vmax.f32 %v226, %v259
      %v307 = vmax.f32 %v227, %v261
      %v308 = vmax.f32 %v228, %v263
      %v309 = vmax.f32 %v229, %v265
      %v310 = vmax.f32 %v230, %v267
      %v311 = vmax.f32 %v231, %v269
      %v312 = vmax.f32 %v232, %v271
      %v313 = vmax.f32 %v233, %v273
      %v314 = vmax.f32 %v234, %v275
      %v315 = vmax.f32 %v235, %v277
      %v316 = vmax.f32 %v236, %v279
      %v317 = vmax.f32 %v237, %v281
      %v318 = vmax.f32 %v238, %v283
      %v319 = vmax.f32 %v239, %v285
      %v320 = vmax.f32 %v240, %v287
      %v321 = vmax.f32 %v241, %v289
      %v322 = vmax.f32 %v306, %v307
      %v323 = vmax.f32 %v308, %v309
      %v324 = vmax.f32 %v310, %v311
      %v325 = vmax.f32 %v312, %v313
      %v326 = vmax.f32 %v314, %v315
      %v327 = vmax.f32 %v316, %v317
      %v328 = vmax.f32 %v318, %v319
      %v329 = vmax.f32 %v320, %v321
      %330 = vst [vmem:[#allocation2] sm:$0xff] 0.0
      %331 = vst [vmem:[#allocation2 + $0x8] sm:$0x3] 0.0
      %332 = vst [vmem:[#allocation2 + $0x10] sm:$0xff] 0.0
      %333 = vst [vmem:[#allocation2 + $0x18] sm:$0x3] 0.0
      %334 = vst [vmem:[#allocation2 + $0x20] sm:$0xff] 0.0
      %335 = vst [vmem:[#allocation2 + $0x28] sm:$0x3] 0.0
      %336 = vst [vmem:[#allocation2 + $0x30] sm:$0xff] 0.0
      %337 = vst [vmem:[#allocation2 + $0x38] sm:$0x3] 0.0
      %338 = vst [vmem:[#allocation2 + $0x40] sm:$0xff] 0.0
      %339 = vst [vmem:[#allocation2 + $0x48] sm:$0x3] 0.0
      %340 = vst [vmem:[#allocation2 + $0x50] sm:$0xff] 0.0
      %341 = vst [vmem:[#allocation2 + $0x58] sm:$0x3] 0.0
      %342 = vst [vmem:[#allocation2 + $0x60] sm:$0xff] 0.0
      %343 = vst [vmem:[#allocation2 + $0x68] sm:$0x3] 0.0
      %344 = vst [vmem:[#allocation2 + $0x70] sm:$0xff] 0.0
      %345 = vst [vmem:[#allocation2 + $0x78] sm:$0x3] 0.0
      %346 = vst [vmem:[#allocation2 + $0x80] sm:$0xff] 0.0
      %347 = vst [vmem:[#allocation2 + $0x88] sm:$0x3] 0.0
      %348 = vst [vmem:[#allocation2 + $0x90] sm:$0xff] 0.0
      %349 = vst [vmem:[#allocation2 + $0x98] sm:$0x3] 0.0
      %s350 = scalar_lea.vmem [#allocation2], 16
      %vm351 = vcmask 31744
      %352 = vst.msk [vmem:[%s350 + $0x1] sm:$0xff] %vm351, %v322
      %353 = vst.msk [vmem:[%s350 + $0x11] sm:$0xff] %vm351, %v323
      %354 = vst.msk [vmem:[%s350 + $0x21] sm:$0xff] %vm351, %v324
      %355 = vst.msk [vmem:[%s350 + $0x31] sm:$0xff] %vm351, %v325
      %356 = vst.msk [vmem:[%s350 + $0x41] sm:$0xff] %vm351, %v326
      %357 = vst.msk [vmem:[%s350 + $0x51] sm:$0xff] %vm351, %v327
      %358 = vst.msk [vmem:[%s350 + $0x61] sm:$0xff] %vm351, %v328
      %359 = vst.msk [vmem:[%s350 + $0x71] sm:$0xff] %vm351, %v329
      %v360 = vld [vmem:[#allocation2] sm:$0xff]
      %v361 = vld [vmem:[#allocation2 + $0x10] sm:$0xff]
      %v362 = vld [vmem:[#allocation2 + $0x20] sm:$0xff]
      %v363 = vld [vmem:[#allocation2 + $0x30] sm:$0xff]
      %v364 = vld [vmem:[#allocation2 + $0x40] sm:$0xff]
      %v365 = vld [vmem:[#allocation2 + $0x50] sm:$0xff]
      %v366 = vld [vmem:[#allocation2 + $0x60] sm:$0xff]
      %v367 = vld [vmem:[#allocation2 + $0x70] sm:$0xff]
      %v368 = vpack.c.bf16 %v361, %v360
      %v369 = vpack.c.bf16 %v363, %v362
      %v370 = vpack.c.bf16 %v365, %v364
      %v371 = vpack.c.bf16 %v367, %v366
      %v372 = vld [vmem:[%s1] sm:$0xf]
      %v373 = vld [vmem:[%s1 + $0x4] sm:$0xf]
      %v374 = vld [vmem:[%s1 + $0x8] sm:$0xf]
      %v375 = vld [vmem:[%s1 + $0xc] sm:$0xf]
      %v376 = vld [vmem:[%s1 + $0x10] sm:$0xf]
      %v377 = vld [vmem:[%s1 + $0x14] sm:$0xf]
      %v378 = vld [vmem:[%s1 + $0x18] sm:$0xf]
      %v379 = vld [vmem:[%s1 + $0x1c] sm:$0xf]
      %v380 = vld [vmem:[%s1 + $0x20] sm:$0xf]
      %v381 = vld [vmem:[%s1 + $0x24] sm:$0xf]
      %v382 = vld [vmem:[%s1 + $0x28] sm:$0xf]
      %v383 = vld [vmem:[%s1 + $0x2c] sm:$0xf]
      %v384 = vld [vmem:[%s1 + $0x30] sm:$0xf]
      %v385 = vld [vmem:[%s1 + $0x34] sm:$0xf]
      %v386 = vld [vmem:[%s1 + $0x38] sm:$0xf]
      %v387 = vld [vmem:[%s1 + $0x3c] sm:$0xf]
      %v388 = vld [vmem:[#allocation2 + $0x1] sm:$0xff]
      %v389 = vld [vmem:[#allocation2 + $0x11] sm:$0xff]
      %v390 = vld [vmem:[#allocation2 + $0x21] sm:$0xff]
      %v391 = vld [vmem:[#allocation2 + $0x31] sm:$0xff]
      %v392 = vld [vmem:[#allocation2 + $0x41] sm:$0xff]
      %v393 = vld [vmem:[#allocation2 + $0x51] sm:$0xff]
      %v394 = vld [vmem:[#allocation2 + $0x61] sm:$0xff]
      %v395 = vld [vmem:[#allocation2 + $0x71] sm:$0xff]
      %v396 = vpack.c.bf16 %v389, %v388
      %v397 = vpack.c.bf16 %v391, %v390
      %v398 = vpack.c.bf16 %v393, %v392
      %v399 = vpack.c.bf16 %v395, %v394
      %s400 = scalar_lea.vmem %s1, 64
      %v401 = vld [vmem:[%s400] sm:$0xf]
      %v402 = vld [vmem:[%s400 + $0x4] sm:$0xf]
      %v403 = vld [vmem:[%s400 + $0x8] sm:$0xf]
      %v404 = vld [vmem:[%s400 + $0xc] sm:$0xf]
      %v405 = vld [vmem:[%s400 + $0x10] sm:$0xf]
      %v406 = vld [vmem:[%s400 + $0x14] sm:$0xf]
      %v407 = vld [vmem:[%s400 + $0x18] sm:$0xf]
      %v408 = vld [vmem:[%s400 + $0x1c] sm:$0xf]
      %v409 = vld [vmem:[%s400 + $0x20] sm:$0xf]
      %v410 = vld [vmem:[%s400 + $0x24] sm:$0xf]
      %v411 = vld [vmem:[%s400 + $0x28] sm:$0xf]
      %v412 = vld [vmem:[%s400 + $0x2c] sm:$0xf]
      %v413 = vld [vmem:[%s400 + $0x30] sm:$0xf]
      %v414 = vld [vmem:[%s400 + $0x34] sm:$0xf]
      %v415 = vld [vmem:[%s400 + $0x38] sm:$0xf]
      %v416 = vld [vmem:[%s400 + $0x3c] sm:$0xf]
      %v433 = vunpack.c.l.b16 %v401
      %v434 = vunpack.c.l.b16 %v402
      %v435 = vunpack.c.l.b16 %v403
      %v436 = vunpack.c.l.b16 %v404
      %v437 = vunpack.c.l.b16 %v405
      %v438 = vunpack.c.l.b16 %v406
      %v439 = vunpack.c.l.b16 %v407
      %v440 = vunpack.c.l.b16 %v408
      %v441 = vunpack.c.l.b16 %v409
      %v442 = vunpack.c.l.b16 %v410
      %v443 = vunpack.c.l.b16 %v411
      %v444 = vunpack.c.l.b16 %v412
      %v445 = vunpack.c.l.b16 %v413
      %v446 = vunpack.c.l.b16 %v414
      %v447 = vunpack.c.l.b16 %v415
      %v448 = vunpack.c.l.b16 %v416
      %v449 = vpack.c.b16 %v434, %v433
      %v450 = vpack.c.b16 %v436, %v435
      %v451 = vpack.c.b16 %v438, %v437
      %v452 = vpack.c.b16 %v440, %v439
      %v453 = vpack.c.b16 %v442, %v441
      %v454 = vpack.c.b16 %v444, %v443
      %v455 = vpack.c.b16 %v446, %v445
      %v456 = vpack.c.b16 %v448, %v447
      %465 = vmatprep.subr.bf16.mxu0 0
      %466 = vmatpush1.bf16.msra.mxu0 %v449
      %467 = vmatprep.subr.bf16.mxu0 0
      %468 = vmatpush1.bf16.msra.mxu0 %v450
      %469 = vmatprep.subr.bf16.mxu0 0
      %470 = vmatpush1.bf16.msra.mxu0 %v451
      %471 = vmatprep.subr.bf16.mxu0 0
      %472 = vmatpush1.bf16.msra.mxu0 %v452
      %473 = vmatprep.subr.bf16.mxu0 0
      %474 = vmatpush1.bf16.msra.mxu0 %v453
      %475 = vmatprep.subr.bf16.mxu0 0
      %476 = vmatpush1.bf16.msra.mxu0 %v454
      %477 = vmatprep.subr.bf16.mxu0 0
      %478 = vmatpush1.bf16.msra.mxu0 %v455
      %479 = vmatprep.subr.bf16.mxu0 0
      %480 = vmatpush1.bf16.msra.mxu0 %v456
      %481 = vmatprep.subr.bf16.mxu0 0
      %482 = vmatpush1.bf16.msra.mxu0 0
      %483 = vmatprep.subr.bf16.mxu0 0
      %484 = vmatpush1.bf16.msra.mxu0 0
      %485 = vmatprep.subr.bf16.mxu0 0
      %486 = vmatpush1.bf16.msra.mxu0 0
      %487 = vmatprep.subr.bf16.mxu0 0
      %488 = vmatpush1.bf16.msra.mxu0 0
      %489 = vmatprep.subr.bf16.mxu0 0
      %490 = vmatpush1.bf16.msra.mxu0 0
      %491 = vmatprep.subr.bf16.mxu0 0
      %492 = vmatpush1.bf16.msra.mxu0 0
      %493 = vmatprep.subr.bf16.mxu0 0
      %494 = vmatpush1.bf16.msra.mxu0 0
      %495 = vmatprep.subr.bf16.mxu0 0
      %496 = vmatpush1.bf16.msra.mxu0 0
      %497 = vmatprep.mubr.bf16.mxu0 0
      %498 = vmatmul.mubr.bf16.gmra.mrb[0].mxu0 %v396
      %v499 = vpop.f32.mrb[0].mxu0
      %v500 = vadd.f32 0.0, %v499
      %v501 = vpop.f32.mrb[0].mxu0
      %v502 = vpop.f32.mrb[0].mxu0
      %v503 = vadd.f32 0.0, %v502
      %v504 = vpop.f32.mrb[0].mxu0
      %505 = vmatprep.mubr.bf16.mxu0 0
      %506 = vmatmul.mubr.bf16.gmra.mrb[0].mxu0 %v397
      %v507 = vpop.f32.mrb[0].mxu0
      %v508 = vadd.f32 0.0, %v507
      %v509 = vpop.f32.mrb[0].mxu0
      %v510 = vpop.f32.mrb[0].mxu0
      %v511 = vadd.f32 0.0, %v510
      %v512 = vpop.f32.mrb[0].mxu0
      %513 = vmatprep.mubr.bf16.mxu0 0
      %514 = vmatmul.mubr.bf16.gmra.mrb[0].mxu0 %v398
      %v515 = vpop.f32.mrb[0].mxu0
      %v516 = vadd.f32 0.0, %v515
      %v517 = vpop.f32.mrb[0].mxu0
      %v518 = vpop.f32.mrb[0].mxu0
      %v519 = vadd.f32 0.0, %v518
      %v520 = vpop.f32.mrb[0].mxu0
      %521 = vmatprep.mubr.bf16.mxu0 0
      %522 = vmatmul.mubr.bf16.gmra.mrb[0].mxu0 %v399
      %v523 = vpop.f32.mrb[0].mxu0
      %v524 = vadd.f32 0.0, %v523
      %v525 = vpop.f32.mrb[0].mxu0
      %v526 = vpop.f32.mrb[0].mxu0
      %v527 = vadd.f32 0.0, %v526
      %v528 = vpop.f32.mrb[0].mxu0
      %529 = vdwg.mxu0
      %v546 = vunpack.c.l.b16 %v372
      %v547 = vunpack.c.l.b16 %v373
      %v548 = vunpack.c.l.b16 %v374
      %v549 = vunpack.c.l.b16 %v375
      %v550 = vunpack.c.l.b16 %v376
      %v551 = vunpack.c.l.b16 %v377
      %v552 = vunpack.c.l.b16 %v378
      %v553 = vunpack.c.l.b16 %v379
      %v554 = vunpack.c.l.b16 %v380
      %v555 = vunpack.c.l.b16 %v381
      %v556 = vunpack.c.l.b16 %v382
      %v557 = vunpack.c.l.b16 %v383
      %v558 = vunpack.c.l.b16 %v384
      %v559 = vunpack.c.l.b16 %v385
      %v560 = vunpack.c.l.b16 %v386
      %v561 = vunpack.c.l.b16 %v387
      %v562 = vpack.c.b16 %v547, %v546
      %v563 = vpack.c.b16 %v549, %v548
      %v564 = vpack.c.b16 %v551, %v550
      %v565 = vpack.c.b16 %v553, %v552
      %v566 = vpack.c.b16 %v555, %v554
      %v567 = vpack.c.b16 %v557, %v556
      %v568 = vpack.c.b16 %v559, %v558
      %v569 = vpack.c.b16 %v561, %v560
      %578 = vmatprep.subr.bf16.mxu0 0
      %579 = vmatpush1.bf16.msra.mxu0 %v562
      %580 = vmatprep.subr.bf16.mxu0 0
      %581 = vmatpush1.bf16.msra.mxu0 %v563
      %582 = vmatprep.subr.bf16.mxu0 0
      %583 = vmatpush1.bf16.msra.mxu0 %v564
      %584 = vmatprep.subr.bf16.mxu0 0
      %585 = vmatpush1.bf16.msra.mxu0 %v565
      %586 = vmatprep.subr.bf16.mxu0 0
      %587 = vmatpush1.bf16.msra.mxu0 %v566
      %588 = vmatprep.subr.bf16.mxu0 0
      %589 = vmatpush1.bf16.msra.mxu0 %v567
      %590 = vmatprep.subr.bf16.mxu0 0
      %591 = vmatpush1.bf16.msra.mxu0 %v568
      %592 = vmatprep.subr.bf16.mxu0 0
      %593 = vmatpush1.bf16.msra.mxu0 %v569
      %594 = vmatprep.subr.bf16.mxu0 0
      %595 = vmatpush1.bf16.msra.mxu0 0
      %596 = vmatprep.subr.bf16.mxu0 0
      %597 = vmatpush1.bf16.msra.mxu0 0
      %598 = vmatprep.subr.bf16.mxu0 0
      %599 = vmatpush1.bf16.msra.mxu0 0
      %600 = vmatprep.subr.bf16.mxu0 0
      %601 = vmatpush1.bf16.msra.mxu0 0
      %602 = vmatprep.subr.bf16.mxu0 0
      %603 = vmatpush1.bf16.msra.mxu0 0
      %604 = vmatprep.subr.bf16.mxu0 0
      %605 = vmatpush1.bf16.msra.mxu0 0
      %606 = vmatprep.subr.bf16.mxu0 0
      %607 = vmatpush1.bf16.msra.mxu0 0
      %608 = vmatprep.subr.bf16.mxu0 0
      %609 = vmatpush1.bf16.msra.mxu0 0
      %610 = vmatprep.mubr.bf16.mxu0 0
      %611 = vmatmul.mubr.bf16.gmra.mrb[0].mxu0 %v368
      %v612 = vpop.f32.mrb[0].mxu0
      %v613 = vadd.f32 %v500, %v612
      %v614 = vpop.f32.mrb[0].mxu0
      %v615 = vpop.f32.mrb[0].mxu0
      %v616 = vadd.f32 %v503, %v615
      %v617 = vpop.f32.mrb[0].mxu0
      %618 = vmatprep.mubr.bf16.mxu0 0
      %619 = vmatmul.mubr.bf16.gmra.mrb[0].mxu0 %v369
      %v620 = vpop.f32.mrb[0].mxu0
      %v621 = vadd.f32 %v508, %v620
      %v622 = vpop.f32.mrb[0].mxu0
      %v623 = vpop.f32.mrb[0].mxu0
      %v624 = vadd.f32 %v511, %v623
      %v625 = vpop.f32.mrb[0].mxu0
      %626 = vmatprep.mubr.bf16.mxu0 0
      %627 = vmatmul.mubr.bf16.gmra.mrb[0].mxu0 %v370
      %v628 = vpop.f32.mrb[0].mxu0
      %v629 = vadd.f32 %v516, %v628
      %v630 = vpop.f32.mrb[0].mxu0
      %v631 = vpop.f32.mrb[0].mxu0
      %v632 = vadd.f32 %v519, %v631
      %v633 = vpop.f32.mrb[0].mxu0
      %634 = vmatprep.mubr.bf16.mxu0 0
      %635 = vmatmul.mubr.bf16.gmra.mrb[0].mxu0 %v371
      %v636 = vpop.f32.mrb[0].mxu0
      %v637 = vadd.f32 %v524, %v636
      %v638 = vpop.f32.mrb[0].mxu0
      %v639 = vpop.f32.mrb[0].mxu0
      %v640 = vadd.f32 %v527, %v639
      %v641 = vpop.f32.mrb[0].mxu0
      %642 = vdwg.mxu0
      %v643 = vld [vmem:[#allocation2 + $0x2] sm:$0xff]
      %v644 = vld [vmem:[#allocation2 + $0x12] sm:$0xff]
      %v645 = vld [vmem:[#allocation2 + $0x22] sm:$0xff]
      %v646 = vld [vmem:[#allocation2 + $0x32] sm:$0xff]
      %v647 = vld [vmem:[#allocation2 + $0x42] sm:$0xff]
      %v648 = vld [vmem:[#allocation2 + $0x52] sm:$0xff]
      %v649 = vld [vmem:[#allocation2 + $0x62] sm:$0xff]
      %v650 = vld [vmem:[#allocation2 + $0x72] sm:$0xff]
      %v651 = vpack.c.bf16 %v644, %v643
      %v652 = vpack.c.bf16 %v646, %v645
      %v653 = vpack.c.bf16 %v648, %v647
      %v654 = vpack.c.bf16 %v650, %v649
      %s655 = scalar_lea.vmem %s1, 128
      %v656 = vld [vmem:[%s655] sm:$0xf]
      %v657 = vld [vmem:[%s655 + $0x4] sm:$0xf]
      %v658 = vld [vmem:[%s655 + $0x8] sm:$0xf]
      %v659 = vld [vmem:[%s655 + $0xc] sm:$0xf]
      %v660 = vld [vmem:[%s655 + $0x10] sm:$0xf]
      %v661 = vld [vmem:[%s655 + $0x14] sm:$0xf]
      %v662 = vld [vmem:[%s655 + $0x18] sm:$0xf]
      %v663 = vld [vmem:[%s655 + $0x1c] sm:$0xf]
      %v664 = vld [vmem:[%s655 + $0x20] sm:$0xf]
      %v665 = vld [vmem:[%s655 + $0x24] sm:$0xf]
      %v666 = vld [vmem:[%s655 + $0x28] sm:$0xf]
      %v667 = vld [vmem:[%s655 + $0x2c] sm:$0xf]
      %v668 = vld [vmem:[%s655 + $0x30] sm:$0xf]
      %v669 = vld [vmem:[%s655 + $0x34] sm:$0xf]
      %v670 = vld [vmem:[%s655 + $0x38] sm:$0xf]
      %v671 = vld [vmem:[%s655 + $0x3c] sm:$0xf]
      %v688 = vunpack.c.l.b16 %v656
      %v689 = vunpack.c.l.b16 %v657
      %v690 = vunpack.c.l.b16 %v658
      %v691 = vunpack.c.l.b16 %v659
      %v692 = vunpack.c.l.b16 %v660
      %v693 = vunpack.c.l.b16 %v661
      %v694 = vunpack.c.l.b16 %v662
      %v695 = vunpack.c.l.b16 %v663
      %v696 = vunpack.c.l.b16 %v664
      %v697 = vunpack.c.l.b16 %v665
      %v698 = vunpack.c.l.b16 %v666
      %v699 = vunpack.c.l.b16 %v667
      %v700 = vunpack.c.l.b16 %v668
      %v701 = vunpack.c.l.b16 %v669
      %v702 = vunpack.c.l.b16 %v670
      %v703 = vunpack.c.l.b16 %v671
      %v704 = vpack.c.b16 %v689, %v688
      %v705 = vpack.c.b16 %v691, %v690
      %v706 = vpack.c.b16 %v693, %v692
      %v707 = vpack.c.b16 %v695, %v694
      %v708 = vpack.c.b16 %v697, %v696
      %v709 = vpack.c.b16 %v699, %v698
      %v710 = vpack.c.b16 %v701, %v700
      %v711 = vpack.c.b16 %v703, %v702
      %720 = vmatprep.subr.bf16.mxu0 0
      %721 = vmatpush1.bf16.msra.mxu0 %v704
      %722 = vmatprep.subr.bf16.mxu0 0
      %723 = vmatpush1.bf16.msra.mxu0 %v705
      %724 = vmatprep.subr.bf16.mxu0 0
      %725 = vmatpush1.bf16.msra.mxu0 %v706
      %726 = vmatprep.subr.bf16.mxu0 0
      %727 = vmatpush1.bf16.msra.mxu0 %v707
      %728 = vmatprep.subr.bf16.mxu0 0
      %729 = vmatpush1.bf16.msra.mxu0 %v708
      %730 = vmatprep.subr.bf16.mxu0 0
      %731 = vmatpush1.bf16.msra.mxu0 %v709
      %732 = vmatprep.subr.bf16.mxu0 0
      %733 = vmatpush1.bf16.msra.mxu0 %v710
      %734 = vmatprep.subr.bf16.mxu0 0
      %735 = vmatpush1.bf16.msra.mxu0 %v711
      %736 = vmatprep.subr.bf16.mxu0 0
      %737 = vmatpush1.bf16.msra.mxu0 0
      %738 = vmatprep.subr.bf16.mxu0 0
      %739 = vmatpush1.bf16.msra.mxu0 0
      %740 = vmatprep.subr.bf16.mxu0 0
      %741 = vmatpush1.bf16.msra.mxu0 0
      %742 = vmatprep.subr.bf16.mxu0 0
      %743 = vmatpush1.bf16.msra.mxu0 0
      %744 = vmatprep.subr.bf16.mxu0 0
      %745 = vmatpush1.bf16.msra.mxu0 0
      %746 = vmatprep.subr.bf16.mxu0 0
      %747 = vmatpush1.bf16.msra.mxu0 0
      %748 = vmatprep.subr.bf16.mxu0 0
      %749 = vmatpush1.bf16.msra.mxu0 0
      %750 = vmatprep.subr.bf16.mxu0 0
      %751 = vmatpush1.bf16.msra.mxu0 0
      %752 = vmatprep.mubr.bf16.mxu0 0
      %753 = vmatmul.mubr.bf16.gmra.mrb[0].mxu0 %v651
      %v754 = vpop.f32.mrb[0].mxu0
      %v755 = vadd.f32 0.0, %v754
      %v756 = vpop.f32.mrb[0].mxu0
      %v757 = vpop.f32.mrb[0].mxu0
      %v758 = vadd.f32 0.0, %v757
      %v759 = vpop.f32.mrb[0].mxu0
      %760 = vmatprep.mubr.bf16.mxu0 0
      %761 = vmatmul.mubr.bf16.gmra.mrb[0].mxu0 %v652
      %v762 = vpop.f32.mrb[0].mxu0
      %v763 = vadd.f32 0.0, %v762
      %v764 = vpop.f32.mrb[0].mxu0
      %v765 = vpop.f32.mrb[0].mxu0
      %v766 = vadd.f32 0.0, %v765
      %v767 = vpop.f32.mrb[0].mxu0
      %768 = vmatprep.mubr.bf16.mxu0 0
      %769 = vmatmul.mubr.bf16.gmra.mrb[0].mxu0 %v653
      %v770 = vpop.f32.mrb[0].mxu0
      %v771 = vadd.f32 0.0, %v770
      %v772 = vpop.f32.mrb[0].mxu0
      %v773 = vpop.f32.mrb[0].mxu0
      %v774 = vadd.f32 0.0, %v773
      %v775 = vpop.f32.mrb[0].mxu0
      %776 = vmatprep.mubr.bf16.mxu0 0
      %777 = vmatmul.mubr.bf16.gmra.mrb[0].mxu0 %v654
      %v778 = vpop.f32.mrb[0].mxu0
      %v779 = vadd.f32 0.0, %v778
      %v780 = vpop.f32.mrb[0].mxu0
      %v781 = vpop.f32.mrb[0].mxu0
      %v782 = vadd.f32 0.0, %v781
      %v783 = vpop.f32.mrb[0].mxu0
      %784 = vdwg.mxu0
      %v785 = vadd.f32 %v613, %v755
      %v786 = vadd.f32 %v616, %v758
      %v787 = vadd.f32 %v621, %v763
      %v788 = vadd.f32 %v624, %v766
      %v789 = vadd.f32 %v629, %v771
      %v790 = vadd.f32 %v632, %v774
      %v791 = vadd.f32 %v637, %v779
      %v792 = vadd.f32 %v640, %v782
      %v793 = vld [vmem:[%s350] sm:$0xff]
      %v794 = vld [vmem:[%s350 + $0x10] sm:$0xff]
      %v795 = vld [vmem:[%s350 + $0x20] sm:$0xff]
      %v796 = vld [vmem:[%s350 + $0x30] sm:$0xff]
      %v797 = vld [vmem:[%s350 + $0x40] sm:$0xff]
      %v798 = vld [vmem:[%s350 + $0x50] sm:$0xff]
      %v799 = vld [vmem:[%s350 + $0x60] sm:$0xff]
      %v800 = vld [vmem:[%s350 + $0x70] sm:$0xff]
      %v801 = vpack.c.bf16 %v794, %v793
      %v802 = vpack.c.bf16 %v796, %v795
      %v803 = vpack.c.bf16 %v798, %v797
      %v804 = vpack.c.bf16 %v800, %v799
      %s805 = scalar_lea.vmem %s1, 192
      %v806 = vld [vmem:[%s805] sm:$0xf]
      %v807 = vld [vmem:[%s805 + $0x4] sm:$0xf]
      %v808 = vld [vmem:[%s805 + $0x8] sm:$0xf]
      %v809 = vld [vmem:[%s805 + $0xc] sm:$0xf]
      %v810 = vld [vmem:[%s805 + $0x10] sm:$0xf]
      %v811 = vld [vmem:[%s805 + $0x14] sm:$0xf]
      %v812 = vld [vmem:[%s805 + $0x18] sm:$0xf]
      %v813 = vld [vmem:[%s805 + $0x1c] sm:$0xf]
      %v814 = vld [vmem:[%s805 + $0x20] sm:$0xf]
      %v815 = vld [vmem:[%s805 + $0x24] sm:$0xf]
      %v816 = vld [vmem:[%s805 + $0x28] sm:$0xf]
      %v817 = vld [vmem:[%s805 + $0x2c] sm:$0xf]
      %v818 = vld [vmem:[%s805 + $0x30] sm:$0xf]
      %v819 = vld [vmem:[%s805 + $0x34] sm:$0xf]
      %v820 = vld [vmem:[%s805 + $0x38] sm:$0xf]
      %v821 = vld [vmem:[%s805 + $0x3c] sm:$0xf]
      %v838 = vunpack.c.l.b16 %v806
      %v839 = vunpack.c.l.b16 %v807
      %v840 = vunpack.c.l.b16 %v808
      %v841 = vunpack.c.l.b16 %v809
      %v842 = vunpack.c.l.b16 %v810
      %v843 = vunpack.c.l.b16 %v811
      %v844 = vunpack.c.l.b16 %v812
      %v845 = vunpack.c.l.b16 %v813
      %v846 = vunpack.c.l.b16 %v814
      %v847 = vunpack.c.l.b16 %v815
      %v848 = vunpack.c.l.b16 %v816
      %v849 = vunpack.c.l.b16 %v817
      %v850 = vunpack.c.l.b16 %v818
      %v851 = vunpack.c.l.b16 %v819
      %v852 = vunpack.c.l.b16 %v820
      %v853 = vunpack.c.l.b16 %v821
      %v854 = vpack.c.b16 %v839, %v838
      %v855 = vpack.c.b16 %v841, %v840
      %v856 = vpack.c.b16 %v843, %v842
      %v857 = vpack.c.b16 %v845, %v844
      %v858 = vpack.c.b16 %v847, %v846
      %v859 = vpack.c.b16 %v849, %v848
      %v860 = vpack.c.b16 %v851, %v850
      %v861 = vpack.c.b16 %v853, %v852
      %870 = vmatprep.subr.bf16.mxu0 0
      %871 = vmatpush1.bf16.msra.mxu0 %v854
      %872 = vmatprep.subr.bf16.mxu0 0
      %873 = vmatpush1.bf16.msra.mxu0 %v855
      %874 = vmatprep.subr.bf16.mxu0 0
      %875 = vmatpush1.bf16.msra.mxu0 %v856
      %876 = vmatprep.subr.bf16.mxu0 0
      %877 = vmatpush1.bf16.msra.mxu0 %v857
      %878 = vmatprep.subr.bf16.mxu0 0
      %879 = vmatpush1.bf16.msra.mxu0 %v858
      %880 = vmatprep.subr.bf16.mxu0 0
      %881 = vmatpush1.bf16.msra.mxu0 %v859
      %882 = vmatprep.subr.bf16.mxu0 0
      %883 = vmatpush1.bf16.msra.mxu0 %v860
      %884 = vmatprep.subr.bf16.mxu0 0
      %885 = vmatpush1.bf16.msra.mxu0 %v861
      %886 = vmatprep.subr.bf16.mxu0 0
      %887 = vmatpush1.bf16.msra.mxu0 0
      %888 = vmatprep.subr.bf16.mxu0 0
      %889 = vmatpush1.bf16.msra.mxu0 0
      %890 = vmatprep.subr.bf16.mxu0 0
      %891 = vmatpush1.bf16.msra.mxu0 0
      %892 = vmatprep.subr.bf16.mxu0 0
      %893 = vmatpush1.bf16.msra.mxu0 0
      %894 = vmatprep.subr.bf16.mxu0 0
      %895 = vmatpush1.bf16.msra.mxu0 0
      %896 = vmatprep.subr.bf16.mxu0 0
      %897 = vmatpush1.bf16.msra.mxu0 0
      %898 = vmatprep.subr.bf16.mxu0 0
      %899 = vmatpush1.bf16.msra.mxu0 0
      %900 = vmatprep.subr.bf16.mxu0 0
      %901 = vmatpush1.bf16.msra.mxu0 0
      %902 = vmatprep.mubr.bf16.mxu0 0
      %903 = vmatmul.mubr.bf16.gmra.mrb[0].mxu0 %v801
      %v904 = vpop.f32.mrb[0].mxu0
      %v905 = vadd.f32 0.0, %v904
      %v906 = vpop.f32.mrb[0].mxu0
      %v907 = vpop.f32.mrb[0].mxu0
      %v908 = vadd.f32 0.0, %v907
      %v909 = vpop.f32.mrb[0].mxu0
      %910 = vmatprep.mubr.bf16.mxu0 0
      %911 = vmatmul.mubr.bf16.gmra.mrb[0].mxu0 %v802
      %v912 = vpop.f32.mrb[0].mxu0
      %v913 = vadd.f32 0.0, %v912
      %v914 = vpop.f32.mrb[0].mxu0
      %v915 = vpop.f32.mrb[0].mxu0
      %v916 = vadd.f32 0.0, %v915
      %v917 = vpop.f32.mrb[0].mxu0
      %918 = vmatprep.mubr.bf16.mxu0 0
      %919 = vmatmul.mubr.bf16.gmra.mrb[0].mxu0 %v803
      %v920 = vpop.f32.mrb[0].mxu0
      %v921 = vadd.f32 0.0, %v920
      %v922 = vpop.f32.mrb[0].mxu0
      %v923 = vpop.f32.mrb[0].mxu0
      %v924 = vadd.f32 0.0, %v923
      %v925 = vpop.f32.mrb[0].mxu0
      %926 = vmatprep.mubr.bf16.mxu0 0
      %927 = vmatmul.mubr.bf16.gmra.mrb[0].mxu0 %v804
      %v928 = vpop.f32.mrb[0].mxu0
      %v929 = vadd.f32 0.0, %v928
      %v930 = vpop.f32.mrb[0].mxu0
      %v931 = vpop.f32.mrb[0].mxu0
      %v932 = vadd.f32 0.0, %v931
      %v933 = vpop.f32.mrb[0].mxu0
      %934 = vdwg.mxu0
      %v935 = vadd.f32 %v785, %v905
      %v936 = vadd.f32 %v786, %v908
      %v937 = vadd.f32 %v787, %v913
      %v938 = vadd.f32 %v788, %v916
      %v939 = vadd.f32 %v789, %v921
      %v940 = vadd.f32 %v790, %v924
      %v941 = vadd.f32 %v791, %v929
      %v942 = vadd.f32 %v792, %v932
      %v943 = vld [vmem:[%s350 + $0x1] sm:$0xff]
      %v944 = vld [vmem:[%s350 + $0x11] sm:$0xff]
      %v945 = vld [vmem:[%s350 + $0x21] sm:$0xff]
      %v946 = vld [vmem:[%s350 + $0x31] sm:$0xff]
      %v947 = vld [vmem:[%s350 + $0x41] sm:$0xff]
      %v948 = vld [vmem:[%s350 + $0x51] sm:$0xff]
      %v949 = vld [vmem:[%s350 + $0x61] sm:$0xff]
      %v950 = vld [vmem:[%s350 + $0x71] sm:$0xff]
      %v951 = vpack.c.bf16 %v944, %v943
      %v952 = vpack.c.bf16 %v946, %v945
      %v953 = vpack.c.bf16 %v948, %v947
      %v954 = vpack.c.bf16 %v950, %v949
      %s955 = scalar_lea.vmem %s1, 256
      %v956 = vld [vmem:[%s955] sm:$0xf]
      %v957 = vld [vmem:[%s955 + $0x4] sm:$0xf]
      %v958 = vld [vmem:[%s955 + $0x8] sm:$0xf]
      %v959 = vld [vmem:[%s955 + $0xc] sm:$0xf]
      %v960 = vld [vmem:[%s955 + $0x10] sm:$0xf]
      %v961 = vld [vmem:[%s955 + $0x14] sm:$0xf]
      %v962 = vld [vmem:[%s955 + $0x18] sm:$0xf]
      %v963 = vld [vmem:[%s955 + $0x1c] sm:$0xf]
      %v964 = vld [vmem:[%s955 + $0x20] sm:$0xf]
      %v965 = vld [vmem:[%s955 + $0x24] sm:$0xf]
      %v966 = vld [vmem:[%s955 + $0x28] sm:$0xf]
      %v967 = vld [vmem:[%s955 + $0x2c] sm:$0xf]
      %v968 = vld [vmem:[%s955 + $0x30] sm:$0xf]
      %v969 = vld [vmem:[%s955 + $0x34] sm:$0xf]
      %v970 = vld [vmem:[%s955 + $0x38] sm:$0xf]
      %v971 = vld [vmem:[%s955 + $0x3c] sm:$0xf]
      %v988 = vunpack.c.l.b16 %v956
      %v989 = vunpack.c.l.b16 %v957
      %v990 = vunpack.c.l.b16 %v958
      %v991 = vunpack.c.l.b16 %v959
      %v992 = vunpack.c.l.b16 %v960
      %v993 = vunpack.c.l.b16 %v961
      %v994 = vunpack.c.l.b16 %v962
      %v995 = vunpack.c.l.b16 %v963
      %v996 = vunpack.c.l.b16 %v964
      %v997 = vunpack.c.l.b16 %v965
      %v998 = vunpack.c.l.b16 %v966
      %v999 = vunpack.c.l.b16 %v967
      %v1000 = vunpack.c.l.b16 %v968
      %v1001 = vunpack.c.l.b16 %v969
      %v1002 = vunpack.c.l.b16 %v970
      %v1003 = vunpack.c.l.b16 %v971
      %v1004 = vpack.c.b16 %v989, %v988
      %v1005 = vpack.c.b16 %v991, %v990
      %v1006 = vpack.c.b16 %v993, %v992
      %v1007 = vpack.c.b16 %v995, %v994
      %v1008 = vpack.c.b16 %v997, %v996
      %v1009 = vpack.c.b16 %v999, %v998
      %v1010 = vpack.c.b16 %v1001, %v1000
      %v1011 = vpack.c.b16 %v1003, %v1002
      %1020 = vmatprep.subr.bf16.mxu0 0
      %1021 = vmatpush1.bf16.msra.mxu0 %v1004
      %1022 = vmatprep.subr.bf16.mxu0 0
      %1023 = vmatpush1.bf16.msra.mxu0 %v1005
      %1024 = vmatprep.subr.bf16.mxu0 0
      %1025 = vmatpush1.bf16.msra.mxu0 %v1006
      %1026 = vmatprep.subr.bf16.mxu0 0
      %1027 = vmatpush1.bf16.msra.mxu0 %v1007
      %1028 = vmatprep.subr.bf16.mxu0 0
      %1029 = vmatpush1.bf16.msra.mxu0 %v1008
      %1030 = vmatprep.subr.bf16.mxu0 0
      %1031 = vmatpush1.bf16.msra.mxu0 %v1009
      %1032 = vmatprep.subr.bf16.mxu0 0
      %1033 = vmatpush1.bf16.msra.mxu0 %v1010
      %1034 = vmatprep.subr.bf16.mxu0 0
      %1035 = vmatpush1.bf16.msra.mxu0 %v1011
      %1036 = vmatprep.subr.bf16.mxu0 0
      %1037 = vmatpush1.bf16.msra.mxu0 0
      %1038 = vmatprep.subr.bf16.mxu0 0
      %1039 = vmatpush1.bf16.msra.mxu0 0
      %1040 = vmatprep.subr.bf16.mxu0 0
      %1041 = vmatpush1.bf16.msra.mxu0 0
      %1042 = vmatprep.subr.bf16.mxu0 0
      %1043 = vmatpush1.bf16.msra.mxu0 0
      %1044 = vmatprep.subr.bf16.mxu0 0
      %1045 = vmatpush1.bf16.msra.mxu0 0
      %1046 = vmatprep.subr.bf16.mxu0 0
      %1047 = vmatpush1.bf16.msra.mxu0 0
      %1048 = vmatprep.subr.bf16.mxu0 0
      %1049 = vmatpush1.bf16.msra.mxu0 0
      %1050 = vmatprep.subr.bf16.mxu0 0
      %1051 = vmatpush1.bf16.msra.mxu0 0
      %1052 = vmatprep.mubr.bf16.mxu0 0
      %1053 = vmatmul.mubr.bf16.gmra.mrb[0].mxu0 %v951
      %v1054 = vpop.f32.mrb[0].mxu0
      %v1055 = vadd.f32 0.0, %v1054
      %v1056 = vpop.f32.mrb[0].mxu0
      %v1057 = vpop.f32.mrb[0].mxu0
      %v1058 = vadd.f32 0.0, %v1057
      %v1059 = vpop.f32.mrb[0].mxu0
      %1060 = vmatprep.mubr.bf16.mxu0 0
      %1061 = vmatmul.mubr.bf16.gmra.mrb[0].mxu0 %v952
      %v1062 = vpop.f32.mrb[0].mxu0
      %v1063 = vadd.f32 0.0, %v1062
      %v1064 = vpop.f32.mrb[0].mxu0
      %v1065 = vpop.f32.mrb[0].mxu0
      %v1066 = vadd.f32 0.0, %v1065
      %v1067 = vpop.f32.mrb[0].mxu0
      %1068 = vmatprep.mubr.bf16.mxu0 0
      %1069 = vmatmul.mubr.bf16.gmra.mrb[0].mxu0 %v953
      %v1070 = vpop.f32.mrb[0].mxu0
      %v1071 = vadd.f32 0.0, %v1070
      %v1072 = vpop.f32.mrb[0].mxu0
      %v1073 = vpop.f32.mrb[0].mxu0
      %v1074 = vadd.f32 0.0, %v1073
      %v1075 = vpop.f32.mrb[0].mxu0
      %1076 = vmatprep.mubr.bf16.mxu0 0
      %1077 = vmatmul.mubr.bf16.gmra.mrb[0].mxu0 %v954
      %v1078 = vpop.f32.mrb[0].mxu0
      %v1079 = vadd.f32 0.0, %v1078
      %v1080 = vpop.f32.mrb[0].mxu0
      %v1081 = vpop.f32.mrb[0].mxu0
      %v1082 = vadd.f32 0.0, %v1081
      %v1083 = vpop.f32.mrb[0].mxu0
      %1084 = vdwg.mxu0
      %v1085 = vadd.f32 %v935, %v1055
      %v1086 = vadd.f32 %v936, %v1058
      %v1087 = vadd.f32 %v937, %v1063
      %v1088 = vadd.f32 %v938, %v1066
      %v1089 = vadd.f32 %v939, %v1071
      %v1090 = vadd.f32 %v940, %v1074
      %v1091 = vadd.f32 %v941, %v1079
      %v1092 = vadd.f32 %v942, %v1082
      %v1093 = vld [vmem:[%s350 + $0x2] sm:$0xff]
      %v1094 = vld [vmem:[%s350 + $0x12] sm:$0xff]
      %v1095 = vld [vmem:[%s350 + $0x22] sm:$0xff]
      %v1096 = vld [vmem:[%s350 + $0x32] sm:$0xff]
      %v1097 = vld [vmem:[%s350 + $0x42] sm:$0xff]
      %v1098 = vld [vmem:[%s350 + $0x52] sm:$0xff]
      %v1099 = vld [vmem:[%s350 + $0x62] sm:$0xff]
      %v1100 = vld [vmem:[%s350 + $0x72] sm:$0xff]
      %v1101 = vpack.c.bf16 %v1094, %v1093
      %v1102 = vpack.c.bf16 %v1096, %v1095
      %v1103 = vpack.c.bf16 %v1098, %v1097
      %v1104 = vpack.c.bf16 %v1100, %v1099
      %s1105 = scalar_lea.vmem %s1, 320
      %v1106 = vld [vmem:[%s1105] sm:$0xf]
      %v1107 = vld [vmem:[%s1105 + $0x4] sm:$0xf]
      %v1108 = vld [vmem:[%s1105 + $0x8] sm:$0xf]
      %v1109 = vld [vmem:[%s1105 + $0xc] sm:$0xf]
      %v1110 = vld [vmem:[%s1105 + $0x10] sm:$0xf]
      %v1111 = vld [vmem:[%s1105 + $0x14] sm:$0xf]
      %v1112 = vld [vmem:[%s1105 + $0x18] sm:$0xf]
      %v1113 = vld [vmem:[%s1105 + $0x1c] sm:$0xf]
      %v1114 = vld [vmem:[%s1105 + $0x20] sm:$0xf]
      %v1115 = vld [vmem:[%s1105 + $0x24] sm:$0xf]
      %v1116 = vld [vmem:[%s1105 + $0x28] sm:$0xf]
      %v1117 = vld [vmem:[%s1105 + $0x2c] sm:$0xf]
      %v1118 = vld [vmem:[%s1105 + $0x30] sm:$0xf]
      %v1119 = vld [vmem:[%s1105 + $0x34] sm:$0xf]
      %v1120 = vld [vmem:[%s1105 + $0x38] sm:$0xf]
      %v1121 = vld [vmem:[%s1105 + $0x3c] sm:$0xf]
      %v1138 = vunpack.c.l.b16 %v1106
      %v1139 = vunpack.c.l.b16 %v1107
      %v1140 = vunpack.c.l.b16 %v1108
      %v1141 = vunpack.c.l.b16 %v1109
      %v1142 = vunpack.c.l.b16 %v1110
      %v1143 = vunpack.c.l.b16 %v1111
      %v1144 = vunpack.c.l.b16 %v1112
      %v1145 = vunpack.c.l.b16 %v1113
      %v1146 = vunpack.c.l.b16 %v1114
      %v1147 = vunpack.c.l.b16 %v1115
      %v1148 = vunpack.c.l.b16 %v1116
      %v1149 = vunpack.c.l.b16 %v1117
      %v1150 = vunpack.c.l.b16 %v1118
      %v1151 = vunpack.c.l.b16 %v1119
      %v1152 = vunpack.c.l.b16 %v1120
      %v1153 = vunpack.c.l.b16 %v1121
      %v1154 = vpack.c.b16 %v1139, %v1138
      %v1155 = vpack.c.b16 %v1141, %v1140
      %v1156 = vpack.c.b16 %v1143, %v1142
      %v1157 = vpack.c.b16 %v1145, %v1144
      %v1158 = vpack.c.b16 %v1147, %v1146
      %v1159 = vpack.c.b16 %v1149, %v1148
      %v1160 = vpack.c.b16 %v1151, %v1150
      %v1161 = vpack.c.b16 %v1153, %v1152
      %1170 = vmatprep.subr.bf16.mxu0 0
      %1171 = vmatpush1.bf16.msra.mxu0 %v1154
      %1172 = vmatprep.subr.bf16.mxu0 0
      %1173 = vmatpush1.bf16.msra.mxu0 %v1155
      %1174 = vmatprep.subr.bf16.mxu0 0
      %1175 = vmatpush1.bf16.msra.mxu0 %v1156
      %1176 = vmatprep.subr.bf16.mxu0 0
      %1177 = vmatpush1.bf16.msra.mxu0 %v1157
      %1178 = vmatprep.subr.bf16.mxu0 0
      %1179 = vmatpush1.bf16.msra.mxu0 %v1158
      %1180 = vmatprep.subr.bf16.mxu0 0
      %1181 = vmatpush1.bf16.msra.mxu0 %v1159
      %1182 = vmatprep.subr.bf16.mxu0 0
      %1183 = vmatpush1.bf16.msra.mxu0 %v1160
      %1184 = vmatprep.subr.bf16.mxu0 0
      %1185 = vmatpush1.bf16.msra.mxu0 %v1161
      %1186 = vmatprep.subr.bf16.mxu0 0
      %1187 = vmatpush1.bf16.msra.mxu0 0
      %1188 = vmatprep.subr.bf16.mxu0 0
      %1189 = vmatpush1.bf16.msra.mxu0 0
      %1190 = vmatprep.subr.bf16.mxu0 0
      %1191 = vmatpush1.bf16.msra.mxu0 0
      %1192 = vmatprep.subr.bf16.mxu0 0
      %1193 = vmatpush1.bf16.msra.mxu0 0
      %1194 = vmatprep.subr.bf16.mxu0 0
      %1195 = vmatpush1.bf16.msra.mxu0 0
      %1196 = vmatprep.subr.bf16.mxu0 0
      %1197 = vmatpush1.bf16.msra.mxu0 0
      %1198 = vmatprep.subr.bf16.mxu0 0
      %1199 = vmatpush1.bf16.msra.mxu0 0
      %1200 = vmatprep.subr.bf16.mxu0 0
      %1201 = vmatpush1.bf16.msra.mxu0 0
      %1202 = vmatprep.mubr.bf16.mxu0 0
      %1203 = vmatmul.mubr.bf16.gmra.mrb[0].mxu0 %v1101
      %v1204 = vpop.f32.mrb[0].mxu0
      %v1205 = vadd.f32 0.0, %v1204
      %v1206 = vpop.f32.mrb[0].mxu0
      %v1207 = vpop.f32.mrb[0].mxu0
      %v1208 = vadd.f32 0.0, %v1207
      %v1209 = vpop.f32.mrb[0].mxu0
      %1210 = vmatprep.mubr.bf16.mxu0 0
      %1211 = vmatmul.mubr.bf16.gmra.mrb[0].mxu0 %v1102
      %v1212 = vpop.f32.mrb[0].mxu0
      %v1213 = vadd.f32 0.0, %v1212
      %v1214 = vpop.f32.mrb[0].mxu0
      %v1215 = vpop.f32.mrb[0].mxu0
      %v1216 = vadd.f32 0.0, %v1215
      %v1217 = vpop.f32.mrb[0].mxu0
      %1218 = vmatprep.mubr.bf16.mxu0 0
      %1219 = vmatmul.mubr.bf16.gmra.mrb[0].mxu0 %v1103
      %v1220 = vpop.f32.mrb[0].mxu0
      %v1221 = vadd.f32 0.0, %v1220
      %v1222 = vpop.f32.mrb[0].mxu0
      %v1223 = vpop.f32.mrb[0].mxu0
      %v1224 = vadd.f32 0.0, %v1223
      %v1225 = vpop.f32.mrb[0].mxu0
      %1226 = vmatprep.mubr.bf16.mxu0 0
      %1227 = vmatmul.mubr.bf16.gmra.mrb[0].mxu0 %v1104
      %v1228 = vpop.f32.mrb[0].mxu0
      %v1229 = vadd.f32 0.0, %v1228
      %v1230 = vpop.f32.mrb[0].mxu0
      %v1231 = vpop.f32.mrb[0].mxu0
      %v1232 = vadd.f32 0.0, %v1231
      %v1233 = vpop.f32.mrb[0].mxu0
      %1234 = vdwg.mxu0
      %v1235 = vadd.f32 %v1085, %v1205
      %v1236 = vadd.f32 %v1086, %v1208
      %v1237 = vadd.f32 %v1087, %v1213
      %v1238 = vadd.f32 %v1088, %v1216
      %v1239 = vadd.f32 %v1089, %v1221
      %v1240 = vadd.f32 %v1090, %v1224
      %v1241 = vadd.f32 %v1091, %v1229
      %v1242 = vadd.f32 %v1092, %v1232
      %s1243 = scalar_lea.vmem [#allocation2], 32
      %v1244 = vld [vmem:[%s1243] sm:$0xff]
      %v1245 = vld [vmem:[%s1243 + $0x10] sm:$0xff]
      %v1246 = vld [vmem:[%s1243 + $0x20] sm:$0xff]
      %v1247 = vld [vmem:[%s1243 + $0x30] sm:$0xff]
      %v1248 = vld [vmem:[%s1243 + $0x40] sm:$0xff]
      %v1249 = vld [vmem:[%s1243 + $0x50] sm:$0xff]
      %v1250 = vld [vmem:[%s1243 + $0x60] sm:$0xff]
      %v1251 = vld [vmem:[%s1243 + $0x70] sm:$0xff]
      %v1252 = vpack.c.bf16 %v1245, %v1244
      %v1253 = vpack.c.bf16 %v1247, %v1246
      %v1254 = vpack.c.bf16 %v1249, %v1248
      %v1255 = vpack.c.bf16 %v1251, %v1250
      %s1256 = scalar_lea.vmem %s1, 384
      %v1257 = vld [vmem:[%s1256] sm:$0xf]
      %v1258 = vld [vmem:[%s1256 + $0x4] sm:$0xf]
      %v1259 = vld [vmem:[%s1256 + $0x8] sm:$0xf]
      %v1260 = vld [vmem:[%s1256 + $0xc] sm:$0xf]
      %v1261 = vld [vmem:[%s1256 + $0x10] sm:$0xf]
      %v1262 = vld [vmem:[%s1256 + $0x14] sm:$0xf]
      %v1263 = vld [vmem:[%s1256 + $0x18] sm:$0xf]
      %v1264 = vld [vmem:[%s1256 + $0x1c] sm:$0xf]
      %v1265 = vld [vmem:[%s1256 + $0x20] sm:$0xf]
      %v1266 = vld [vmem:[%s1256 + $0x24] sm:$0xf]
      %v1267 = vld [vmem:[%s1256 + $0x28] sm:$0xf]
      %v1268 = vld [vmem:[%s1256 + $0x2c] sm:$0xf]
      %v1269 = vld [vmem:[%s1256 + $0x30] sm:$0xf]
      %v1270 = vld [vmem:[%s1256 + $0x34] sm:$0xf]
      %v1271 = vld [vmem:[%s1256 + $0x38] sm:$0xf]
      %v1272 = vld [vmem:[%s1256 + $0x3c] sm:$0xf]
      %v1289 = vunpack.c.l.b16 %v1257
      %v1290 = vunpack.c.l.b16 %v1258
      %v1291 = vunpack.c.l.b16 %v1259
      %v1292 = vunpack.c.l.b16 %v1260
      %v1293 = vunpack.c.l.b16 %v1261
      %v1294 = vunpack.c.l.b16 %v1262
      %v1295 = vunpack.c.l.b16 %v1263
      %v1296 = vunpack.c.l.b16 %v1264
      %v1297 = vunpack.c.l.b16 %v1265
      %v1298 = vunpack.c.l.b16 %v1266
      %v1299 = vunpack.c.l.b16 %v1267
      %v1300 = vunpack.c.l.b16 %v1268
      %v1301 = vunpack.c.l.b16 %v1269
      %v1302 = vunpack.c.l.b16 %v1270
      %v1303 = vunpack.c.l.b16 %v1271
      %v1304 = vunpack.c.l.b16 %v1272
      %v1305 = vpack.c.b16 %v1290, %v1289
      %v1306 = vpack.c.b16 %v1292, %v1291
      %v1307 = vpack.c.b16 %v1294, %v1293
      %v1308 = vpack.c.b16 %v1296, %v1295
      %v1309 = vpack.c.b16 %v1298, %v1297
      %v1310 = vpack.c.b16 %v1300, %v1299
      %v1311 = vpack.c.b16 %v1302, %v1301
      %v1312 = vpack.c.b16 %v1304, %v1303
      %1321 = vmatprep.subr.bf16.mxu0 0
      %1322 = vmatpush1.bf16.msra.mxu0 %v1305
      %1323 = vmatprep.subr.bf16.mxu0 0
      %1324 = vmatpush1.bf16.msra.mxu0 %v1306
      %1325 = vmatprep.subr.bf16.mxu0 0
      %1326 = vmatpush1.bf16.msra.mxu0 %v1307
      %1327 = vmatprep.subr.bf16.mxu0 0
      %1328 = vmatpush1.bf16.msra.mxu0 %v1308
      %1329 = vmatprep.subr.bf16.mxu0 0
      %1330 = vmatpush1.bf16.msra.mxu0 %v1309
      %1331 = vmatprep.subr.bf16.mxu0 0
      %1332 = vmatpush1.bf16.msra.mxu0 %v1310
      %1333 = vmatprep.subr.bf16.mxu0 0
      %1334 = vmatpush1.bf16.msra.mxu0 %v1311
      %1335 = vmatprep.subr.bf16.mxu0 0
      %1336 = vmatpush1.bf16.msra.mxu0 %v1312
      %1337 = vmatprep.subr.bf16.mxu0 0
      %1338 = vmatpush1.bf16.msra.mxu0 0
      %1339 = vmatprep.subr.bf16.mxu0 0
      %1340 = vmatpush1.bf16.msra.mxu0 0
      %1341 = vmatprep.subr.bf16.mxu0 0
      %1342 = vmatpush1.bf16.msra.mxu0 0
      %1343 = vmatprep.subr.bf16.mxu0 0
      %1344 = vmatpush1.bf16.msra.mxu0 0
      %1345 = vmatprep.subr.bf16.mxu0 0
      %1346 = vmatpush1.bf16.msra.mxu0 0
      %1347 = vmatprep.subr.bf16.mxu0 0
      %1348 = vmatpush1.bf16.msra.mxu0 0
      %1349 = vmatprep.subr.bf16.mxu0 0
      %1350 = vmatpush1.bf16.msra.mxu0 0
      %1351 = vmatprep.subr.bf16.mxu0 0
      %1352 = vmatpush1.bf16.msra.mxu0 0
      %1353 = vmatprep.mubr.bf16.mxu0 0
      %1354 = vmatmul.mubr.bf16.gmra.mrb[0].mxu0 %v1252
      %v1355 = vpop.f32.mrb[0].mxu0
      %v1356 = vadd.f32 0.0, %v1355
      %v1357 = vpop.f32.mrb[0].mxu0
      %v1358 = vpop.f32.mrb[0].mxu0
      %v1359 = vadd.f32 0.0, %v1358
      %v1360 = vpop.f32.mrb[0].mxu0
      %1361 = vmatprep.mubr.bf16.mxu0 0
      %1362 = vmatmul.mubr.bf16.gmra.mrb[0].mxu0 %v1253
      %v1363 = vpop.f32.mrb[0].mxu0
      %v1364 = vadd.f32 0.0, %v1363
      %v1365 = vpop.f32.mrb[0].mxu0
      %v1366 = vpop.f32.mrb[0].mxu0
      %v1367 = vadd.f32 0.0, %v1366
      %v1368 = vpop.f32.mrb[0].mxu0
      %1369 = vmatprep.mubr.bf16.mxu0 0
      %1370 = vmatmul.mubr.bf16.gmra.mrb[0].mxu0 %v1254
      %v1371 = vpop.f32.mrb[0].mxu0
      %v1372 = vadd.f32 0.0, %v1371
      %v1373 = vpop.f32.mrb[0].mxu0
      %v1374 = vpop.f32.mrb[0].mxu0
      %v1375 = vadd.f32 0.0, %v1374
      %v1376 = vpop.f32.mrb[0].mxu0
      %1377 = vmatprep.mubr.bf16.mxu0 0
      %1378 = vmatmul.mubr.bf16.gmra.mrb[0].mxu0 %v1255
      %v1379 = vpop.f32.mrb[0].mxu0
      %v1380 = vadd.f32 0.0, %v1379
      %v1381 = vpop.f32.mrb[0].mxu0
      %v1382 = vpop.f32.mrb[0].mxu0
      %v1383 = vadd.f32 0.0, %v1382
      %v1384 = vpop.f32.mrb[0].mxu0
      %1385 = vdwg.mxu0
      %v1386 = vadd.f32 %v1235, %v1356
      %v1387 = vadd.f32 %v1236, %v1359
      %v1388 = vadd.f32 %v1237, %v1364
      %v1389 = vadd.f32 %v1238, %v1367
      %v1390 = vadd.f32 %v1239, %v1372
      %v1391 = vadd.f32 %v1240, %v1375
      %v1392 = vadd.f32 %v1241, %v1380
      %v1393 = vadd.f32 %v1242, %v1383
      %v1394 = vld [vmem:[%s1243 + $0x1] sm:$0xff]
      %v1395 = vld [vmem:[%s1243 + $0x11] sm:$0xff]
      %v1396 = vld [vmem:[%s1243 + $0x21] sm:$0xff]
      %v1397 = vld [vmem:[%s1243 + $0x31] sm:$0xff]
      %v1398 = vld [vmem:[%s1243 + $0x41] sm:$0xff]
      %v1399 = vld [vmem:[%s1243 + $0x51] sm:$0xff]
      %v1400 = vld [vmem:[%s1243 + $0x61] sm:$0xff]
      %v1401 = vld [vmem:[%s1243 + $0x71] sm:$0xff]
      %v1402 = vpack.c.bf16 %v1395, %v1394
      %v1403 = vpack.c.bf16 %v1397, %v1396
      %v1404 = vpack.c.bf16 %v1399, %v1398
      %v1405 = vpack.c.bf16 %v1401, %v1400
      %s1406 = scalar_lea.vmem %s1, 448
      %v1407 = vld [vmem:[%s1406] sm:$0xf]
      %v1408 = vld [vmem:[%s1406 + $0x4] sm:$0xf]
      %v1409 = vld [vmem:[%s1406 + $0x8] sm:$0xf]
      %v1410 = vld [vmem:[%s1406 + $0xc] sm:$0xf]
      %v1411 = vld [vmem:[%s1406 + $0x10] sm:$0xf]
      %v1412 = vld [vmem:[%s1406 + $0x14] sm:$0xf]
      %v1413 = vld [vmem:[%s1406 + $0x18] sm:$0xf]
      %v1414 = vld [vmem:[%s1406 + $0x1c] sm:$0xf]
      %v1415 = vld [vmem:[%s1406 + $0x20] sm:$0xf]
      %v1416 = vld [vmem:[%s1406 + $0x24] sm:$0xf]
      %v1417 = vld [vmem:[%s1406 + $0x28] sm:$0xf]
      %v1418 = vld [vmem:[%s1406 + $0x2c] sm:$0xf]
      %v1419 = vld [vmem:[%s1406 + $0x30] sm:$0xf]
      %v1420 = vld [vmem:[%s1406 + $0x34] sm:$0xf]
      %v1421 = vld [vmem:[%s1406 + $0x38] sm:$0xf]
      %v1422 = vld [vmem:[%s1406 + $0x3c] sm:$0xf]
      %v1439 = vunpack.c.l.b16 %v1407
      %v1440 = vunpack.c.l.b16 %v1408
      %v1441 = vunpack.c.l.b16 %v1409
      %v1442 = vunpack.c.l.b16 %v1410
      %v1443 = vunpack.c.l.b16 %v1411
      %v1444 = vunpack.c.l.b16 %v1412
      %v1445 = vunpack.c.l.b16 %v1413
      %v1446 = vunpack.c.l.b16 %v1414
      %v1447 = vunpack.c.l.b16 %v1415
      %v1448 = vunpack.c.l.b16 %v1416
      %v1449 = vunpack.c.l.b16 %v1417
      %v1450 = vunpack.c.l.b16 %v1418
      %v1451 = vunpack.c.l.b16 %v1419
      %v1452 = vunpack.c.l.b16 %v1420
      %v1453 = vunpack.c.l.b16 %v1421
      %v1454 = vunpack.c.l.b16 %v1422
      %v1455 = vpack.c.b16 %v1440, %v1439
      %v1456 = vpack.c.b16 %v1442, %v1441
      %v1457 = vpack.c.b16 %v1444, %v1443
      %v1458 = vpack.c.b16 %v1446, %v1445
      %v1459 = vpack.c.b16 %v1448, %v1447
      %v1460 = vpack.c.b16 %v1450, %v1449
      %v1461 = vpack.c.b16 %v1452, %v1451
      %v1462 = vpack.c.b16 %v1454, %v1453
      %1471 = vmatprep.subr.bf16.mxu0 0
      %1472 = vmatpush1.bf16.msra.mxu0 %v1455
      %1473 = vmatprep.subr.bf16.mxu0 0
      %1474 = vmatpush1.bf16.msra.mxu0 %v1456
      %1475 = vmatprep.subr.bf16.mxu0 0
      %1476 = vmatpush1.bf16.msra.mxu0 %v1457
      %1477 = vmatprep.subr.bf16.mxu0 0
      %1478 = vmatpush1.bf16.msra.mxu0 %v1458
      %1479 = vmatprep.subr.bf16.mxu0 0
      %1480 = vmatpush1.bf16.msra.mxu0 %v1459
      %1481 = vmatprep.subr.bf16.mxu0 0
      %1482 = vmatpush1.bf16.msra.mxu0 %v1460
      %1483 = vmatprep.subr.bf16.mxu0 0
      %1484 = vmatpush1.bf16.msra.mxu0 %v1461
      %1485 = vmatprep.subr.bf16.mxu0 0
      %1486 = vmatpush1.bf16.msra.mxu0 %v1462
      %1487 = vmatprep.subr.bf16.mxu0 0
      %1488 = vmatpush1.bf16.msra.mxu0 0
      %1489 = vmatprep.subr.bf16.mxu0 0
      %1490 = vmatpush1.bf16.msra.mxu0 0
      %1491 = vmatprep.subr.bf16.mxu0 0
      %1492 = vmatpush1.bf16.msra.mxu0 0
      %1493 = vmatprep.subr.bf16.mxu0 0
      %1494 = vmatpush1.bf16.msra.mxu0 0
      %1495 = vmatprep.subr.bf16.mxu0 0
      %1496 = vmatpush1.bf16.msra.mxu0 0
      %1497 = vmatprep.subr.bf16.mxu0 0
      %1498 = vmatpush1.bf16.msra.mxu0 0
      %1499 = vmatprep.subr.bf16.mxu0 0
      %1500 = vmatpush1.bf16.msra.mxu0 0
      %1501 = vmatprep.subr.bf16.mxu0 0
      %1502 = vmatpush1.bf16.msra.mxu0 0
      %1503 = vmatprep.mubr.bf16.mxu0 0
      %1504 = vmatmul.mubr.bf16.gmra.mrb[0].mxu0 %v1402
      %v1505 = vpop.f32.mrb[0].mxu0
      %v1506 = vadd.f32 0.0, %v1505
      %v1507 = vpop.f32.mrb[0].mxu0
      %v1508 = vpop.f32.mrb[0].mxu0
      %v1509 = vadd.f32 0.0, %v1508
      %v1510 = vpop.f32.mrb[0].mxu0
      %1511 = vmatprep.mubr.bf16.mxu0 0
      %1512 = vmatmul.mubr.bf16.gmra.mrb[0].mxu0 %v1403
      %v1513 = vpop.f32.mrb[0].mxu0
      %v1514 = vadd.f32 0.0, %v1513
      %v1515 = vpop.f32.mrb[0].mxu0
      %v1516 = vpop.f32.mrb[0].mxu0
      %v1517 = vadd.f32 0.0, %v1516
      %v1518 = vpop.f32.mrb[0].mxu0
      %1519 = vmatprep.mubr.bf16.mxu0 0
      %1520 = vmatmul.mubr.bf16.gmra.mrb[0].mxu0 %v1404
      %v1521 = vpop.f32.mrb[0].mxu0
      %v1522 = vadd.f32 0.0, %v1521
      %v1523 = vpop.f32.mrb[0].mxu0
      %v1524 = vpop.f32.mrb[0].mxu0
      %v1525 = vadd.f32 0.0, %v1524
      %v1526 = vpop.f32.mrb[0].mxu0
      %1527 = vmatprep.mubr.bf16.mxu0 0
      %1528 = vmatmul.mubr.bf16.gmra.mrb[0].mxu0 %v1405
      %v1529 = vpop.f32.mrb[0].mxu0
      %v1530 = vadd.f32 0.0, %v1529
      %v1531 = vpop.f32.mrb[0].mxu0
      %v1532 = vpop.f32.mrb[0].mxu0
      %v1533 = vadd.f32 0.0, %v1532
      %v1534 = vpop.f32.mrb[0].mxu0
      %1535 = vdwg.mxu0
      %v1536 = vadd.f32 %v1386, %v1506
      %v1537 = vadd.f32 %v1387, %v1509
      %v1538 = vadd.f32 %v1388, %v1514
      %v1539 = vadd.f32 %v1389, %v1517
      %v1540 = vadd.f32 %v1390, %v1522
      %v1541 = vadd.f32 %v1391, %v1525
      %v1542 = vadd.f32 %v1392, %v1530
      %v1543 = vadd.f32 %v1393, %v1533
      %v1544 = vld [vmem:[%s1243 + $0x2] sm:$0xff]
      %v1545 = vld [vmem:[%s1243 + $0x12] sm:$0xff]
      %v1546 = vld [vmem:[%s1243 + $0x22] sm:$0xff]
      %v1547 = vld [vmem:[%s1243 + $0x32] sm:$0xff]
      %v1548 = vld [vmem:[%s1243 + $0x42] sm:$0xff]
      %v1549 = vld [vmem:[%s1243 + $0x52] sm:$0xff]
      %v1550 = vld [vmem:[%s1243 + $0x62] sm:$0xff]
      %v1551 = vld [vmem:[%s1243 + $0x72] sm:$0xff]
      %v1552 = vpack.c.bf16 %v1545, %v1544
      %v1553 = vpack.c.bf16 %v1547, %v1546
      %v1554 = vpack.c.bf16 %v1549, %v1548
      %v1555 = vpack.c.bf16 %v1551, %v1550
      %s1556 = scalar_lea.vmem %s1, 512
      %v1557 = vld [vmem:[%s1556] sm:$0xf]
      %v1558 = vld [vmem:[%s1556 + $0x4] sm:$0xf]
      %v1559 = vld [vmem:[%s1556 + $0x8] sm:$0xf]
      %v1560 = vld [vmem:[%s1556 + $0xc] sm:$0xf]
      %v1561 = vld [vmem:[%s1556 + $0x10] sm:$0xf]
      %v1562 = vld [vmem:[%s1556 + $0x14] sm:$0xf]
      %v1563 = vld [vmem:[%s1556 + $0x18] sm:$0xf]
      %v1564 = vld [vmem:[%s1556 + $0x1c] sm:$0xf]
      %v1565 = vld [vmem:[%s1556 + $0x20] sm:$0xf]
      %v1566 = vld [vmem:[%s1556 + $0x24] sm:$0xf]
      %v1567 = vld [vmem:[%s1556 + $0x28] sm:$0xf]
      %v1568 = vld [vmem:[%s1556 + $0x2c] sm:$0xf]
      %v1569 = vld [vmem:[%s1556 + $0x30] sm:$0xf]
      %v1570 = vld [vmem:[%s1556 + $0x34] sm:$0xf]
      %v1571 = vld [vmem:[%s1556 + $0x38] sm:$0xf]
      %v1572 = vld [vmem:[%s1556 + $0x3c] sm:$0xf]
      %v1589 = vunpack.c.l.b16 %v1557
      %v1590 = vunpack.c.l.b16 %v1558
      %v1591 = vunpack.c.l.b16 %v1559
      %v1592 = vunpack.c.l.b16 %v1560
      %v1593 = vunpack.c.l.b16 %v1561
      %v1594 = vunpack.c.l.b16 %v1562
      %v1595 = vunpack.c.l.b16 %v1563
      %v1596 = vunpack.c.l.b16 %v1564
      %v1597 = vunpack.c.l.b16 %v1565
      %v1598 = vunpack.c.l.b16 %v1566
      %v1599 = vunpack.c.l.b16 %v1567
      %v1600 = vunpack.c.l.b16 %v1568
      %v1601 = vunpack.c.l.b16 %v1569
      %v1602 = vunpack.c.l.b16 %v1570
      %v1603 = vunpack.c.l.b16 %v1571
      %v1604 = vunpack.c.l.b16 %v1572
      %v1605 = vpack.c.b16 %v1590, %v1589
      %v1606 = vpack.c.b16 %v1592, %v1591
      %v1607 = vpack.c.b16 %v1594, %v1593
      %v1608 = vpack.c.b16 %v1596, %v1595
      %v1609 = vpack.c.b16 %v1598, %v1597
      %v1610 = vpack.c.b16 %v1600, %v1599
      %v1611 = vpack.c.b16 %v1602, %v1601
      %v1612 = vpack.c.b16 %v1604, %v1603
      %1621 = vmatprep.subr.bf16.mxu0 0
      %1622 = vmatpush1.bf16.msra.mxu0 %v1605
      %1623 = vmatprep.subr.bf16.mxu0 0
      %1624 = vmatpush1.bf16.msra.mxu0 %v1606
      %1625 = vmatprep.subr.bf16.mxu0 0
      %1626 = vmatpush1.bf16.msra.mxu0 %v1607
      %1627 = vmatprep.subr.bf16.mxu0 0
      %1628 = vmatpush1.bf16.msra.mxu0 %v1608
      %1629 = vmatprep.subr.bf16.mxu0 0
      %1630 = vmatpush1.bf16.msra.mxu0 %v1609
      %1631 = vmatprep.subr.bf16.mxu0 0
      %1632 = vmatpush1.bf16.msra.mxu0 %v1610
      %1633 = vmatprep.subr.bf16.mxu0 0
      %1634 = vmatpush1.bf16.msra.mxu0 %v1611
      %1635 = vmatprep.subr.bf16.mxu0 0
      %1636 = vmatpush1.bf16.msra.mxu0 %v1612
      %1637 = vmatprep.subr.bf16.mxu0 0
      %1638 = vmatpush1.bf16.msra.mxu0 0
      %1639 = vmatprep.subr.bf16.mxu0 0
      %1640 = vmatpush1.bf16.msra.mxu0 0
      %1641 = vmatprep.subr.bf16.mxu0 0
      %1642 = vmatpush1.bf16.msra.mxu0 0
      %1643 = vmatprep.subr.bf16.mxu0 0
      %1644 = vmatpush1.bf16.msra.mxu0 0
      %1645 = vmatprep.subr.bf16.mxu0 0
      %1646 = vmatpush1.bf16.msra.mxu0 0
      %1647 = vmatprep.subr.bf16.mxu0 0
      %1648 = vmatpush1.bf16.msra.mxu0 0
      %1649 = vmatprep.subr.bf16.mxu0 0
      %1650 = vmatpush1.bf16.msra.mxu0 0
      %1651 = vmatprep.subr.bf16.mxu0 0
      %1652 = vmatpush1.bf16.msra.mxu0 0
      %1653 = vmatprep.mubr.bf16.mxu0 0
      %1654 = vmatmul.mubr.bf16.gmra.mrb[0].mxu0 %v1552
      %v1655 = vpop.f32.mrb[0].mxu0
      %v1656 = vadd.f32 0.0, %v1655
      %v1657 = vpop.f32.mrb[0].mxu0
      %v1658 = vpop.f32.mrb[0].mxu0
      %v1659 = vadd.f32 0.0, %v1658
      %v1660 = vpop.f32.mrb[0].mxu0
      %1661 = vmatprep.mubr.bf16.mxu0 0
      %1662 = vmatmul.mubr.bf16.gmra.mrb[0].mxu0 %v1553
      %v1663 = vpop.f32.mrb[0].mxu0
      %v1664 = vadd.f32 0.0, %v1663
      %v1665 = vpop.f32.mrb[0].mxu0
      %v1666 = vpop.f32.mrb[0].mxu0
      %v1667 = vadd.f32 0.0, %v1666
      %v1668 = vpop.f32.mrb[0].mxu0
      %1669 = vmatprep.mubr.bf16.mxu0 0
      %1670 = vmatmul.mubr.bf16.gmra.mrb[0].mxu0 %v1554
      %v1671 = vpop.f32.mrb[0].mxu0
      %v1672 = vadd.f32 0.0, %v1671
      %v1673 = vpop.f32.mrb[0].mxu0
      %v1674 = vpop.f32.mrb[0].mxu0
      %v1675 = vadd.f32 0.0, %v1674
      %v1676 = vpop.f32.mrb[0].mxu0
      %1677 = vmatprep.mubr.bf16.mxu0 0
      %1678 = vmatmul.mubr.bf16.gmra.mrb[0].mxu0 %v1555
      %v1679 = vpop.f32.mrb[0].mxu0
      %v1680 = vadd.f32 0.0, %v1679
      %v1681 = vpop.f32.mrb[0].mxu0
      %v1682 = vpop.f32.mrb[0].mxu0
      %v1683 = vadd.f32 0.0, %v1682
      %v1684 = vpop.f32.mrb[0].mxu0
      %1685 = vdwg.mxu0
      %v1686 = vadd.f32 %v1536, %v1656
      %v1687 = vadd.f32 %v1537, %v1659
      %v1688 = vadd.f32 %v1538, %v1664
      %v1689 = vadd.f32 %v1539, %v1667
      %v1690 = vadd.f32 %v1540, %v1672
      %v1691 = vadd.f32 %v1541, %v1675
      %v1692 = vadd.f32 %v1542, %v1680
      %v1693 = vadd.f32 %v1543, %v1683
      %v1694 = vld [vmem:[%s2] sm:$0x1]
      %v1696 = vlaneseq
      %v1697 = vshrl.u32 %v1696, 7
      %v1698 = vsub.s32 0, %v1697
      %v1699 = vrot.slane %v1694, %v1698
      %v1701 = vadd.f32 %v1686, %v1699
      %v1702 = vadd.f32 %v1687, %v1699
      %v1703 = vadd.f32 %v1688, %v1699
      %v1704 = vadd.f32 %v1689, %v1699
      %v1705 = vadd.f32 %v1690, %v1699
      %v1706 = vadd.f32 %v1691, %v1699
      %v1707 = vadd.f32 %v1692, %v1699
      %v1708 = vadd.f32 %v1693, %v1699
      %v1709 = vmax.f32 %v1701, 0.0
      %v1710 = vmax.f32 %v1702, 0.0
      %v1711 = vmax.f32 %v1703, 0.0
      %v1712 = vmax.f32 %v1704, 0.0
      %v1713 = vmax.f32 %v1705, 0.0
      %v1714 = vmax.f32 %v1706, 0.0
      %v1715 = vmax.f32 %v1707, 0.0
      %v1716 = vmax.f32 %v1708, 0.0
      %1717 = vst [vmem:[#allocation3] sm:$0xff] 0.0
      %1718 = vst [vmem:[#allocation3 + $0x8] sm:$0x3] 0.0
      %1719 = vst [vmem:[#allocation3 + $0x10] sm:$0xff] 0.0
      %1720 = vst [vmem:[#allocation3 + $0x18] sm:$0x3] 0.0
      %1721 = vst [vmem:[#allocation3 + $0x20] sm:$0xff] 0.0
      %1722 = vst [vmem:[#allocation3 + $0x28] sm:$0x3] 0.0
      %1723 = vst [vmem:[#allocation3 + $0x30] sm:$0xff] 0.0
      %1724 = vst [vmem:[#allocation3 + $0x38] sm:$0x3] 0.0
      %1725 = vst [vmem:[#allocation3 + $0x40] sm:$0xff] 0.0
      %1726 = vst [vmem:[#allocation3 + $0x48] sm:$0x3] 0.0
      %1727 = vst [vmem:[#allocation3 + $0x50] sm:$0xff] 0.0
      %1728 = vst [vmem:[#allocation3 + $0x58] sm:$0x3] 0.0
      %1729 = vst [vmem:[#allocation3 + $0x60] sm:$0xff] 0.0
      %1730 = vst [vmem:[#allocation3 + $0x68] sm:$0x3] 0.0
      %1731 = vst [vmem:[#allocation3 + $0x70] sm:$0xff] 0.0
      %1732 = vst [vmem:[#allocation3 + $0x78] sm:$0x3] 0.0
      %1733 = vst [vmem:[#allocation3 + $0x80] sm:$0xff] 0.0
      %1734 = vst [vmem:[#allocation3 + $0x88] sm:$0x3] 0.0
      %1735 = vst [vmem:[#allocation3 + $0x90] sm:$0xff] 0.0
      %1736 = vst [vmem:[#allocation3 + $0x98] sm:$0x3] 0.0
      %s1737 = scalar_lea.vmem [#allocation3], 16
      %1738 = vst [vmem:[%s1737 + $0x1] sm:$0xff] %v1709
      %1739 = vst [vmem:[%s1737 + $0x11] sm:$0xff] %v1710
      %1740 = vst [vmem:[%s1737 + $0x21] sm:$0xff] %v1711
      %1741 = vst [vmem:[%s1737 + $0x31] sm:$0xff] %v1712
      %1742 = vst [vmem:[%s1737 + $0x41] sm:$0xff] %v1713
      %1743 = vst [vmem:[%s1737 + $0x51] sm:$0xff] %v1714
      %1744 = vst [vmem:[%s1737 + $0x61] sm:$0xff] %v1715
      %1745 = vst [vmem:[%s1737 + $0x71] sm:$0xff] %v1716
      %v1746 = vld [vmem:[#allocation3] sm:$0xff]
      %v1747 = vld [vmem:[#allocation3 + $0x10] sm:$0xff]
      %v1748 = vld [vmem:[#allocation3 + $0x20] sm:$0xff]
      %v1749 = vld [vmem:[#allocation3 + $0x30] sm:$0xff]
      %v1750 = vld [vmem:[#allocation3 + $0x40] sm:$0xff]
      %v1751 = vld [vmem:[#allocation3 + $0x50] sm:$0xff]
      %v1752 = vld [vmem:[#allocation3 + $0x60] sm:$0xff]
      %v1753 = vld [vmem:[#allocation3 + $0x70] sm:$0xff]
      %v1754 = vpack.c.bf16 %v1747, %v1746
      %v1755 = vpack.c.bf16 %v1749, %v1748
      %v1756 = vpack.c.bf16 %v1751, %v1750
      %v1757 = vpack.c.bf16 %v1753, %v1752
      %v1758 = vld [vmem:[%s3] sm:$0xf]
      %v1759 = vld [vmem:[%s3 + $0x4] sm:$0xf]
      %v1760 = vld [vmem:[%s3 + $0x8] sm:$0xf]
      %v1761 = vld [vmem:[%s3 + $0xc] sm:$0xf]
      %v1762 = vld [vmem:[%s3 + $0x10] sm:$0xf]
      %v1763 = vld [vmem:[%s3 + $0x14] sm:$0xf]
      %v1764 = vld [vmem:[%s3 + $0x18] sm:$0xf]
      %v1765 = vld [vmem:[%s3 + $0x1c] sm:$0xf]
      %v1766 = vld [vmem:[%s3 + $0x20] sm:$0xf]
      %v1767 = vld [vmem:[%s3 + $0x24] sm:$0xf]
      %v1768 = vld [vmem:[%s3 + $0x28] sm:$0xf]
      %v1769 = vld [vmem:[%s3 + $0x2c] sm:$0xf]
      %v1770 = vld [vmem:[%s3 + $0x30] sm:$0xf]
      %v1771 = vld [vmem:[%s3 + $0x34] sm:$0xf]
      %v1772 = vld [vmem:[%s3 + $0x38] sm:$0xf]
      %v1773 = vld [vmem:[%s3 + $0x3c] sm:$0xf]
      %v1774 = vld [vmem:[#allocation3 + $0x1] sm:$0xff]
      %v1775 = vld [vmem:[#allocation3 + $0x11] sm:$0xff]
      %v1776 = vld [vmem:[#allocation3 + $0x21] sm:$0xff]
      %v1777 = vld [vmem:[#allocation3 + $0x31] sm:$0xff]
      %v1778 = vld [vmem:[#allocation3 + $0x41] sm:$0xff]
      %v1779 = vld [vmem:[#allocation3 + $0x51] sm:$0xff]
      %v1780 = vld [vmem:[#allocation3 + $0x61] sm:$0xff]
      %v1781 = vld [vmem:[#allocation3 + $0x71] sm:$0xff]
      %v1782 = vpack.c.bf16 %v1775, %v1774
      %v1783 = vpack.c.bf16 %v1777, %v1776
      %v1784 = vpack.c.bf16 %v1779, %v1778
      %v1785 = vpack.c.bf16 %v1781, %v1780
      %s1786 = scalar_lea.vmem %s3, 64
      %v1787 = vld [vmem:[%s1786] sm:$0xf]
      %v1788 = vld [vmem:[%s1786 + $0x4] sm:$0xf]
      %v1789 = vld [vmem:[%s1786 + $0x8] sm:$0xf]
      %v1790 = vld [vmem:[%s1786 + $0xc] sm:$0xf]
      %v1791 = vld [vmem:[%s1786 + $0x10] sm:$0xf]
      %v1792 = vld [vmem:[%s1786 + $0x14] sm:$0xf]
      %v1793 = vld [vmem:[%s1786 + $0x18] sm:$0xf]
      %v1794 = vld [vmem:[%s1786 + $0x1c] sm:$0xf]
      %v1795 = vld [vmem:[%s1786 + $0x20] sm:$0xf]
      %v1796 = vld [vmem:[%s1786 + $0x24] sm:$0xf]
      %v1797 = vld [vmem:[%s1786 + $0x28] sm:$0xf]
      %v1798 = vld [vmem:[%s1786 + $0x2c] sm:$0xf]
      %v1799 = vld [vmem:[%s1786 + $0x30] sm:$0xf]
      %v1800 = vld [vmem:[%s1786 + $0x34] sm:$0xf]
      %v1801 = vld [vmem:[%s1786 + $0x38] sm:$0xf]
      %v1802 = vld [vmem:[%s1786 + $0x3c] sm:$0xf]
      %v1819 = vunpack.c.l.b16 %v1787
      %v1820 = vunpack.c.l.b16 %v1788
      %v1821 = vunpack.c.l.b16 %v1789
      %v1822 = vunpack.c.l.b16 %v1790
      %v1823 = vunpack.c.l.b16 %v1791
      %v1824 = vunpack.c.l.b16 %v1792
      %v1825 = vunpack.c.l.b16 %v1793
      %v1826 = vunpack.c.l.b16 %v1794
      %v1827 = vunpack.c.l.b16 %v1795
      %v1828 = vunpack.c.l.b16 %v1796
      %v1829 = vunpack.c.l.b16 %v1797
      %v1830 = vunpack.c.l.b16 %v1798
      %v1831 = vunpack.c.l.b16 %v1799
      %v1832 = vunpack.c.l.b16 %v1800
      %v1833 = vunpack.c.l.b16 %v1801
      %v1834 = vunpack.c.l.b16 %v1802
      %v1835 = vpack.c.b16 %v1820, %v1819
      %v1836 = vpack.c.b16 %v1822, %v1821
      %v1837 = vpack.c.b16 %v1824, %v1823
      %v1838 = vpack.c.b16 %v1826, %v1825
      %v1839 = vpack.c.b16 %v1828, %v1827
      %v1840 = vpack.c.b16 %v1830, %v1829
      %v1841 = vpack.c.b16 %v1832, %v1831
      %v1842 = vpack.c.b16 %v1834, %v1833
      %1851 = vmatprep.subr.bf16.mxu0 0
      %1852 = vmatpush1.bf16.msra.mxu0 %v1835
      %1853 = vmatprep.subr.bf16.mxu0 0
      %1854 = vmatpush1.bf16.msra.mxu0 %v1836
      %1855 = vmatprep.subr.bf16.mxu0 0
      %1856 = vmatpush1.bf16.msra.mxu0 %v1837
      %1857 = vmatprep.subr.bf16.mxu0 0
      %1858 = vmatpush1.bf16.msra.mxu0 %v1838
      %1859 = vmatprep.subr.bf16.mxu0 0
      %1860 = vmatpush1.bf16.msra.mxu0 %v1839
      %1861 = vmatprep.subr.bf16.mxu0 0
      %1862 = vmatpush1.bf16.msra.mxu0 %v1840
      %1863 = vmatprep.subr.bf16.mxu0 0
      %1864 = vmatpush1.bf16.msra.mxu0 %v1841
      %1865 = vmatprep.subr.bf16.mxu0 0
      %1866 = vmatpush1.bf16.msra.mxu0 %v1842
      %1867 = vmatprep.subr.bf16.mxu0 0
      %1868 = vmatpush1.bf16.msra.mxu0 0
      %1869 = vmatprep.subr.bf16.mxu0 0
      %1870 = vmatpush1.bf16.msra.mxu0 0
      %1871 = vmatprep.subr.bf16.mxu0 0
      %1872 = vmatpush1.bf16.msra.mxu0 0
      %1873 = vmatprep.subr.bf16.mxu0 0
      %1874 = vmatpush1.bf16.msra.mxu0 0
      %1875 = vmatprep.subr.bf16.mxu0 0
      %1876 = vmatpush1.bf16.msra.mxu0 0
      %1877 = vmatprep.subr.bf16.mxu0 0
      %1878 = vmatpush1.bf16.msra.mxu0 0
      %1879 = vmatprep.subr.bf16.mxu0 0
      %1880 = vmatpush1.bf16.msra.mxu0 0
      %1881 = vmatprep.subr.bf16.mxu0 0
      %1882 = vmatpush1.bf16.msra.mxu0 0
      %1883 = vmatprep.mubr.bf16.mxu0 0
      %1884 = vmatmul.mubr.bf16.gmra.mrb[0].mxu0 %v1782
      %v1885 = vpop.f32.mrb[0].mxu0
      %v1886 = vadd.f32 0.0, %v1885
      %v1887 = vpop.f32.mrb[0].mxu0
      %v1888 = vpop.f32.mrb[0].mxu0
      %v1889 = vadd.f32 0.0, %v1888
      %v1890 = vpop.f32.mrb[0].mxu0
      %1891 = vmatprep.mubr.bf16.mxu0 0
      %1892 = vmatmul.mubr.bf16.gmra.mrb[0].mxu0 %v1783
      %v1893 = vpop.f32.mrb[0].mxu0
      %v1894 = vadd.f32 0.0, %v1893
      %v1895 = vpop.f32.mrb[0].mxu0
      %v1896 = vpop.f32.mrb[0].mxu0
      %v1897 = vadd.f32 0.0, %v1896
      %v1898 = vpop.f32.mrb[0].mxu0
      %1899 = vmatprep.mubr.bf16.mxu0 0
      %1900 = vmatmul.mubr.bf16.gmra.mrb[0].mxu0 %v1784
      %v1901 = vpop.f32.mrb[0].mxu0
      %v1902 = vadd.f32 0.0, %v1901
      %v1903 = vpop.f32.mrb[0].mxu0
      %v1904 = vpop.f32.mrb[0].mxu0
      %v1905 = vadd.f32 0.0, %v1904
      %v1906 = vpop.f32.mrb[0].mxu0
      %1907 = vmatprep.mubr.bf16.mxu0 0
      %1908 = vmatmul.mubr.bf16.gmra.mrb[0].mxu0 %v1785
      %v1909 = vpop.f32.mrb[0].mxu0
      %v1910 = vadd.f32 0.0, %v1909
      %v1911 = vpop.f32.mrb[0].mxu0
      %v1912 = vpop.f32.mrb[0].mxu0
      %v1913 = vadd.f32 0.0, %v1912
      %v1914 = vpop.f32.mrb[0].mxu0
      %1915 = vdwg.mxu0
      %v1932 = vunpack.c.l.b16 %v1758
      %v1933 = vunpack.c.l.b16 %v1759
      %v1934 = vunpack.c.l.b16 %v1760
      %v1935 = vunpack.c.l.b16 %v1761
      %v1936 = vunpack.c.l.b16 %v1762
      %v1937 = vunpack.c.l.b16 %v1763
      %v1938 = vunpack.c.l.b16 %v1764
      %v1939 = vunpack.c.l.b16 %v1765
      %v1940 = vunpack.c.l.b16 %v1766
      %v1941 = vunpack.c.l.b16 %v1767
      %v1942 = vunpack.c.l.b16 %v1768
      %v1943 = vunpack.c.l.b16 %v1769
      %v1944 = vunpack.c.l.b16 %v1770
      %v1945 = vunpack.c.l.b16 %v1771
      %v1946 = vunpack.c.l.b16 %v1772
      %v1947 = vunpack.c.l.b16 %v1773
      %v1948 = vpack.c.b16 %v1933, %v1932
      %v1949 = vpack.c.b16 %v1935, %v1934
      %v1950 = vpack.c.b16 %v1937, %v1936
      %v1951 = vpack.c.b16 %v1939, %v1938
      %v1952 = vpack.c.b16 %v1941, %v1940
      %v1953 = vpack.c.b16 %v1943, %v1942
      %v1954 = vpack.c.b16 %v1945, %v1944
      %v1955 = vpack.c.b16 %v1947, %v1946
      %1964 = vmatprep.subr.bf16.mxu0 0
      %1965 = vmatpush1.bf16.msra.mxu0 %v1948
      %1966 = vmatprep.subr.bf16.mxu0 0
      %1967 = vmatpush1.bf16.msra.mxu0 %v1949
      %1968 = vmatprep.subr.bf16.mxu0 0
      %1969 = vmatpush1.bf16.msra.mxu0 %v1950
      %1970 = vmatprep.subr.bf16.mxu0 0
      %1971 = vmatpush1.bf16.msra.mxu0 %v1951
      %1972 = vmatprep.subr.bf16.mxu0 0
      %1973 = vmatpush1.bf16.msra.mxu0 %v1952
      %1974 = vmatprep.subr.bf16.mxu0 0
      %1975 = vmatpush1.bf16.msra.mxu0 %v1953
      %1976 = vmatprep.subr.bf16.mxu0 0
      %1977 = vmatpush1.bf16.msra.mxu0 %v1954
      %1978 = vmatprep.subr.bf16.mxu0 0
      %1979 = vmatpush1.bf16.msra.mxu0 %v1955
      %1980 = vmatprep.subr.bf16.mxu0 0
      %1981 = vmatpush1.bf16.msra.mxu0 0
      %1982 = vmatprep.subr.bf16.mxu0 0
      %1983 = vmatpush1.bf16.msra.mxu0 0
      %1984 = vmatprep.subr.bf16.mxu0 0
      %1985 = vmatpush1.bf16.msra.mxu0 0
      %1986 = vmatprep.subr.bf16.mxu0 0
      %1987 = vmatpush1.bf16.msra.mxu0 0
      %1988 = vmatprep.subr.bf16.mxu0 0
      %1989 = vmatpush1.bf16.msra.mxu0 0
      %1990 = vmatprep.subr.bf16.mxu0 0
      %1991 = vmatpush1.bf16.msra.mxu0 0
      %1992 = vmatprep.subr.bf16.mxu0 0
      %1993 = vmatpush1.bf16.msra.mxu0 0
      %1994 = vmatprep.subr.bf16.mxu0 0
      %1995 = vmatpush1.bf16.msra.mxu0 0
      %1996 = vmatprep.mubr.bf16.mxu0 0
      %1997 = vmatmul.mubr.bf16.gmra.mrb[0].mxu0 %v1754
      %v1998 = vpop.f32.mrb[0].mxu0
      %v1999 = vadd.f32 %v1886, %v1998
      %v2000 = vpop.f32.mrb[0].mxu0
      %v2001 = vpop.f32.mrb[0].mxu0
      %v2002 = vadd.f32 %v1889, %v2001
      %v2003 = vpop.f32.mrb[0].mxu0
      %2004 = vmatprep.mubr.bf16.mxu0 0
      %2005 = vmatmul.mubr.bf16.gmra.mrb[0].mxu0 %v1755
      %v2006 = vpop.f32.mrb[0].mxu0
      %v2007 = vadd.f32 %v1894, %v2006
      %v2008 = vpop.f32.mrb[0].mxu0
      %v2009 = vpop.f32.mrb[0].mxu0
      %v2010 = vadd.f32 %v1897, %v2009
      %v2011 = vpop.f32.mrb[0].mxu0
      %2012 = vmatprep.mubr.bf16.mxu0 0
      %2013 = vmatmul.mubr.bf16.gmra.mrb[0].mxu0 %v1756
      %v2014 = vpop.f32.mrb[0].mxu0
      %v2015 = vadd.f32 %v1902, %v2014
      %v2016 = vpop.f32.mrb[0].mxu0
      %v2017 = vpop.f32.mrb[0].mxu0
      %v2018 = vadd.f32 %v1905, %v2017
      %v2019 = vpop.f32.mrb[0].mxu0
      %2020 = vmatprep.mubr.bf16.mxu0 0
      %2021 = vmatmul.mubr.bf16.gmra.mrb[0].mxu0 %v1757
      %v2022 = vpop.f32.mrb[0].mxu0
      %v2023 = vadd.f32 %v1910, %v2022
      %v2024 = vpop.f32.mrb[0].mxu0
      %v2025 = vpop.f32.mrb[0].mxu0
      %v2026 = vadd.f32 %v1913, %v2025
      %v2027 = vpop.f32.mrb[0].mxu0
      %2028 = vdwg.mxu0
      %v2029 = vld [vmem:[#allocation3 + $0x2] sm:$0xff]
      %v2030 = vld [vmem:[#allocation3 + $0x12] sm:$0xff]
      %v2031 = vld [vmem:[#allocation3 + $0x22] sm:$0xff]
      %v2032 = vld [vmem:[#allocation3 + $0x32] sm:$0xff]
      %v2033 = vld [vmem:[#allocation3 + $0x42] sm:$0xff]
      %v2034 = vld [vmem:[#allocation3 + $0x52] sm:$0xff]
      %v2035 = vld [vmem:[#allocation3 + $0x62] sm:$0xff]
      %v2036 = vld [vmem:[#allocation3 + $0x72] sm:$0xff]
      %v2037 = vpack.c.bf16 %v2030, %v2029
      %v2038 = vpack.c.bf16 %v2032, %v2031
      %v2039 = vpack.c.bf16 %v2034, %v2033
      %v2040 = vpack.c.bf16 %v2036, %v2035
      %s2041 = scalar_lea.vmem %s3, 128
      %v2042 = vld [vmem:[%s2041] sm:$0xf]
      %v2043 = vld [vmem:[%s2041 + $0x4] sm:$0xf]
      %v2044 = vld [vmem:[%s2041 + $0x8] sm:$0xf]
      %v2045 = vld [vmem:[%s2041 + $0xc] sm:$0xf]
      %v2046 = vld [vmem:[%s2041 + $0x10] sm:$0xf]
      %v2047 = vld [vmem:[%s2041 + $0x14] sm:$0xf]
      %v2048 = vld [vmem:[%s2041 + $0x18] sm:$0xf]
      %v2049 = vld [vmem:[%s2041 + $0x1c] sm:$0xf]
      %v2050 = vld [vmem:[%s2041 + $0x20] sm:$0xf]
      %v2051 = vld [vmem:[%s2041 + $0x24] sm:$0xf]
      %v2052 = vld [vmem:[%s2041 + $0x28] sm:$0xf]
      %v2053 = vld [vmem:[%s2041 + $0x2c] sm:$0xf]
      %v2054 = vld [vmem:[%s2041 + $0x30] sm:$0xf]
      %v2055 = vld [vmem:[%s2041 + $0x34] sm:$0xf]
      %v2056 = vld [vmem:[%s2041 + $0x38] sm:$0xf]
      %v2057 = vld [vmem:[%s2041 + $0x3c] sm:$0xf]
      %v2074 = vunpack.c.l.b16 %v2042
      %v2075 = vunpack.c.l.b16 %v2043
      %v2076 = vunpack.c.l.b16 %v2044
      %v2077 = vunpack.c.l.b16 %v2045
      %v2078 = vunpack.c.l.b16 %v2046
      %v2079 = vunpack.c.l.b16 %v2047
      %v2080 = vunpack.c.l.b16 %v2048
      %v2081 = vunpack.c.l.b16 %v2049
      %v2082 = vunpack.c.l.b16 %v2050
      %v2083 = vunpack.c.l.b16 %v2051
      %v2084 = vunpack.c.l.b16 %v2052
      %v2085 = vunpack.c.l.b16 %v2053
      %v2086 = vunpack.c.l.b16 %v2054
      %v2087 = vunpack.c.l.b16 %v2055
      %v2088 = vunpack.c.l.b16 %v2056
      %v2089 = vunpack.c.l.b16 %v2057
      %v2090 = vpack.c.b16 %v2075, %v2074
      %v2091 = vpack.c.b16 %v2077, %v2076
      %v2092 = vpack.c.b16 %v2079, %v2078
      %v2093 = vpack.c.b16 %v2081, %v2080
      %v2094 = vpack.c.b16 %v2083, %v2082
      %v2095 = vpack.c.b16 %v2085, %v2084
      %v2096 = vpack.c.b16 %v2087, %v2086
      %v2097 = vpack.c.b16 %v2089, %v2088
      %2106 = vmatprep.subr.bf16.mxu0 0
      %2107 = vmatpush1.bf16.msra.mxu0 %v2090
      %2108 = vmatprep.subr.bf16.mxu0 0
      %2109 = vmatpush1.bf16.msra.mxu0 %v2091
      %2110 = vmatprep.subr.bf16.mxu0 0
      %2111 = vmatpush1.bf16.msra.mxu0 %v2092
      %2112 = vmatprep.subr.bf16.mxu0 0
      %2113 = vmatpush1.bf16.msra.mxu0 %v2093
      %2114 = vmatprep.subr.bf16.mxu0 0
      %2115 = vmatpush1.bf16.msra.mxu0 %v2094
      %2116 = vmatprep.subr.bf16.mxu0 0
      %2117 = vmatpush1.bf16.msra.mxu0 %v2095
      %2118 = vmatprep.subr.bf16.mxu0 0
      %2119 = vmatpush1.bf16.msra.mxu0 %v2096
      %2120 = vmatprep.subr.bf16.mxu0 0
      %2121 = vmatpush1.bf16.msra.mxu0 %v2097
      %2122 = vmatprep.subr.bf16.mxu0 0
      %2123 = vmatpush1.bf16.msra.mxu0 0
      %2124 = vmatprep.subr.bf16.mxu0 0
      %2125 = vmatpush1.bf16.msra.mxu0 0
      %2126 = vmatprep.subr.bf16.mxu0 0
      %2127 = vmatpush1.bf16.msra.mxu0 0
      %2128 = vmatprep.subr.bf16.mxu0 0
      %2129 = vmatpush1.bf16.msra.mxu0 0
      %2130 = vmatprep.subr.bf16.mxu0 0
      %2131 = vmatpush1.bf16.msra.mxu0 0
      %2132 = vmatprep.subr.bf16.mxu0 0
      %2133 = vmatpush1.bf16.msra.mxu0 0
      %2134 = vmatprep.subr.bf16.mxu0 0
      %2135 = vmatpush1.bf16.msra.mxu0 0
      %2136 = vmatprep.subr.bf16.mxu0 0
      %2137 = vmatpush1.bf16.msra.mxu0 0
      %2138 = vmatprep.mubr.bf16.mxu0 0
      %2139 = vmatmul.mubr.bf16.gmra.mrb[0].mxu0 %v2037
      %v2140 = vpop.f32.mrb[0].mxu0
      %v2141 = vadd.f32 0.0, %v2140
      %v2142 = vpop.f32.mrb[0].mxu0
      %v2143 = vpop.f32.mrb[0].mxu0
      %v2144 = vadd.f32 0.0, %v2143
      %v2145 = vpop.f32.mrb[0].mxu0
      %2146 = vmatprep.mubr.bf16.mxu0 0
      %2147 = vmatmul.mubr.bf16.gmra.mrb[0].mxu0 %v2038
      %v2148 = vpop.f32.mrb[0].mxu0
      %v2149 = vadd.f32 0.0, %v2148
      %v2150 = vpop.f32.mrb[0].mxu0
      %v2151 = vpop.f32.mrb[0].mxu0
      %v2152 = vadd.f32 0.0, %v2151
      %v2153 = vpop.f32.mrb[0].mxu0
      %2154 = vmatprep.mubr.bf16.mxu0 0
      %2155 = vmatmul.mubr.bf16.gmra.mrb[0].mxu0 %v2039
      %v2156 = vpop.f32.mrb[0].mxu0
      %v2157 = vadd.f32 0.0, %v2156
      %v2158 = vpop.f32.mrb[0].mxu0
      %v2159 = vpop.f32.mrb[0].mxu0
      %v2160 = vadd.f32 0.0, %v2159
      %v2161 = vpop.f32.mrb[0].mxu0
      %2162 = vmatprep.mubr.bf16.mxu0 0
      %2163 = vmatmul.mubr.bf16.gmra.mrb[0].mxu0 %v2040
      %v2164 = vpop.f32.mrb[0].mxu0
      %v2165 = vadd.f32 0.0, %v2164
      %v2166 = vpop.f32.mrb[0].mxu0
      %v2167 = vpop.f32.mrb[0].mxu0
      %v2168 = vadd.f32 0.0, %v2167
      %v2169 = vpop.f32.mrb[0].mxu0
      %2170 = vdwg.mxu0
      %v2171 = vadd.f32 %v1999, %v2141
      %v2172 = vadd.f32 %v2002, %v2144
      %v2173 = vadd.f32 %v2007, %v2149
      %v2174 = vadd.f32 %v2010, %v2152
      %v2175 = vadd.f32 %v2015, %v2157
      %v2176 = vadd.f32 %v2018, %v2160
      %v2177 = vadd.f32 %v2023, %v2165
      %v2178 = vadd.f32 %v2026, %v2168
      %v2179 = vld [vmem:[%s1737] sm:$0xff]
      %v2180 = vld [vmem:[%s1737 + $0x10] sm:$0xff]
      %v2181 = vld [vmem:[%s1737 + $0x20] sm:$0xff]
      %v2182 = vld [vmem:[%s1737 + $0x30] sm:$0xff]
      %v2183 = vld [vmem:[%s1737 + $0x40] sm:$0xff]
      %v2184 = vld [vmem:[%s1737 + $0x50] sm:$0xff]
      %v2185 = vld [vmem:[%s1737 + $0x60] sm:$0xff]
      %v2186 = vld [vmem:[%s1737 + $0x70] sm:$0xff]
      %v2187 = vpack.c.bf16 %v2180, %v2179
      %v2188 = vpack.c.bf16 %v2182, %v2181
      %v2189 = vpack.c.bf16 %v2184, %v2183
      %v2190 = vpack.c.bf16 %v2186, %v2185
      %s2191 = scalar_lea.vmem %s3, 192
      %v2192 = vld [vmem:[%s2191] sm:$0xf]
      %v2193 = vld [vmem:[%s2191 + $0x4] sm:$0xf]
      %v2194 = vld [vmem:[%s2191 + $0x8] sm:$0xf]
      %v2195 = vld [vmem:[%s2191 + $0xc] sm:$0xf]
      %v2196 = vld [vmem:[%s2191 + $0x10] sm:$0xf]
      %v2197 = vld [vmem:[%s2191 + $0x14] sm:$0xf]
      %v2198 = vld [vmem:[%s2191 + $0x18] sm:$0xf]
      %v2199 = vld [vmem:[%s2191 + $0x1c] sm:$0xf]
      %v2200 = vld [vmem:[%s2191 + $0x20] sm:$0xf]
      %v2201 = vld [vmem:[%s2191 + $0x24] sm:$0xf]
      %v2202 = vld [vmem:[%s2191 + $0x28] sm:$0xf]
      %v2203 = vld [vmem:[%s2191 + $0x2c] sm:$0xf]
      %v2204 = vld [vmem:[%s2191 + $0x30] sm:$0xf]
      %v2205 = vld [vmem:[%s2191 + $0x34] sm:$0xf]
      %v2206 = vld [vmem:[%s2191 + $0x38] sm:$0xf]
      %v2207 = vld [vmem:[%s2191 + $0x3c] sm:$0xf]
      %v2224 = vunpack.c.l.b16 %v2192
      %v2225 = vunpack.c.l.b16 %v2193
      %v2226 = vunpack.c.l.b16 %v2194
      %v2227 = vunpack.c.l.b16 %v2195
      %v2228 = vunpack.c.l.b16 %v2196
      %v2229 = vunpack.c.l.b16 %v2197
      %v2230 = vunpack.c.l.b16 %v2198
      %v2231 = vunpack.c.l.b16 %v2199
      %v2232 = vunpack.c.l.b16 %v2200
      %v2233 = vunpack.c.l.b16 %v2201
      %v2234 = vunpack.c.l.b16 %v2202
      %v2235 = vunpack.c.l.b16 %v2203
      %v2236 = vunpack.c.l.b16 %v2204
      %v2237 = vunpack.c.l.b16 %v2205
      %v2238 = vunpack.c.l.b16 %v2206
      %v2239 = vunpack.c.l.b16 %v2207
      %v2240 = vpack.c.b16 %v2225, %v2224
      %v2241 = vpack.c.b16 %v2227, %v2226
      %v2242 = vpack.c.b16 %v2229, %v2228
      %v2243 = vpack.c.b16 %v2231, %v2230
      %v2244 = vpack.c.b16 %v2233, %v2232
      %v2245 = vpack.c.b16 %v2235, %v2234
      %v2246 = vpack.c.b16 %v2237, %v2236
      %v2247 = vpack.c.b16 %v2239, %v2238
      %2256 = vmatprep.subr.bf16.mxu0 0
      %2257 = vmatpush1.bf16.msra.mxu0 %v2240
      %2258 = vmatprep.subr.bf16.mxu0 0
      %2259 = vmatpush1.bf16.msra.mxu0 %v2241
      %2260 = vmatprep.subr.bf16.mxu0 0
      %2261 = vmatpush1.bf16.msra.mxu0 %v2242
      %2262 = vmatprep.subr.bf16.mxu0 0
      %2263 = vmatpush1.bf16.msra.mxu0 %v2243
      %2264 = vmatprep.subr.bf16.mxu0 0
      %2265 = vmatpush1.bf16.msra.mxu0 %v2244
      %2266 = vmatprep.subr.bf16.mxu0 0
      %2267 = vmatpush1.bf16.msra.mxu0 %v2245
      %2268 = vmatprep.subr.bf16.mxu0 0
      %2269 = vmatpush1.bf16.msra.mxu0 %v2246
      %2270 = vmatprep.subr.bf16.mxu0 0
      %2271 = vmatpush1.bf16.msra.mxu0 %v2247
      %2272 = vmatprep.subr.bf16.mxu0 0
      %2273 = vmatpush1.bf16.msra.mxu0 0
      %2274 = vmatprep.subr.bf16.mxu0 0
      %2275 = vmatpush1.bf16.msra.mxu0 0
      %2276 = vmatprep.subr.bf16.mxu0 0
      %2277 = vmatpush1.bf16.msra.mxu0 0
      %2278 = vmatprep.subr.bf16.mxu0 0
      %2279 = vmatpush1.bf16.msra.mxu0 0
      %2280 = vmatprep.subr.bf16.mxu0 0
      %2281 = vmatpush1.bf16.msra.mxu0 0
      %2282 = vmatprep.subr.bf16.mxu0 0
      %2283 = vmatpush1.bf16.msra.mxu0 0
      %2284 = vmatprep.subr.bf16.mxu0 0
      %2285 = vmatpush1.bf16.msra.mxu0 0
      %2286 = vmatprep.subr.bf16.mxu0 0
      %2287 = vmatpush1.bf16.msra.mxu0 0
      %2288 = vmatprep.mubr.bf16.mxu0 0
      %2289 = vmatmul.mubr.bf16.gmra.mrb[0].mxu0 %v2187
      %v2290 = vpop.f32.mrb[0].mxu0
      %v2291 = vadd.f32 0.0, %v2290
      %v2292 = vpop.f32.mrb[0].mxu0
      %v2293 = vpop.f32.mrb[0].mxu0
      %v2294 = vadd.f32 0.0, %v2293
      %v2295 = vpop.f32.mrb[0].mxu0
      %2296 = vmatprep.mubr.bf16.mxu0 0
      %2297 = vmatmul.mubr.bf16.gmra.mrb[0].mxu0 %v2188
      %v2298 = vpop.f32.mrb[0].mxu0
      %v2299 = vadd.f32 0.0, %v2298
      %v2300 = vpop.f32.mrb[0].mxu0
      %v2301 = vpop.f32.mrb[0].mxu0
      %v2302 = vadd.f32 0.0, %v2301
      %v2303 = vpop.f32.mrb[0].mxu0
      %2304 = vmatprep.mubr.bf16.mxu0 0
      %2305 = vmatmul.mubr.bf16.gmra.mrb[0].mxu0 %v2189
      %v2306 = vpop.f32.mrb[0].mxu0
      %v2307 = vadd.f32 0.0, %v2306
      %v2308 = vpop.f32.mrb[0].mxu0
      %v2309 = vpop.f32.mrb[0].mxu0
      %v2310 = vadd.f32 0.0, %v2309
      %v2311 = vpop.f32.mrb[0].mxu0
      %2312 = vmatprep.mubr.bf16.mxu0 0
      %2313 = vmatmul.mubr.bf16.gmra.mrb[0].mxu0 %v2190
      %v2314 = vpop.f32.mrb[0].mxu0
      %v2315 = vadd.f32 0.0, %v2314
      %v2316 = vpop.f32.mrb[0].mxu0
      %v2317 = vpop.f32.mrb[0].mxu0
      %v2318 = vadd.f32 0.0, %v2317
      %v2319 = vpop.f32.mrb[0].mxu0
      %2320 = vdwg.mxu0
      %v2321 = vadd.f32 %v2171, %v2291
      %v2322 = vadd.f32 %v2172, %v2294
      %v2323 = vadd.f32 %v2173, %v2299
      %v2324 = vadd.f32 %v2174, %v2302
      %v2325 = vadd.f32 %v2175, %v2307
      %v2326 = vadd.f32 %v2176, %v2310
      %v2327 = vadd.f32 %v2177, %v2315
      %v2328 = vadd.f32 %v2178, %v2318
      %v2329 = vld [vmem:[%s1737 + $0x1] sm:$0xff]
      %v2330 = vld [vmem:[%s1737 + $0x11] sm:$0xff]
      %v2331 = vld [vmem:[%s1737 + $0x21] sm:$0xff]
      %v2332 = vld [vmem:[%s1737 + $0x31] sm:$0xff]
      %v2333 = vld [vmem:[%s1737 + $0x41] sm:$0xff]
      %v2334 = vld [vmem:[%s1737 + $0x51] sm:$0xff]
      %v2335 = vld [vmem:[%s1737 + $0x61] sm:$0xff]
      %v2336 = vld [vmem:[%s1737 + $0x71] sm:$0xff]
      %v2337 = vpack.c.bf16 %v2330, %v2329
      %v2338 = vpack.c.bf16 %v2332, %v2331
      %v2339 = vpack.c.bf16 %v2334, %v2333
      %v2340 = vpack.c.bf16 %v2336, %v2335
      %s2341 = scalar_lea.vmem %s3, 256
      %v2342 = vld [vmem:[%s2341] sm:$0xf]
      %v2343 = vld [vmem:[%s2341 + $0x4] sm:$0xf]
      %v2344 = vld [vmem:[%s2341 + $0x8] sm:$0xf]
      %v2345 = vld [vmem:[%s2341 + $0xc] sm:$0xf]
      %v2346 = vld [vmem:[%s2341 + $0x10] sm:$0xf]
      %v2347 = vld [vmem:[%s2341 + $0x14] sm:$0xf]
      %v2348 = vld [vmem:[%s2341 + $0x18] sm:$0xf]
      %v2349 = vld [vmem:[%s2341 + $0x1c] sm:$0xf]
      %v2350 = vld [vmem:[%s2341 + $0x20] sm:$0xf]
      %v2351 = vld [vmem:[%s2341 + $0x24] sm:$0xf]
      %v2352 = vld [vmem:[%s2341 + $0x28] sm:$0xf]
      %v2353 = vld [vmem:[%s2341 + $0x2c] sm:$0xf]
      %v2354 = vld [vmem:[%s2341 + $0x30] sm:$0xf]
      %v2355 = vld [vmem:[%s2341 + $0x34] sm:$0xf]
      %v2356 = vld [vmem:[%s2341 + $0x38] sm:$0xf]
      %v2357 = vld [vmem:[%s2341 + $0x3c] sm:$0xf]
      %v2374 = vunpack.c.l.b16 %v2342
      %v2375 = vunpack.c.l.b16 %v2343
      %v2376 = vunpack.c.l.b16 %v2344
      %v2377 = vunpack.c.l.b16 %v2345
      %v2378 = vunpack.c.l.b16 %v2346
      %v2379 = vunpack.c.l.b16 %v2347
      %v2380 = vunpack.c.l.b16 %v2348
      %v2381 = vunpack.c.l.b16 %v2349
      %v2382 = vunpack.c.l.b16 %v2350
      %v2383 = vunpack.c.l.b16 %v2351
      %v2384 = vunpack.c.l.b16 %v2352
      %v2385 = vunpack.c.l.b16 %v2353
      %v2386 = vunpack.c.l.b16 %v2354
      %v2387 = vunpack.c.l.b16 %v2355
      %v2388 = vunpack.c.l.b16 %v2356
      %v2389 = vunpack.c.l.b16 %v2357
      %v2390 = vpack.c.b16 %v2375, %v2374
      %v2391 = vpack.c.b16 %v2377, %v2376
      %v2392 = vpack.c.b16 %v2379, %v2378
      %v2393 = vpack.c.b16 %v2381, %v2380
      %v2394 = vpack.c.b16 %v2383, %v2382
      %v2395 = vpack.c.b16 %v2385, %v2384
      %v2396 = vpack.c.b16 %v2387, %v2386
      %v2397 = vpack.c.b16 %v2389, %v2388
      %2406 = vmatprep.subr.bf16.mxu0 0
      %2407 = vmatpush1.bf16.msra.mxu0 %v2390
      %2408 = vmatprep.subr.bf16.mxu0 0
      %2409 = vmatpush1.bf16.msra.mxu0 %v2391
      %2410 = vmatprep.subr.bf16.mxu0 0
      %2411 = vmatpush1.bf16.msra.mxu0 %v2392
      %2412 = vmatprep.subr.bf16.mxu0 0
      %2413 = vmatpush1.bf16.msra.mxu0 %v2393
      %2414 = vmatprep.subr.bf16.mxu0 0
      %2415 = vmatpush1.bf16.msra.mxu0 %v2394
      %2416 = vmatprep.subr.bf16.mxu0 0
      %2417 = vmatpush1.bf16.msra.mxu0 %v2395
      %2418 = vmatprep.subr.bf16.mxu0 0
      %2419 = vmatpush1.bf16.msra.mxu0 %v2396
      %2420 = vmatprep.subr.bf16.mxu0 0
      %2421 = vmatpush1.bf16.msra.mxu0 %v2397
      %2422 = vmatprep.subr.bf16.mxu0 0
      %2423 = vmatpush1.bf16.msra.mxu0 0
      %2424 = vmatprep.subr.bf16.mxu0 0
      %2425 = vmatpush1.bf16.msra.mxu0 0
      %2426 = vmatprep.subr.bf16.mxu0 0
      %2427 = vmatpush1.bf16.msra.mxu0 0
      %2428 = vmatprep.subr.bf16.mxu0 0
      %2429 = vmatpush1.bf16.msra.mxu0 0
      %2430 = vmatprep.subr.bf16.mxu0 0
      %2431 = vmatpush1.bf16.msra.mxu0 0
      %2432 = vmatprep.subr.bf16.mxu0 0
      %2433 = vmatpush1.bf16.msra.mxu0 0
      %2434 = vmatprep.subr.bf16.mxu0 0
      %2435 = vmatpush1.bf16.msra.mxu0 0
      %2436 = vmatprep.subr.bf16.mxu0 0
      %2437 = vmatpush1.bf16.msra.mxu0 0
      %2438 = vmatprep.mubr.bf16.mxu0 0
      %2439 = vmatmul.mubr.bf16.gmra.mrb[0].mxu0 %v2337
      %v2440 = vpop.f32.mrb[0].mxu0
      %v2441 = vadd.f32 0.0, %v2440
      %v2442 = vpop.f32.mrb[0].mxu0
      %v2443 = vpop.f32.mrb[0].mxu0
      %v2444 = vadd.f32 0.0, %v2443
      %v2445 = vpop.f32.mrb[0].mxu0
      %2446 = vmatprep.mubr.bf16.mxu0 0
      %2447 = vmatmul.mubr.bf16.gmra.mrb[0].mxu0 %v2338
      %v2448 = vpop.f32.mrb[0].mxu0
      %v2449 = vadd.f32 0.0, %v2448
      %v2450 = vpop.f32.mrb[0].mxu0
      %v2451 = vpop.f32.mrb[0].mxu0
      %v2452 = vadd.f32 0.0, %v2451
      %v2453 = vpop.f32.mrb[0].mxu0
      %2454 = vmatprep.mubr.bf16.mxu0 0
      %2455 = vmatmul.mubr.bf16.gmra.mrb[0].mxu0 %v2339
      %v2456 = vpop.f32.mrb[0].mxu0
      %v2457 = vadd.f32 0.0, %v2456
      %v2458 = vpop.f32.mrb[0].mxu0
      %v2459 = vpop.f32.mrb[0].mxu0
      %v2460 = vadd.f32 0.0, %v2459
      %v2461 = vpop.f32.mrb[0].mxu0
      %2462 = vmatprep.mubr.bf16.mxu0 0
      %2463 = vmatmul.mubr.bf16.gmra.mrb[0].mxu0 %v2340
      %v2464 = vpop.f32.mrb[0].mxu0
      %v2465 = vadd.f32 0.0, %v2464
      %v2466 = vpop.f32.mrb[0].mxu0
      %v2467 = vpop.f32.mrb[0].mxu0
      %v2468 = vadd.f32 0.0, %v2467
      %v2469 = vpop.f32.mrb[0].mxu0
      %2470 = vdwg.mxu0
      %v2471 = vadd.f32 %v2321, %v2441
      %v2472 = vadd.f32 %v2322, %v2444
      %v2473 = vadd.f32 %v2323, %v2449
      %v2474 = vadd.f32 %v2324, %v2452
      %v2475 = vadd.f32 %v2325, %v2457
      %v2476 = vadd.f32 %v2326, %v2460
      %v2477 = vadd.f32 %v2327, %v2465
      %v2478 = vadd.f32 %v2328, %v2468
      %v2479 = vld [vmem:[%s1737 + $0x2] sm:$0xff]
      %v2480 = vld [vmem:[%s1737 + $0x12] sm:$0xff]
      %v2481 = vld [vmem:[%s1737 + $0x22] sm:$0xff]
      %v2482 = vld [vmem:[%s1737 + $0x32] sm:$0xff]
      %v2483 = vld [vmem:[%s1737 + $0x42] sm:$0xff]
      %v2484 = vld [vmem:[%s1737 + $0x52] sm:$0xff]
      %v2485 = vld [vmem:[%s1737 + $0x62] sm:$0xff]
      %v2486 = vld [vmem:[%s1737 + $0x72] sm:$0xff]
      %v2487 = vpack.c.bf16 %v2480, %v2479
      %v2488 = vpack.c.bf16 %v2482, %v2481
      %v2489 = vpack.c.bf16 %v2484, %v2483
      %v2490 = vpack.c.bf16 %v2486, %v2485
      %s2491 = scalar_lea.vmem %s3, 320
      %v2492 = vld [vmem:[%s2491] sm:$0xf]
      %v2493 = vld [vmem:[%s2491 + $0x4] sm:$0xf]
      %v2494 = vld [vmem:[%s2491 + $0x8] sm:$0xf]
      %v2495 = vld [vmem:[%s2491 + $0xc] sm:$0xf]
      %v2496 = vld [vmem:[%s2491 + $0x10] sm:$0xf]
      %v2497 = vld [vmem:[%s2491 + $0x14] sm:$0xf]
      %v2498 = vld [vmem:[%s2491 + $0x18] sm:$0xf]
      %v2499 = vld [vmem:[%s2491 + $0x1c] sm:$0xf]
      %v2500 = vld [vmem:[%s2491 + $0x20] sm:$0xf]
      %v2501 = vld [vmem:[%s2491 + $0x24] sm:$0xf]
      %v2502 = vld [vmem:[%s2491 + $0x28] sm:$0xf]
      %v2503 = vld [vmem:[%s2491 + $0x2c] sm:$0xf]
      %v2504 = vld [vmem:[%s2491 + $0x30] sm:$0xf]
      %v2505 = vld [vmem:[%s2491 + $0x34] sm:$0xf]
      %v2506 = vld [vmem:[%s2491 + $0x38] sm:$0xf]
      %v2507 = vld [vmem:[%s2491 + $0x3c] sm:$0xf]
      %v2524 = vunpack.c.l.b16 %v2492
      %v2525 = vunpack.c.l.b16 %v2493
      %v2526 = vunpack.c.l.b16 %v2494
      %v2527 = vunpack.c.l.b16 %v2495
      %v2528 = vunpack.c.l.b16 %v2496
      %v2529 = vunpack.c.l.b16 %v2497
      %v2530 = vunpack.c.l.b16 %v2498
      %v2531 = vunpack.c.l.b16 %v2499
      %v2532 = vunpack.c.l.b16 %v2500
      %v2533 = vunpack.c.l.b16 %v2501
      %v2534 = vunpack.c.l.b16 %v2502
      %v2535 = vunpack.c.l.b16 %v2503
      %v2536 = vunpack.c.l.b16 %v2504
      %v2537 = vunpack.c.l.b16 %v2505
      %v2538 = vunpack.c.l.b16 %v2506
      %v2539 = vunpack.c.l.b16 %v2507
      %v2540 = vpack.c.b16 %v2525, %v2524
      %v2541 = vpack.c.b16 %v2527, %v2526
      %v2542 = vpack.c.b16 %v2529, %v2528
      %v2543 = vpack.c.b16 %v2531, %v2530
      %v2544 = vpack.c.b16 %v2533, %v2532
      %v2545 = vpack.c.b16 %v2535, %v2534
      %v2546 = vpack.c.b16 %v2537, %v2536
      %v2547 = vpack.c.b16 %v2539, %v2538
      %2556 = vmatprep.subr.bf16.mxu0 0
      %2557 = vmatpush1.bf16.msra.mxu0 %v2540
      %2558 = vmatprep.subr.bf16.mxu0 0
      %2559 = vmatpush1.bf16.msra.mxu0 %v2541
      %2560 = vmatprep.subr.bf16.mxu0 0
      %2561 = vmatpush1.bf16.msra.mxu0 %v2542
      %2562 = vmatprep.subr.bf16.mxu0 0
      %2563 = vmatpush1.bf16.msra.mxu0 %v2543
      %2564 = vmatprep.subr.bf16.mxu0 0
      %2565 = vmatpush1.bf16.msra.mxu0 %v2544
      %2566 = vmatprep.subr.bf16.mxu0 0
      %2567 = vmatpush1.bf16.msra.mxu0 %v2545
      %2568 = vmatprep.subr.bf16.mxu0 0
      %2569 = vmatpush1.bf16.msra.mxu0 %v2546
      %2570 = vmatprep.subr.bf16.mxu0 0
      %2571 = vmatpush1.bf16.msra.mxu0 %v2547
      %2572 = vmatprep.subr.bf16.mxu0 0
      %2573 = vmatpush1.bf16.msra.mxu0 0
      %2574 = vmatprep.subr.bf16.mxu0 0
      %2575 = vmatpush1.bf16.msra.mxu0 0
      %2576 = vmatprep.subr.bf16.mxu0 0
      %2577 = vmatpush1.bf16.msra.mxu0 0
      %2578 = vmatprep.subr.bf16.mxu0 0
      %2579 = vmatpush1.bf16.msra.mxu0 0
      %2580 = vmatprep.subr.bf16.mxu0 0
      %2581 = vmatpush1.bf16.msra.mxu0 0
      %2582 = vmatprep.subr.bf16.mxu0 0
      %2583 = vmatpush1.bf16.msra.mxu0 0
      %2584 = vmatprep.subr.bf16.mxu0 0
      %2585 = vmatpush1.bf16.msra.mxu0 0
      %2586 = vmatprep.subr.bf16.mxu0 0
      %2587 = vmatpush1.bf16.msra.mxu0 0
      %2588 = vmatprep.mubr.bf16.mxu0 0
      %2589 = vmatmul.mubr.bf16.gmra.mrb[0].mxu0 %v2487
      %v2590 = vpop.f32.mrb[0].mxu0
      %v2591 = vadd.f32 0.0, %v2590
      %v2592 = vpop.f32.mrb[0].mxu0
      %v2593 = vpop.f32.mrb[0].mxu0
      %v2594 = vadd.f32 0.0, %v2593
      %v2595 = vpop.f32.mrb[0].mxu0
      %2596 = vmatprep.mubr.bf16.mxu0 0
      %2597 = vmatmul.mubr.bf16.gmra.mrb[0].mxu0 %v2488
      %v2598 = vpop.f32.mrb[0].mxu0
      %v2599 = vadd.f32 0.0, %v2598
      %v2600 = vpop.f32.mrb[0].mxu0
      %v2601 = vpop.f32.mrb[0].mxu0
      %v2602 = vadd.f32 0.0, %v2601
      %v2603 = vpop.f32.mrb[0].mxu0
      %2604 = vmatprep.mubr.bf16.mxu0 0
      %2605 = vmatmul.mubr.bf16.gmra.mrb[0].mxu0 %v2489
      %v2606 = vpop.f32.mrb[0].mxu0
      %v2607 = vadd.f32 0.0, %v2606
      %v2608 = vpop.f32.mrb[0].mxu0
      %v2609 = vpop.f32.mrb[0].mxu0
      %v2610 = vadd.f32 0.0, %v2609
      %v2611 = vpop.f32.mrb[0].mxu0
      %2612 = vmatprep.mubr.bf16.mxu0 0
      %2613 = vmatmul.mubr.bf16.gmra.mrb[0].mxu0 %v2490
      %v2614 = vpop.f32.mrb[0].mxu0
      %v2615 = vadd.f32 0.0, %v2614
      %v2616 = vpop.f32.mrb[0].mxu0
      %v2617 = vpop.f32.mrb[0].mxu0
      %v2618 = vadd.f32 0.0, %v2617
      %v2619 = vpop.f32.mrb[0].mxu0
      %2620 = vdwg.mxu0
      %v2621 = vadd.f32 %v2471, %v2591
      %v2622 = vadd.f32 %v2472, %v2594
      %v2623 = vadd.f32 %v2473, %v2599
      %v2624 = vadd.f32 %v2474, %v2602
      %v2625 = vadd.f32 %v2475, %v2607
      %v2626 = vadd.f32 %v2476, %v2610
      %v2627 = vadd.f32 %v2477, %v2615
      %v2628 = vadd.f32 %v2478, %v2618
      %s2629 = scalar_lea.vmem [#allocation3], 32
      %v2630 = vld [vmem:[%s2629] sm:$0xff]
      %v2631 = vld [vmem:[%s2629 + $0x10] sm:$0xff]
      %v2632 = vld [vmem:[%s2629 + $0x20] sm:$0xff]
      %v2633 = vld [vmem:[%s2629 + $0x30] sm:$0xff]
      %v2634 = vld [vmem:[%s2629 + $0x40] sm:$0xff]
      %v2635 = vld [vmem:[%s2629 + $0x50] sm:$0xff]
      %v2636 = vld [vmem:[%s2629 + $0x60] sm:$0xff]
      %v2637 = vld [vmem:[%s2629 + $0x70] sm:$0xff]
      %v2638 = vpack.c.bf16 %v2631, %v2630
      %v2639 = vpack.c.bf16 %v2633, %v2632
      %v2640 = vpack.c.bf16 %v2635, %v2634
      %v2641 = vpack.c.bf16 %v2637, %v2636
      %s2642 = scalar_lea.vmem %s3, 384
      %v2643 = vld [vmem:[%s2642] sm:$0xf]
      %v2644 = vld [vmem:[%s2642 + $0x4] sm:$0xf]
      %v2645 = vld [vmem:[%s2642 + $0x8] sm:$0xf]
      %v2646 = vld [vmem:[%s2642 + $0xc] sm:$0xf]
      %v2647 = vld [vmem:[%s2642 + $0x10] sm:$0xf]
      %v2648 = vld [vmem:[%s2642 + $0x14] sm:$0xf]
      %v2649 = vld [vmem:[%s2642 + $0x18] sm:$0xf]
      %v2650 = vld [vmem:[%s2642 + $0x1c] sm:$0xf]
      %v2651 = vld [vmem:[%s2642 + $0x20] sm:$0xf]
      %v2652 = vld [vmem:[%s2642 + $0x24] sm:$0xf]
      %v2653 = vld [vmem:[%s2642 + $0x28] sm:$0xf]
      %v2654 = vld [vmem:[%s2642 + $0x2c] sm:$0xf]
      %v2655 = vld [vmem:[%s2642 + $0x30] sm:$0xf]
      %v2656 = vld [vmem:[%s2642 + $0x34] sm:$0xf]
      %v2657 = vld [vmem:[%s2642 + $0x38] sm:$0xf]
      %v2658 = vld [vmem:[%s2642 + $0x3c] sm:$0xf]
      %v2675 = vunpack.c.l.b16 %v2643
      %v2676 = vunpack.c.l.b16 %v2644
      %v2677 = vunpack.c.l.b16 %v2645
      %v2678 = vunpack.c.l.b16 %v2646
      %v2679 = vunpack.c.l.b16 %v2647
      %v2680 = vunpack.c.l.b16 %v2648
      %v2681 = vunpack.c.l.b16 %v2649
      %v2682 = vunpack.c.l.b16 %v2650
      %v2683 = vunpack.c.l.b16 %v2651
      %v2684 = vunpack.c.l.b16 %v2652
      %v2685 = vunpack.c.l.b16 %v2653
      %v2686 = vunpack.c.l.b16 %v2654
      %v2687 = vunpack.c.l.b16 %v2655
      %v2688 = vunpack.c.l.b16 %v2656
      %v2689 = vunpack.c.l.b16 %v2657
      %v2690 = vunpack.c.l.b16 %v2658
      %v2691 = vpack.c.b16 %v2676, %v2675
      %v2692 = vpack.c.b16 %v2678, %v2677
      %v2693 = vpack.c.b16 %v2680, %v2679
      %v2694 = vpack.c.b16 %v2682, %v2681
      %v2695 = vpack.c.b16 %v2684, %v2683
      %v2696 = vpack.c.b16 %v2686, %v2685
      %v2697 = vpack.c.b16 %v2688, %v2687
      %v2698 = vpack.c.b16 %v2690, %v2689
      %2707 = vmatprep.subr.bf16.mxu0 0
      %2708 = vmatpush1.bf16.msra.mxu0 %v2691
      %2709 = vmatprep.subr.bf16.mxu0 0
      %2710 = vmatpush1.bf16.msra.mxu0 %v2692
      %2711 = vmatprep.subr.bf16.mxu0 0
      %2712 = vmatpush1.bf16.msra.mxu0 %v2693
      %2713 = vmatprep.subr.bf16.mxu0 0
      %2714 = vmatpush1.bf16.msra.mxu0 %v2694
      %2715 = vmatprep.subr.bf16.mxu0 0
      %2716 = vmatpush1.bf16.msra.mxu0 %v2695
      %2717 = vmatprep.subr.bf16.mxu0 0
      %2718 = vmatpush1.bf16.msra.mxu0 %v2696
      %2719 = vmatprep.subr.bf16.mxu0 0
      %2720 = vmatpush1.bf16.msra.mxu0 %v2697
      %2721 = vmatprep.subr.bf16.mxu0 0
      %2722 = vmatpush1.bf16.msra.mxu0 %v2698
      %2723 = vmatprep.subr.bf16.mxu0 0
      %2724 = vmatpush1.bf16.msra.mxu0 0
      %2725 = vmatprep.subr.bf16.mxu0 0
      %2726 = vmatpush1.bf16.msra.mxu0 0
      %2727 = vmatprep.subr.bf16.mxu0 0
      %2728 = vmatpush1.bf16.msra.mxu0 0
      %2729 = vmatprep.subr.bf16.mxu0 0
      %2730 = vmatpush1.bf16.msra.mxu0 0
      %2731 = vmatprep.subr.bf16.mxu0 0
      %2732 = vmatpush1.bf16.msra.mxu0 0
      %2733 = vmatprep.subr.bf16.mxu0 0
      %2734 = vmatpush1.bf16.msra.mxu0 0
      %2735 = vmatprep.subr.bf16.mxu0 0
      %2736 = vmatpush1.bf16.msra.mxu0 0
      %2737 = vmatprep.subr.bf16.mxu0 0
      %2738 = vmatpush1.bf16.msra.mxu0 0
      %2739 = vmatprep.mubr.bf16.mxu0 0
      %2740 = vmatmul.mubr.bf16.gmra.mrb[0].mxu0 %v2638
      %v2741 = vpop.f32.mrb[0].mxu0
      %v2742 = vadd.f32 0.0, %v2741
      %v2743 = vpop.f32.mrb[0].mxu0
      %v2744 = vpop.f32.mrb[0].mxu0
      %v2745 = vadd.f32 0.0, %v2744
      %v2746 = vpop.f32.mrb[0].mxu0
      %2747 = vmatprep.mubr.bf16.mxu0 0
      %2748 = vmatmul.mubr.bf16.gmra.mrb[0].mxu0 %v2639
      %v2749 = vpop.f32.mrb[0].mxu0
      %v2750 = vadd.f32 0.0, %v2749
      %v2751 = vpop.f32.mrb[0].mxu0
      %v2752 = vpop.f32.mrb[0].mxu0
      %v2753 = vadd.f32 0.0, %v2752
      %v2754 = vpop.f32.mrb[0].mxu0
      %2755 = vmatprep.mubr.bf16.mxu0 0
      %2756 = vmatmul.mubr.bf16.gmra.mrb[0].mxu0 %v2640
      %v2757 = vpop.f32.mrb[0].mxu0
      %v2758 = vadd.f32 0.0, %v2757
      %v2759 = vpop.f32.mrb[0].mxu0
      %v2760 = vpop.f32.mrb[0].mxu0
      %v2761 = vadd.f32 0.0, %v2760
      %v2762 = vpop.f32.mrb[0].mxu0
      %2763 = vmatprep.mubr.bf16.mxu0 0
      %2764 = vmatmul.mubr.bf16.gmra.mrb[0].mxu0 %v2641
      %v2765 = vpop.f32.mrb[0].mxu0
      %v2766 = vadd.f32 0.0, %v2765
      %v2767 = vpop.f32.mrb[0].mxu0
      %v2768 = vpop.f32.mrb[0].mxu0
      %v2769 = vadd.f32 0.0, %v2768
      %v2770 = vpop.f32.mrb[0].mxu0
      %2771 = vdwg.mxu0
      %v2772 = vadd.f32 %v2621, %v2742
      %v2773 = vadd.f32 %v2622, %v2745
      %v2774 = vadd.f32 %v2623, %v2750
      %v2775 = vadd.f32 %v2624, %v2753
      %v2776 = vadd.f32 %v2625, %v2758
      %v2777 = vadd.f32 %v2626, %v2761
      %v2778 = vadd.f32 %v2627, %v2766
      %v2779 = vadd.f32 %v2628, %v2769
      %v2780 = vld [vmem:[%s2629 + $0x1] sm:$0xff]
      %v2781 = vld [vmem:[%s2629 + $0x11] sm:$0xff]
      %v2782 = vld [vmem:[%s2629 + $0x21] sm:$0xff]
      %v2783 = vld [vmem:[%s2629 + $0x31] sm:$0xff]
      %v2784 = vld [vmem:[%s2629 + $0x41] sm:$0xff]
      %v2785 = vld [vmem:[%s2629 + $0x51] sm:$0xff]
      %v2786 = vld [vmem:[%s2629 + $0x61] sm:$0xff]
      %v2787 = vld [vmem:[%s2629 + $0x71] sm:$0xff]
      %v2788 = vpack.c.bf16 %v2781, %v2780
      %v2789 = vpack.c.bf16 %v2783, %v2782
      %v2790 = vpack.c.bf16 %v2785, %v2784
      %v2791 = vpack.c.bf16 %v2787, %v2786
      %s2792 = scalar_lea.vmem %s3, 448
      %v2793 = vld [vmem:[%s2792] sm:$0xf]
      %v2794 = vld [vmem:[%s2792 + $0x4] sm:$0xf]
      %v2795 = vld [vmem:[%s2792 + $0x8] sm:$0xf]
      %v2796 = vld [vmem:[%s2792 + $0xc] sm:$0xf]
      %v2797 = vld [vmem:[%s2792 + $0x10] sm:$0xf]
      %v2798 = vld [vmem:[%s2792 + $0x14] sm:$0xf]
      %v2799 = vld [vmem:[%s2792 + $0x18] sm:$0xf]
      %v2800 = vld [vmem:[%s2792 + $0x1c] sm:$0xf]
      %v2801 = vld [vmem:[%s2792 + $0x20] sm:$0xf]
      %v2802 = vld [vmem:[%s2792 + $0x24] sm:$0xf]
      %v2803 = vld [vmem:[%s2792 + $0x28] sm:$0xf]
      %v2804 = vld [vmem:[%s2792 + $0x2c] sm:$0xf]
      %v2805 = vld [vmem:[%s2792 + $0x30] sm:$0xf]
      %v2806 = vld [vmem:[%s2792 + $0x34] sm:$0xf]
      %v2807 = vld [vmem:[%s2792 + $0x38] sm:$0xf]
      %v2808 = vld [vmem:[%s2792 + $0x3c] sm:$0xf]
      %v2825 = vunpack.c.l.b16 %v2793
      %v2826 = vunpack.c.l.b16 %v2794
      %v2827 = vunpack.c.l.b16 %v2795
      %v2828 = vunpack.c.l.b16 %v2796
      %v2829 = vunpack.c.l.b16 %v2797
      %v2830 = vunpack.c.l.b16 %v2798
      %v2831 = vunpack.c.l.b16 %v2799
      %v2832 = vunpack.c.l.b16 %v2800
      %v2833 = vunpack.c.l.b16 %v2801
      %v2834 = vunpack.c.l.b16 %v2802
      %v2835 = vunpack.c.l.b16 %v2803
      %v2836 = vunpack.c.l.b16 %v2804
      %v2837 = vunpack.c.l.b16 %v2805
      %v2838 = vunpack.c.l.b16 %v2806
      %v2839 = vunpack.c.l.b16 %v2807
      %v2840 = vunpack.c.l.b16 %v2808
      %v2841 = vpack.c.b16 %v2826, %v2825
      %v2842 = vpack.c.b16 %v2828, %v2827
      %v2843 = vpack.c.b16 %v2830, %v2829
      %v2844 = vpack.c.b16 %v2832, %v2831
      %v2845 = vpack.c.b16 %v2834, %v2833
      %v2846 = vpack.c.b16 %v2836, %v2835
      %v2847 = vpack.c.b16 %v2838, %v2837
      %v2848 = vpack.c.b16 %v2840, %v2839
      %2857 = vmatprep.subr.bf16.mxu0 0
      %2858 = vmatpush1.bf16.msra.mxu0 %v2841
      %2859 = vmatprep.subr.bf16.mxu0 0
      %2860 = vmatpush1.bf16.msra.mxu0 %v2842
      %2861 = vmatprep.subr.bf16.mxu0 0
      %2862 = vmatpush1.bf16.msra.mxu0 %v2843
      %2863 = vmatprep.subr.bf16.mxu0 0
      %2864 = vmatpush1.bf16.msra.mxu0 %v2844
      %2865 = vmatprep.subr.bf16.mxu0 0
      %2866 = vmatpush1.bf16.msra.mxu0 %v2845
      %2867 = vmatprep.subr.bf16.mxu0 0
      %2868 = vmatpush1.bf16.msra.mxu0 %v2846
      %2869 = vmatprep.subr.bf16.mxu0 0
      %2870 = vmatpush1.bf16.msra.mxu0 %v2847
      %2871 = vmatprep.subr.bf16.mxu0 0
      %2872 = vmatpush1.bf16.msra.mxu0 %v2848
      %2873 = vmatprep.subr.bf16.mxu0 0
      %2874 = vmatpush1.bf16.msra.mxu0 0
      %2875 = vmatprep.subr.bf16.mxu0 0
      %2876 = vmatpush1.bf16.msra.mxu0 0
      %2877 = vmatprep.subr.bf16.mxu0 0
      %2878 = vmatpush1.bf16.msra.mxu0 0
      %2879 = vmatprep.subr.bf16.mxu0 0
      %2880 = vmatpush1.bf16.msra.mxu0 0
      %2881 = vmatprep.subr.bf16.mxu0 0
      %2882 = vmatpush1.bf16.msra.mxu0 0
      %2883 = vmatprep.subr.bf16.mxu0 0
      %2884 = vmatpush1.bf16.msra.mxu0 0
      %2885 = vmatprep.subr.bf16.mxu0 0
      %2886 = vmatpush1.bf16.msra.mxu0 0
      %2887 = vmatprep.subr.bf16.mxu0 0
      %2888 = vmatpush1.bf16.msra.mxu0 0
      %2889 = vmatprep.mubr.bf16.mxu0 0
      %2890 = vmatmul.mubr.bf16.gmra.mrb[0].mxu0 %v2788
      %v2891 = vpop.f32.mrb[0].mxu0
      %v2892 = vadd.f32 0.0, %v2891
      %v2893 = vpop.f32.mrb[0].mxu0
      %v2894 = vpop.f32.mrb[0].mxu0
      %v2895 = vadd.f32 0.0, %v2894
      %v2896 = vpop.f32.mrb[0].mxu0
      %2897 = vmatprep.mubr.bf16.mxu0 0
      %2898 = vmatmul.mubr.bf16.gmra.mrb[0].mxu0 %v2789
      %v2899 = vpop.f32.mrb[0].mxu0
      %v2900 = vadd.f32 0.0, %v2899
      %v2901 = vpop.f32.mrb[0].mxu0
      %v2902 = vpop.f32.mrb[0].mxu0
      %v2903 = vadd.f32 0.0, %v2902
      %v2904 = vpop.f32.mrb[0].mxu0
      %2905 = vmatprep.mubr.bf16.mxu0 0
      %2906 = vmatmul.mubr.bf16.gmra.mrb[0].mxu0 %v2790
      %v2907 = vpop.f32.mrb[0].mxu0
      %v2908 = vadd.f32 0.0, %v2907
      %v2909 = vpop.f32.mrb[0].mxu0
      %v2910 = vpop.f32.mrb[0].mxu0
      %v2911 = vadd.f32 0.0, %v2910
      %v2912 = vpop.f32.mrb[0].mxu0
      %2913 = vmatprep.mubr.bf16.mxu0 0
      %2914 = vmatmul.mubr.bf16.gmra.mrb[0].mxu0 %v2791
      %v2915 = vpop.f32.mrb[0].mxu0
      %v2916 = vadd.f32 0.0, %v2915
      %v2917 = vpop.f32.mrb[0].mxu0
      %v2918 = vpop.f32.mrb[0].mxu0
      %v2919 = vadd.f32 0.0, %v2918
      %v2920 = vpop.f32.mrb[0].mxu0
      %2921 = vdwg.mxu0
      %v2922 = vadd.f32 %v2772, %v2892
      %v2923 = vadd.f32 %v2773, %v2895
      %v2924 = vadd.f32 %v2774, %v2900
      %v2925 = vadd.f32 %v2775, %v2903
      %v2926 = vadd.f32 %v2776, %v2908
      %v2927 = vadd.f32 %v2777, %v2911
      %v2928 = vadd.f32 %v2778, %v2916
      %v2929 = vadd.f32 %v2779, %v2919
      %v2930 = vld [vmem:[%s2629 + $0x2] sm:$0xff]
      %v2931 = vld [vmem:[%s2629 + $0x12] sm:$0xff]
      %v2932 = vld [vmem:[%s2629 + $0x22] sm:$0xff]
      %v2933 = vld [vmem:[%s2629 + $0x32] sm:$0xff]
      %v2934 = vld [vmem:[%s2629 + $0x42] sm:$0xff]
      %v2935 = vld [vmem:[%s2629 + $0x52] sm:$0xff]
      %v2936 = vld [vmem:[%s2629 + $0x62] sm:$0xff]
      %v2937 = vld [vmem:[%s2629 + $0x72] sm:$0xff]
      %v2938 = vpack.c.bf16 %v2931, %v2930
      %v2939 = vpack.c.bf16 %v2933, %v2932
      %v2940 = vpack.c.bf16 %v2935, %v2934
      %v2941 = vpack.c.bf16 %v2937, %v2936
      %s2942 = scalar_lea.vmem %s3, 512
      %v2943 = vld [vmem:[%s2942] sm:$0xf]
      %v2944 = vld [vmem:[%s2942 + $0x4] sm:$0xf]
      %v2945 = vld [vmem:[%s2942 + $0x8] sm:$0xf]
      %v2946 = vld [vmem:[%s2942 + $0xc] sm:$0xf]
      %v2947 = vld [vmem:[%s2942 + $0x10] sm:$0xf]
      %v2948 = vld [vmem:[%s2942 + $0x14] sm:$0xf]
      %v2949 = vld [vmem:[%s2942 + $0x18] sm:$0xf]
      %v2950 = vld [vmem:[%s2942 + $0x1c] sm:$0xf]
      %v2951 = vld [vmem:[%s2942 + $0x20] sm:$0xf]
      %v2952 = vld [vmem:[%s2942 + $0x24] sm:$0xf]
      %v2953 = vld [vmem:[%s2942 + $0x28] sm:$0xf]
      %v2954 = vld [vmem:[%s2942 + $0x2c] sm:$0xf]
      %v2955 = vld [vmem:[%s2942 + $0x30] sm:$0xf]
      %v2956 = vld [vmem:[%s2942 + $0x34] sm:$0xf]
      %v2957 = vld [vmem:[%s2942 + $0x38] sm:$0xf]
      %v2958 = vld [vmem:[%s2942 + $0x3c] sm:$0xf]
      %v2975 = vunpack.c.l.b16 %v2943
      %v2976 = vunpack.c.l.b16 %v2944
      %v2977 = vunpack.c.l.b16 %v2945
      %v2978 = vunpack.c.l.b16 %v2946
      %v2979 = vunpack.c.l.b16 %v2947
      %v2980 = vunpack.c.l.b16 %v2948
      %v2981 = vunpack.c.l.b16 %v2949
      %v2982 = vunpack.c.l.b16 %v2950
      %v2983 = vunpack.c.l.b16 %v2951
      %v2984 = vunpack.c.l.b16 %v2952
      %v2985 = vunpack.c.l.b16 %v2953
      %v2986 = vunpack.c.l.b16 %v2954
      %v2987 = vunpack.c.l.b16 %v2955
      %v2988 = vunpack.c.l.b16 %v2956
      %v2989 = vunpack.c.l.b16 %v2957
      %v2990 = vunpack.c.l.b16 %v2958
      %v2991 = vpack.c.b16 %v2976, %v2975
      %v2992 = vpack.c.b16 %v2978, %v2977
      %v2993 = vpack.c.b16 %v2980, %v2979
      %v2994 = vpack.c.b16 %v2982, %v2981
      %v2995 = vpack.c.b16 %v2984, %v2983
      %v2996 = vpack.c.b16 %v2986, %v2985
      %v2997 = vpack.c.b16 %v2988, %v2987
      %v2998 = vpack.c.b16 %v2990, %v2989
      %3007 = vmatprep.subr.bf16.mxu0 0
      %3008 = vmatpush1.bf16.msra.mxu0 %v2991
      %3009 = vmatprep.subr.bf16.mxu0 0
      %3010 = vmatpush1.bf16.msra.mxu0 %v2992
      %3011 = vmatprep.subr.bf16.mxu0 0
      %3012 = vmatpush1.bf16.msra.mxu0 %v2993
      %3013 = vmatprep.subr.bf16.mxu0 0
      %3014 = vmatpush1.bf16.msra.mxu0 %v2994
      %3015 = vmatprep.subr.bf16.mxu0 0
      %3016 = vmatpush1.bf16.msra.mxu0 %v2995
      %3017 = vmatprep.subr.bf16.mxu0 0
      %3018 = vmatpush1.bf16.msra.mxu0 %v2996
      %3019 = vmatprep.subr.bf16.mxu0 0
      %3020 = vmatpush1.bf16.msra.mxu0 %v2997
      %3021 = vmatprep.subr.bf16.mxu0 0
      %3022 = vmatpush1.bf16.msra.mxu0 %v2998
      %3023 = vmatprep.subr.bf16.mxu0 0
      %3024 = vmatpush1.bf16.msra.mxu0 0
      %3025 = vmatprep.subr.bf16.mxu0 0
      %3026 = vmatpush1.bf16.msra.mxu0 0
      %3027 = vmatprep.subr.bf16.mxu0 0
      %3028 = vmatpush1.bf16.msra.mxu0 0
      %3029 = vmatprep.subr.bf16.mxu0 0
      %3030 = vmatpush1.bf16.msra.mxu0 0
      %3031 = vmatprep.subr.bf16.mxu0 0
      %3032 = vmatpush1.bf16.msra.mxu0 0
      %3033 = vmatprep.subr.bf16.mxu0 0
      %3034 = vmatpush1.bf16.msra.mxu0 0
      %3035 = vmatprep.subr.bf16.mxu0 0
      %3036 = vmatpush1.bf16.msra.mxu0 0
      %3037 = vmatprep.subr.bf16.mxu0 0
      %3038 = vmatpush1.bf16.msra.mxu0 0
      %3039 = vmatprep.mubr.bf16.mxu0 0
      %3040 = vmatmul.mubr.bf16.gmra.mrb[0].mxu0 %v2938
      %v3041 = vpop.f32.mrb[0].mxu0
      %v3042 = vadd.f32 0.0, %v3041
      %v3043 = vpop.f32.mrb[0].mxu0
      %v3044 = vpop.f32.mrb[0].mxu0
      %v3045 = vadd.f32 0.0, %v3044
      %v3046 = vpop.f32.mrb[0].mxu0
      %3047 = vmatprep.mubr.bf16.mxu0 0
      %3048 = vmatmul.mubr.bf16.gmra.mrb[0].mxu0 %v2939
      %v3049 = vpop.f32.mrb[0].mxu0
      %v3050 = vadd.f32 0.0, %v3049
      %v3051 = vpop.f32.mrb[0].mxu0
      %v3052 = vpop.f32.mrb[0].mxu0
      %v3053 = vadd.f32 0.0, %v3052
      %v3054 = vpop.f32.mrb[0].mxu0
      %3055 = vmatprep.mubr.bf16.mxu0 0
      %3056 = vmatmul.mubr.bf16.gmra.mrb[0].mxu0 %v2940
      %v3057 = vpop.f32.mrb[0].mxu0
      %v3058 = vadd.f32 0.0, %v3057
      %v3059 = vpop.f32.mrb[0].mxu0
      %v3060 = vpop.f32.mrb[0].mxu0
      %v3061 = vadd.f32 0.0, %v3060
      %v3062 = vpop.f32.mrb[0].mxu0
      %3063 = vmatprep.mubr.bf16.mxu0 0
      %3064 = vmatmul.mubr.bf16.gmra.mrb[0].mxu0 %v2941
      %v3065 = vpop.f32.mrb[0].mxu0
      %v3066 = vadd.f32 0.0, %v3065
      %v3067 = vpop.f32.mrb[0].mxu0
      %v3068 = vpop.f32.mrb[0].mxu0
      %v3069 = vadd.f32 0.0, %v3068
      %v3070 = vpop.f32.mrb[0].mxu0
      %3071 = vdwg.mxu0
      %v3072 = vadd.f32 %v2922, %v3042
      %v3073 = vadd.f32 %v2923, %v3045
      %v3074 = vadd.f32 %v2924, %v3050
      %v3075 = vadd.f32 %v2925, %v3053
      %v3076 = vadd.f32 %v2926, %v3058
      %v3077 = vadd.f32 %v2927, %v3061
      %v3078 = vadd.f32 %v2928, %v3066
      %v3079 = vadd.f32 %v2929, %v3069
      %v3080 = vld [vmem:[%s4] sm:$0x1]
      %v3082 = vlaneseq
      %v3083 = vshrl.u32 %v3082, 7
      %v3084 = vsub.s32 0, %v3083
      %v3085 = vrot.slane %v3080, %v3084
      %v3087 = vadd.f32 %v3072, %v3085
      %v3088 = vadd.f32 %v3073, %v3085
      %v3089 = vadd.f32 %v3074, %v3085
      %v3090 = vadd.f32 %v3075, %v3085
      %v3091 = vadd.f32 %v3076, %v3085
      %v3092 = vadd.f32 %v3077, %v3085
      %v3093 = vadd.f32 %v3078, %v3085
      %v3094 = vadd.f32 %v3079, %v3085
      %v3095 = vmax.f32 %v3087, 0.0
      %v3096 = vmax.f32 %v3088, 0.0
      %v3097 = vmax.f32 %v3089, 0.0
      %v3098 = vmax.f32 %v3090, 0.0
      %v3099 = vmax.f32 %v3091, 0.0
      %v3100 = vmax.f32 %v3092, 0.0
      %v3101 = vmax.f32 %v3093, 0.0
      %v3102 = vmax.f32 %v3094, 0.0
      %3103 = vst [vmem:[%s224] sm:$0xff] %v3095
      %3104 = vst [vmem:[%s224 + $0x8] sm:$0xff] %v3096
      %3105 = vst [vmem:[%s224 + $0x10] sm:$0xff] %v3097
      %3106 = vst [vmem:[%s224 + $0x18] sm:$0xff] %v3098
      %3107 = vst [vmem:[%s224 + $0x20] sm:$0xff] %v3099
      %3108 = vst [vmem:[%s224 + $0x28] sm:$0xff] %v3100
      %3109 = vst [vmem:[%s224 + $0x30] sm:$0xff] %v3101
      %3110 = vst [vmem:[%s224 + $0x38] sm:$0xff] %v3102
      %p3111 = scmp.lt.s32.totalorder %s16, 1
      %s3112 = scalar_select %p3111, %s16, 1
      %s3113 = smul.addr %s3112, 8
      %s3114 = smul.addr %s3113, 8
      %s3115 = scalar_lea.vmem %s5, %s3114
      // Predicated region
      $region41: #{downsample_forward.1} parent=39 // pred_check
        %p3116 = pneg %p144
      $region42: #{downsample_forward.1} parent=39 // pred_check_branch
        %3118 = sbr.rel (%p3116) target = $region44
      $region43: #{downsample_forward.1} parent=39 // pred_region
        _
      $region44: #{downsample_forward.1} parent=39 // pred_fallthru
        _
    $region40: #{downsample_forward.1} parent=5 // pred_fallthru
      _
    %p3119 = scmp.le.s32.totalorder 2, %s11
    // Predicated region
    $region45: #{downsample_forward.1} parent=5 // pred_check
      %p3120 = pneg %p3119
    $region46: #{downsample_forward.1} parent=5 // pred_check_branch
      %3122 = sbr.rel (%p3120) target = $region48
    $region47: #{downsample_forward.1} parent=5 // pred_region
      %s3123 = ssub.s32 %s11, 2
      // Predicated region
      $region49: #{downsample_forward.1} parent=47 // pred_check
        %p3124 = pneg %p150
      $region50: #{downsample_forward.1} parent=47 // pred_check_branch
        %3126 = sbr.rel (%p3124) target = $region52
      $region51: #{downsample_forward.1} parent=47 // pred_region
        %p3127 = scmp.lt.s32.totalorder %s17, 1
        %s3128 = scalar_select %p3127, %s17, 1
        %s3129 = smul.addr %s3128, 8
        %s3130 = smul.addr %s3129, 8
        %s3131 = scalar_lea.vmem %s5, %s3130
      $region52: #{downsample_forward.1} parent=47 // pred_fallthru
        _
    $region48: #{downsample_forward.1} parent=5 // pred_fallthru
      _
  $region6: #{downsample_forward.1} parent=0 // loop_footer
    %s15 = sadd.s32 1, %s11
  $region7: #{downsample_forward.1} parent=0 // loop_footer_branch
    %10 = sbr.rel target = $region3
  $region8: #{downsample_forward.1} parent=0 // loop_exit
    _

</llo_original>
